<compile_context>
chip_gen: v6e
topology: v6e:2x2x1
jax: 0.10.0
libtpu: 0.0.40
codegen_flags: <defaults>
</compile_context>

<pallas_src>
import functools
import math

import jax
import jax.numpy as jnp
from jax.experimental import pallas as pl
from jax.experimental.pallas import tpu as pltpu


# ----------------------------- helpers --------------------------------------

def _round_up(x, m):
    return ((x + m - 1) // m) * m


def _pick_row_tile(M, max_tile=512):
    """Pick a row-tile (multiple of 8) minimizing padding; split so >=2 grid blocks
    when possible (keeps both TensorCores busy on v7x)."""
    Mp = _round_up(M, 8)
    if Mp <= max_tile:
        tm = Mp
    else:
        best_t, best_pad = 8, None
        for t in range(max_tile, 7, -8):
            pad = _round_up(M, t) - M
            if best_pad is None or pad < best_pad:
                best_pad, best_t = pad, t
            if pad == 0:
                break
        tm = best_t
    if _round_up(M, tm) // tm < 2 and Mp >= 16:
        tm = _round_up((Mp + 1) // 2, 8)
    return tm, _round_up(M, tm)


def _gelu_new(x):
    # transformers "gelu_new": 0.5*x*(1+tanh(sqrt(2/pi)*(x+0.044715*x^3)))
    return 0.5 * x * (1.0 + jnp.tanh(
        math.sqrt(2.0 / math.pi) * (x + 0.044715 * x * x * x)))


def _layernorm_f32(x, gamma, beta, eps):
    mean = jnp.mean(x, axis=-1, keepdims=True)
    xc = x - mean
    var = jnp.mean(xc * xc, axis=-1, keepdims=True)
    return xc * jax.lax.rsqrt(var + eps) * gamma + beta


# ------------------- fused embedding + embed_ln + wpe ------------------------

def _embed_kernel(s_ref, a_ref, g_ref, te_ref, wpe_ref,
                  ws_ref, bs_ref, wa_ref, ba_ref, wg_ref, bg_ref,
                  lng_ref, lnb_ref, o_ref, *, d_model, eps):
    D = d_model
    te = te_ref[...]                       # (L, D) f32
    wpe = wpe_ref[...]                     # (L, 3D) f32
    gamma = lng_ref[...]
    beta = lnb_ref[...]

    def proj_ln(x, w_ref, b_ref):
        # (x @ W + b) + time_embedding, then embed_ln (row-wise, commutes with interleave)
        y = jnp.dot(x.astype(jnp.bfloat16), w_ref[...],
                    preferred_element_type=jnp.float32) + b_ref[...] + te
        return _layernorm_f32(y, gamma, beta, eps)

    # interleaved layout: per timestep [subgoal | state | action] along the 3D axis
    o_ref[:, 0 * D:1 * D] = (proj_ln(g_ref[...], wg_ref, bg_ref)
                             + wpe[:, 0 * D:1 * D]).astype(o_ref.dtype)
    o_ref[:, 1 * D:2 * D] = (proj_ln(s_ref[...], ws_ref, bs_ref)
                             + wpe[:, 1 * D:2 * D]).astype(o_ref.dtype)
    o_ref[:, 2 * D:3 * D] = (proj_ln(a_ref[...], wa_ref, ba_ref)
                             + wpe[:, 2 * D:3 * D]).astype(o_ref.dtype)


def embed_tokens(states, actions, subgoals, te, wpe3, params, eps=1e-5):
    B, L, S = states.shape
    A = actions.shape[-1]
    D = te.shape[-1]
    return pl.pallas_call(
        functools.partial(_embed_kernel, d_model=D, eps=eps),
        out_shape=jax.ShapeDtypeStruct((B, L, 3 * D), jnp.bfloat16),
        grid=(B,),
        in_specs=[
            pl.BlockSpec((None, L, S), lambda b: (b, 0, 0)),   # states
            pl.BlockSpec((None, L, A), lambda b: (b, 0, 0)),   # actions
            pl.BlockSpec((None, L, S), lambda b: (b, 0, 0)),   # subgoals
            pl.BlockSpec((None, L, D), lambda b: (b, 0, 0)),   # timestep embeddings
            pl.BlockSpec((L, 3 * D), lambda b: (0, 0)),        # wpe (interleaved view)
            pl.BlockSpec((S, D), lambda b: (0, 0)),            # embed_state_w (bf16)
            pl.BlockSpec((1, D), lambda b: (0, 0)),
            pl.BlockSpec((A, D), lambda b: (0, 0)),            # embed_action_w (bf16)
            pl.BlockSpec((1, D), lambda b: (0, 0)),
            pl.BlockSpec((S, D), lambda b: (0, 0)),            # embed_subgoal_w (bf16)
            pl.BlockSpec((1, D), lambda b: (0, 0)),
            pl.BlockSpec((1, D), lambda b: (0, 0)),            # embed_ln gamma
            pl.BlockSpec((1, D), lambda b: (0, 0)),            # embed_ln beta
        ],
        out_specs=pl.BlockSpec((None, L, 3 * D), lambda b: (b, 0, 0)),
        compiler_params=pltpu.CompilerParams(dimension_semantics=("parallel",)),
    )(states, actions, subgoals, te, wpe3,
      params["embed_state_w"], params["embed_state_b"].reshape(1, D),
      params["embed_action_w"], params["embed_action_b"].reshape(1, D),
      params["embed_subgoal_w"], params["embed_subgoal_b"].reshape(1, D),
      params["embed_ln_g"].reshape(1, D), params["embed_ln_b"].reshape(1, D))


# ---------------- fused attention block: ln_1 -> c_attn -> MHA -> c_proj -----

def _attn_block_kernel(h_ref, g1_ref, b1_ref, wqkv_ref, bqkv_ref,
                       wproj_ref, bproj_ref, o_ref, a_scr, *,
                       n_head, d_model, scale, eps):
    D = d_model
    hd = D // n_head
    x = h_ref[...].astype(jnp.float32)                       # (T, D) residual
    T = x.shape[0]

    xn = _layernorm_f32(x, g1_ref[...], b1_ref[...], eps).astype(jnp.bfloat16)
    qkv = (jnp.dot(xn, wqkv_ref[...], preferred_element_type=jnp.float32)
           + bqkv_ref[...]).astype(jnp.bfloat16)             # single up-front cast, (T, 3D)

    row = jax.lax.broadcasted_iota(jnp.int32, (T, T), 0)
    col = jax.lax.broadcasted_iota(jnp.int32, (T, T), 1)
    causal = row >= col

    for h in range(n_head):                                   # static unroll over heads
        q = qkv[:, h * hd:(h + 1) * hd]
        k = qkv[:, D + h * hd:D + (h + 1) * hd]
        v = qkv[:, 2 * D + h * hd:2 * D + (h + 1) * hd]
        s = jax.lax.dot_general(q, k, (((1,), (1,)), ((), ())),
                                preferred_element_type=jnp.float32) * scale
        s = jnp.where(causal, s, -1e30)                       # finite mask value (NaN-safe)
        s = s - jnp.max(s, axis=-1, keepdims=True)
        p = jnp.exp(s)
        inv = pl.reciprocal(jnp.sum(p, axis=-1, keepdims=True), approx=True)  # EUP
        o = jnp.dot(p.astype(jnp.bfloat16), v, preferred_element_type=jnp.float32) * inv
        a_scr[:, h * hd:(h + 1) * hd] = o.astype(jnp.bfloat16)   # no lane-concatenate

    out = (jnp.dot(a_scr[...], wproj_ref[...], preferred_element_type=jnp.float32)
           + bproj_ref[...] + x)                              # residual in f32
    o_ref[...] = out.astype(o_ref.dtype)


def attention_block(h, layer, *, n_head, eps=1e-5):
    B, T, D = h.shape
    hd = D // n_head
    scale = 1.0 / math.sqrt(hd)
    return pl.pallas_call(
        functools.partial(_attn_block_kernel, n_head=n_head, d_model=D,
                          scale=scale, eps=eps),
        out_shape=jax.ShapeDtypeStruct((B, T, D), jnp.bfloat16),
        grid=(B,),
        in_specs=[
            pl.BlockSpec((None, T, D), lambda b: (b, 0, 0)),   # hidden (bf16)
            pl.BlockSpec((1, D), lambda b: (0, 0)),            # ln1 gamma
            pl.BlockSpec((1, D), lambda b: (0, 0)),            # ln1 beta
            pl.BlockSpec((D, 3 * D), lambda b: (0, 0)),        # c_attn w (bf16)
            pl.BlockSpec((1, 3 * D), lambda b: (0, 0)),        # c_attn b
            pl.BlockSpec((D, D), lambda b: (0, 0)),            # c_proj w (bf16)
            pl.BlockSpec((1, D), lambda b: (0, 0)),            # c_proj b
        ],
        out_specs=pl.BlockSpec((None, T, D), lambda b: (b, 0, 0)),
        scratch_shapes=[pltpu.VMEM((T, D), jnp.bfloat16)],
        compiler_params=pltpu.CompilerParams(dimension_semantics=("parallel",)),
    )(h, layer["ln1_g"].reshape(1, D), layer["ln1_b"].reshape(1, D),
      layer["attn_w"], layer["attn_b"].reshape(1, 3 * D),
      layer["proj_w"], layer["proj_b"].reshape(1, D))


# ---------------- fused MLP block: ln_2 -> c_fc -> gelu_new -> c_proj --------

def _mlp_block_kernel(h_ref, g2_ref, b2_ref, wfc_ref, bfc_ref,
                      wpj_ref, bpj_ref, o_ref, *, eps):
    x = h_ref[...].astype(jnp.float32)                        # (tm, D) residual
    xn = _layernorm_f32(x, g2_ref[...], b2_ref[...], eps).astype(jnp.bfloat16)
    f = jnp.dot(xn, wfc_ref[...], preferred_element_type=jnp.float32) + bfc_ref[...]
    f = _gelu_new(f).astype(jnp.bfloat16)
    out = (jnp.dot(f, wpj_ref[...], preferred_element_type=jnp.float32)
           + bpj_ref[...] + x)
    o_ref[...] = out.astype(o_ref.dtype)


def mlp_block(h, layer, eps=1e-5):
    M, D = h.shape
    H = layer["fc_w"].shape[1]
    tm, Mp = _pick_row_tile(M, max_tile=512)
    hp = h if Mp == M else jnp.pad(h, ((0, Mp - M), (0, 0)))
    out = pl.pallas_call(
        functools.partial(_mlp_block_kernel, eps=eps),
        out_shape=jax.ShapeDtypeStruct((Mp, D), jnp.bfloat16),
        grid=(Mp // tm,),
        in_specs=[
            pl.BlockSpec((tm, D), lambda i: (i, 0)),           # hidden (bf16)
            pl.BlockSpec((1, D), lambda i: (0, 0)),            # ln2 gamma
            pl.BlockSpec((1, D), lambda i: (0, 0)),            # ln2 beta
            pl.BlockSpec((D, H), lambda i: (0, 0)),            # c_fc w (bf16)
            pl.BlockSpec((1, H), lambda i: (0, 0)),            # c_fc b
            pl.BlockSpec((H, D), lambda i: (0, 0)),            # mlp c_proj w (bf16)
            pl.BlockSpec((1, D), lambda i: (0, 0)),            # mlp c_proj b
        ],
        out_specs=pl.BlockSpec((tm, D), lambda i: (i, 0)),
        compiler_params=pltpu.CompilerParams(dimension_semantics=("parallel",)),
    )(hp, layer["ln2_g"].reshape(1, D), layer["ln2_b"].reshape(1, D),
      layer["fc_w"], layer["fc_b"].reshape(1, H),
      layer["mlp_proj_w"], layer["mlp_proj_b"].reshape(1, D))
    return out if Mp == M else out[:M]


# -------------------- fused head: ln_f -> predict_action -> tanh -------------

def _head_kernel(x_ref, g_ref, b_ref, w_ref, bw_ref, o_ref, *, eps):
    x = x_ref[...].astype(jnp.float32)
    xn = _layernorm_f32(x, g_ref[...], b_ref[...], eps).astype(jnp.bfloat16)
    y = jnp.dot(xn, w_ref[...], preferred_element_type=jnp.float32) + bw_ref[...]
    o_ref[...] = jnp.tanh(y).astype(o_ref.dtype)


def prediction_head(x, params, eps=1e-5):
    M, D = x.shape
    A = params["pred_w"].shape[1]
    Np = _round_up(A, 128)                                     # lane-dense output block
    tm, Mp = _pick_row_tile(M, max_tile=256)
    xp = x if Mp == M else jnp.pad(x, ((0, Mp - M), (0, 0)))
    wp = jnp.pad(params["pred_w"], ((0, 0), (0, Np - A)))
    bp = jnp.pad(params["pred_b"].reshape(1, A), ((0, 0), (0, Np - A)))
    out = pl.pallas_call(
        functools.partial(_head_kernel, eps=eps),
        out_shape=jax.ShapeDtypeStruct((Mp, Np), jnp.float32),
        grid=(Mp // tm,),
        in_specs=[
            pl.BlockSpec((tm, D), lambda i: (i, 0)),
            pl.BlockSpec((1, D), lambda i: (0, 0)),
            pl.BlockSpec((1, D), lambda i: (0, 0)),
            pl.BlockSpec((D, Np), lambda i: (0, 0)),
            pl.BlockSpec((1, Np), lambda i: (0, 0)),
        ],
        out_specs=pl.BlockSpec((tm, Np), lambda i: (i, 0)),
        compiler_params=pltpu.CompilerParams(dimension_semantics=("parallel",)),
    )(xp, params["lnf_g"].reshape(1, D), params["lnf_b"].reshape(1, D), wp, bp)
    return out[:M, :A]


# ----------------------------- model forward ---------------------------------

def low_level_transformer_forward(params, states, actions, subgoals, timesteps, *, n_head):
    B, L, _ = states.shape
    A = params["pred_w"].shape[1]
    D = params["embed_ln_g"].shape[0]
    T = 3 * L

    te = jnp.take(params["embed_timestep"], timesteps, axis=0)        # (B, L, D) f32
    wpe3 = params["wpe"][:T].reshape(L, 3 * D)                        # interleaved wpe view

    # embeddings + time add + embed_ln + wpe, written directly interleaved (bf16)
    emb = embed_tokens(states, actions, subgoals, te, wpe3, params)   # (B, L, 3D)
    h = emb.reshape(B, T, D)                                          # free reshape

    for layer in params["layers"]:
        h = attention_block(h, layer, n_head=n_head)                  # (B, T, D) bf16
        h = mlp_block(h.reshape(B * T, D), layer).reshape(B, T, D)    # (B, T, D) bf16

    # state tokens sit at positions 3t+1 == middle D-slice of the interleaved view
    state_tok = h.reshape(B, L, 3 * D)[:, :, D:2 * D].reshape(B * L, D)
    preds = prediction_head(state_tok, params)                        # (B*L, A) f32
    return preds.reshape(B, L, A)


# --------------------------- parameter init ----------------------------------

def init_params(key, *, state_size, action_size, d_model, n_layer, n_head,
                max_ep_len, n_positions):
    del n_head  # only needed at forward time (kept static there)
    ks = iter(jax.random.split(key, 16 + 8 * n_layer))
    std = 0.02
    bf16 = jnp.bfloat16

    def nrm(shape, dtype=jnp.float32):
        # weight matrices are pre-cast to bf16 once here (halves weight HBM traffic/VMEM)
        return (std * jax.random.normal(next(ks), shape)).astype(dtype)

    D = d_model
    params = {
        "embed_timestep": nrm((max_ep_len, D)),
        "wpe": nrm((n_positions, D)),
        "embed_state_w": nrm((state_size, D), bf16),
        "embed_state_b": jnp.zeros((D,), jnp.float32),
        "embed_action_w": nrm((action_size, D), bf16),
        "embed_action_b": jnp.zeros((D,), jnp.float32),
        "embed_subgoal_w": nrm((state_size, D), bf16),
        "embed_subgoal_b": jnp.zeros((D,), jnp.float32),
        "embed_ln_g": jnp.ones((D,), jnp.float32), "embed_ln_b": jnp.zeros((D,), jnp.float32),
        "lnf_g": jnp.ones((D,), jnp.float32), "lnf_b": jnp.zeros((D,), jnp.float32),
        "pred_w": nrm((D, action_size), bf16), "pred_b": jnp.zeros((action_size,), jnp.float32),
        "layers": [],
    }
    for _ in range(n_layer):
        params["layers"].append({
            "ln1_g": jnp.ones((D,), jnp.float32), "ln1_b": jnp.zeros((D,), jnp.float32),
            "attn_w": nrm((D, 3 * D), bf16), "attn_b": jnp.zeros((3 * D,), jnp.float32),
            "proj_w": nrm((D, D), bf16), "proj_b": jnp.zeros((D,), jnp.float32),
            "ln2_g": jnp.ones((D,), jnp.float32), "ln2_b": jnp.zeros((D,), jnp.float32),
            "fc_w": nrm((D, 4 * D), bf16), "fc_b": jnp.zeros((4 * D,), jnp.float32),
            "mlp_proj_w": nrm((4 * D, D), bf16), "mlp_proj_b": jnp.zeros((D,), jnp.float32),
        })
    return params


# --------------------------------- main ---------------------------------------

if __name__ == "__main__":
    B, L = 2, 8
    state_size, action_size = 12, 6
    d_model, n_head, n_layer = 32, 4, 2
    max_ep_len, n_positions = 128, 64

    key = jax.random.PRNGKey(0)
    kp, ks, ka, kg, kt = jax.random.split(key, 5)

    params = init_params(kp, state_size=state_size, action_size=action_size,
                         d_model=d_model, n_layer=n_layer, n_head=n_head,
                         max_ep_len=max_ep_len, n_positions=n_positions)

    states = jax.random.normal(ks, (B, L, state_size), dtype=jnp.float32)
    actions = jax.random.normal(ka, (B, L, action_size), dtype=jnp.float32)
    subgoals = jax.random.normal(kg, (B, L, state_size), dtype=jnp.float32)
    timesteps = jax.random.randint(kt, (B, L), 0, max_ep_len, dtype=jnp.int32)

    # n_head is a static Python config (bound via partial, NOT traced through jit)
    fwd = jax.jit(functools.partial(low_level_transformer_forward, n_head=n_head))
    action_preds = jax.block_until_ready(fwd(params, states, actions, subgoals, timesteps))

    assert action_preds.shape == (B, L, action_size)
    assert bool(jnp.all(jnp.isfinite(action_preds)))
    assert bool(jnp.all(jnp.abs(action_preds) <= 1.0))  # tanh head
    print("KERNEL_OK")
</pallas_src>

<mosaic_0001>
module attributes {stable_mosaic.version = 11 : i64} {
  func.func @_embed_kernel(%arg0: i32, %arg1: memref<1x8x12xf32, #tpu.memory_space<vmem>>, %arg2: memref<1x8x6xf32, #tpu.memory_space<vmem>>, %arg3: memref<1x8x12xf32, #tpu.memory_space<vmem>>, %arg4: memref<1x8x32xf32, #tpu.memory_space<vmem>>, %arg5: memref<8x96xf32, #tpu.memory_space<vmem>>, %arg6: memref<12x32xbf16, #tpu.memory_space<vmem>>, %arg7: memref<1x32xf32, #tpu.memory_space<vmem>>, %arg8: memref<6x32xbf16, #tpu.memory_space<vmem>>, %arg9: memref<1x32xf32, #tpu.memory_space<vmem>>, %arg10: memref<12x32xbf16, #tpu.memory_space<vmem>>, %arg11: memref<1x32xf32, #tpu.memory_space<vmem>>, %arg12: memref<1x32xf32, #tpu.memory_space<vmem>>, %arg13: memref<1x32xf32, #tpu.memory_space<vmem>>, %arg14: memref<1x8x96xbf16, #tpu.memory_space<vmem>>) attributes {dimension_semantics = [#tpu.dimension_semantics<parallel>], iteration_bounds = array<i64: 2>, scalar_prefetch = 0 : i64, scratch_operands = 0 : i64, tpu.core_type = #tpu.core_type<tc>, window_params = [{transform_indices = @transform_0, window_bounds = array<i64: 1, 8, 12>}, {transform_indices = @transform_1, window_bounds = array<i64: 1, 8, 6>}, {transform_indices = @transform_2, window_bounds = array<i64: 1, 8, 12>}, {transform_indices = @transform_3, window_bounds = array<i64: 1, 8, 32>}, {pipeline_mode = #tpu.pipeline_mode<synchronous>, transform_indices = @transform_4, window_bounds = array<i64: 8, 96>}, {pipeline_mode = #tpu.pipeline_mode<synchronous>, transform_indices = @transform_5, window_bounds = array<i64: 12, 32>}, {pipeline_mode = #tpu.pipeline_mode<synchronous>, transform_indices = @transform_6, window_bounds = array<i64: 1, 32>}, {pipeline_mode = #tpu.pipeline_mode<synchronous>, transform_indices = @transform_7, window_bounds = array<i64: 6, 32>}, {pipeline_mode = #tpu.pipeline_mode<synchronous>, transform_indices = @transform_8, window_bounds = array<i64: 1, 32>}, {pipeline_mode = #tpu.pipeline_mode<synchronous>, transform_indices = @transform_9, window_bounds = array<i64: 12, 32>}, {pipeline_mode = #tpu.pipeline_mode<synchronous>, transform_indices = @transform_10, window_bounds = array<i64: 1, 32>}, {pipeline_mode = #tpu.pipeline_mode<synchronous>, transform_indices = @transform_11, window_bounds = array<i64: 1, 32>}, {pipeline_mode = #tpu.pipeline_mode<synchronous>, transform_indices = @transform_12, window_bounds = array<i64: 1, 32>}, {transform_indices = @transform_13, window_bounds = array<i64: 1, 8, 96>}]} {
    %c0 = arith.constant 0 : index
    %c0_0 = arith.constant 0 : index
    %c0_1 = arith.constant 0 : index
    %0 = vector.load %arg4[%c0, %c0_0, %c0_1] : memref<1x8x32xf32, #tpu.memory_space<vmem>>, vector<1x8x32xf32>
    %1 = vector.shape_cast %0 : vector<1x8x32xf32> to vector<8x32xf32>
    %c0_2 = arith.constant 0 : index
    %c0_3 = arith.constant 0 : index
    %2 = vector.load %arg5[%c0_2, %c0_3] : memref<8x96xf32, #tpu.memory_space<vmem>>, vector<8x96xf32>
    %c0_4 = arith.constant 0 : index
    %c0_5 = arith.constant 0 : index
    %3 = vector.load %arg12[%c0_4, %c0_5] : memref<1x32xf32, #tpu.memory_space<vmem>>, vector<1x32xf32>
    %c0_6 = arith.constant 0 : index
    %c0_7 = arith.constant 0 : index
    %4 = vector.load %arg13[%c0_6, %c0_7] : memref<1x32xf32, #tpu.memory_space<vmem>>, vector<1x32xf32>
    %c0_8 = arith.constant 0 : index
    %c0_9 = arith.constant 0 : index
    %c0_10 = arith.constant 0 : index
    %5 = vector.load %arg3[%c0_8, %c0_9, %c0_10] : memref<1x8x12xf32, #tpu.memory_space<vmem>>, vector<1x8x12xf32>
    %6 = vector.shape_cast %5 : vector<1x8x12xf32> to vector<8x12xf32>
    %7 = arith.truncf %6 : vector<8x12xf32> to vector<8x12xbf16>
    %c0_11 = arith.constant 0 : index
    %c0_12 = arith.constant 0 : index
    %8 = vector.load %arg10[%c0_11, %c0_12] : memref<12x32xbf16, #tpu.memory_space<vmem>>, vector<12x32xbf16>
    %cst = arith.constant dense<0.000000e+00> : vector<8x32xf32>
    %9 = tpu.matmul %7, %8, %cst {dimension_numbers = #tpu.dot_dimension_numbers<[1], [0], [0], [1], [0, 0, 1, 1], [], []>} : vector<8x12xbf16>, vector<12x32xbf16>, vector<8x32xf32> -> vector<8x32xf32>
    %c0_13 = arith.constant 0 : index
    %c0_14 = arith.constant 0 : index
    %10 = vector.load %arg11[%c0_13, %c0_14] : memref<1x32xf32, #tpu.memory_space<vmem>>, vector<1x32xf32>
    %11 = vector.broadcast %10 : vector<1x32xf32> to vector<8x32xf32>
    %12 = arith.addf %9, %11 : vector<8x32xf32>
    %13 = arith.addf %12, %1 : vector<8x32xf32>
    %cst_15 = arith.constant dense<0.000000e+00> : vector<8xf32>
    %14 = vector.multi_reduction <add>, %13, %cst_15 [1] : vector<8x32xf32> to vector<8xf32>
    %15 = vector.shape_cast %14 : vector<8xf32> to vector<8x1xf32>
    %cst_16 = arith.constant 3.200000e+01 : f32
    %16 = vector.broadcast %cst_16 : f32 to vector<8x1xf32>
    %17 = arith.divf %15, %16 : vector<8x1xf32>
    %18 = vector.broadcast %17 : vector<8x1xf32> to vector<8x32xf32>
    %19 = arith.subf %13, %18 : vector<8x32xf32>
    %20 = arith.mulf %19, %19 : vector<8x32xf32>
    %cst_17 = arith.constant dense<0.000000e+00> : vector<8xf32>
    %21 = vector.multi_reduction <add>, %20, %cst_17 [1] : vector<8x32xf32> to vector<8xf32>
    %22 = vector.shape_cast %21 : vector<8xf32> to vector<8x1xf32>
    %cst_18 = arith.constant 3.200000e+01 : f32
    %23 = vector.broadcast %cst_18 : f32 to vector<8x1xf32>
    %24 = arith.divf %22, %23 : vector<8x1xf32>
    %cst_19 = arith.constant 9.99999974E-6 : f32
    %25 = vector.broadcast %cst_19 : f32 to vector<8x1xf32>
    %26 = arith.addf %24, %25 : vector<8x1xf32>
    %27 = math.rsqrt %26 : vector<8x1xf32>
    %28 = vector.broadcast %27 : vector<8x1xf32> to vector<8x32xf32>
    %29 = arith.mulf %19, %28 : vector<8x32xf32>
    %30 = vector.broadcast %3 : vector<1x32xf32> to vector<8x32xf32>
    %31 = arith.mulf %29, %30 : vector<8x32xf32>
    %32 = vector.broadcast %4 : vector<1x32xf32> to vector<8x32xf32>
    %33 = arith.addf %31, %32 : vector<8x32xf32>
    %34 = vector.extract_strided_slice %2 {offsets = [0, 0], sizes = [8, 32], strides = [1, 1]} : vector<8x96xf32> to vector<8x32xf32>
    %35 = arith.addf %33, %34 : vector<8x32xf32>
    %36 = arith.truncf %35 : vector<8x32xf32> to vector<8x32xbf16>
    %c0_20 = arith.constant 0 : index
    %c0_21 = arith.constant 0 : index
    %c0_22 = arith.constant 0 : index
    %37 = vector.load %arg14[%c0_20, %c0_21, %c0_22] : memref<1x8x96xbf16, #tpu.memory_space<vmem>>, vector<1x8x32xbf16>
    %38 = vector.shape_cast %37 : vector<1x8x32xbf16> to vector<8x32xbf16>
    %39 = vector.shape_cast %36 : vector<8x32xbf16> to vector<1x8x32xbf16>
    tpu.vector_store %arg14[%c0_20, %c0_21, %c0_22], %39 {strides = array<i32>} : memref<1x8x96xbf16, #tpu.memory_space<vmem>>, vector<1x8x32xbf16>,
    %c0_23 = arith.constant 0 : index
    %c0_24 = arith.constant 0 : index
    %c0_25 = arith.constant 0 : index
    %40 = vector.load %arg1[%c0_23, %c0_24, %c0_25] : memref<1x8x12xf32, #tpu.memory_space<vmem>>, vector<1x8x12xf32>
    %41 = vector.shape_cast %40 : vector<1x8x12xf32> to vector<8x12xf32>
    %42 = arith.truncf %41 : vector<8x12xf32> to vector<8x12xbf16>
    %c0_26 = arith.constant 0 : index
    %c0_27 = arith.constant 0 : index
    %43 = vector.load %arg6[%c0_26, %c0_27] : memref<12x32xbf16, #tpu.memory_space<vmem>>, vector<12x32xbf16>
    %cst_28 = arith.constant dense<0.000000e+00> : vector<8x32xf32>
    %44 = tpu.matmul %42, %43, %cst_28 {dimension_numbers = #tpu.dot_dimension_numbers<[1], [0], [0], [1], [0, 0, 1, 1], [], []>} : vector<8x12xbf16>, vector<12x32xbf16>, vector<8x32xf32> -> vector<8x32xf32>
    %c0_29 = arith.constant 0 : index
    %c0_30 = arith.constant 0 : index
    %45 = vector.load %arg7[%c0_29, %c0_30] : memref<1x32xf32, #tpu.memory_space<vmem>>, vector<1x32xf32>
    %46 = vector.broadcast %45 : vector<1x32xf32> to vector<8x32xf32>
    %47 = arith.addf %44, %46 : vector<8x32xf32>
    %48 = arith.addf %47, %1 : vector<8x32xf32>
    %cst_31 = arith.constant dense<0.000000e+00> : vector<8xf32>
    %49 = vector.multi_reduction <add>, %48, %cst_31 [1] : vector<8x32xf32> to vector<8xf32>
    %50 = vector.shape_cast %49 : vector<8xf32> to vector<8x1xf32>
    %cst_32 = arith.constant 3.200000e+01 : f32
    %51 = vector.broadcast %cst_32 : f32 to vector<8x1xf32>
    %52 = arith.divf %50, %51 : vector<8x1xf32>
    %53 = vector.broadcast %52 : vector<8x1xf32> to vector<8x32xf32>
    %54 = arith.subf %48, %53 : vector<8x32xf32>
    %55 = arith.mulf %54, %54 : vector<8x32xf32>
    %cst_33 = arith.constant dense<0.000000e+00> : vector<8xf32>
    %56 = vector.multi_reduction <add>, %55, %cst_33 [1] : vector<8x32xf32> to vector<8xf32>
    %57 = vector.shape_cast %56 : vector<8xf32> to vector<8x1xf32>
    %cst_34 = arith.constant 3.200000e+01 : f32
    %58 = vector.broadcast %cst_34 : f32 to vector<8x1xf32>
    %59 = arith.divf %57, %58 : vector<8x1xf32>
    %cst_35 = arith.constant 9.99999974E-6 : f32
    %60 = vector.broadcast %cst_35 : f32 to vector<8x1xf32>
    %61 = arith.addf %59, %60 : vector<8x1xf32>
    %62 = math.rsqrt %61 : vector<8x1xf32>
    %63 = vector.broadcast %62 : vector<8x1xf32> to vector<8x32xf32>
    %64 = arith.mulf %54, %63 : vector<8x32xf32>
    %65 = vector.broadcast %3 : vector<1x32xf32> to vector<8x32xf32>
    %66 = arith.mulf %64, %65 : vector<8x32xf32>
    %67 = vector.broadcast %4 : vector<1x32xf32> to vector<8x32xf32>
    %68 = arith.addf %66, %67 : vector<8x32xf32>
    %69 = vector.extract_strided_slice %2 {offsets = [0, 32], sizes = [8, 32], strides = [1, 1]} : vector<8x96xf32> to vector<8x32xf32>
    %70 = arith.addf %68, %69 : vector<8x32xf32>
    %71 = arith.truncf %70 : vector<8x32xf32> to vector<8x32xbf16>
    %c0_36 = arith.constant 0 : index
    %c0_37 = arith.constant 0 : index
    %c32 = arith.constant 32 : index
    %72 = vector.load %arg14[%c0_36, %c0_37, %c32] : memref<1x8x96xbf16, #tpu.memory_space<vmem>>, vector<1x8x32xbf16>
    %73 = vector.shape_cast %72 : vector<1x8x32xbf16> to vector<8x32xbf16>
    %74 = vector.shape_cast %71 : vector<8x32xbf16> to vector<1x8x32xbf16>
    tpu.vector_store %arg14[%c0_36, %c0_37, %c32], %74 {strides = array<i32>} : memref<1x8x96xbf16, #tpu.memory_space<vmem>>, vector<1x8x32xbf16>,
    %c0_38 = arith.constant 0 : index
    %c0_39 = arith.constant 0 : index
    %c0_40 = arith.constant 0 : index
    %75 = vector.load %arg2[%c0_38, %c0_39, %c0_40] : memref<1x8x6xf32, #tpu.memory_space<vmem>>, vector<1x8x6xf32>
    %76 = vector.shape_cast %75 : vector<1x8x6xf32> to vector<8x6xf32>
    %77 = arith.truncf %76 : vector<8x6xf32> to vector<8x6xbf16>
    %c0_41 = arith.constant 0 : index
    %c0_42 = arith.constant 0 : index
    %78 = vector.load %arg8[%c0_41, %c0_42] : memref<6x32xbf16, #tpu.memory_space<vmem>>, vector<6x32xbf16>
    %cst_43 = arith.constant dense<0.000000e+00> : vector<8x32xf32>
    %79 = tpu.matmul %77, %78, %cst_43 {dimension_numbers = #tpu.dot_dimension_numbers<[1], [0], [0], [1], [0, 0, 1, 1], [], []>} : vector<8x6xbf16>, vector<6x32xbf16>, vector<8x32xf32> -> vector<8x32xf32>
    %c0_44 = arith.constant 0 : index
    %c0_45 = arith.constant 0 : index
    %80 = vector.load %arg9[%c0_44, %c0_45] : memref<1x32xf32, #tpu.memory_space<vmem>>, vector<1x32xf32>
    %81 = vector.broadcast %80 : vector<1x32xf32> to vector<8x32xf32>
    %82 = arith.addf %79, %81 : vector<8x32xf32>
    %83 = arith.addf %82, %1 : vector<8x32xf32>
    %cst_46 = arith.constant dense<0.000000e+00> : vector<8xf32>
    %84 = vector.multi_reduction <add>, %83, %cst_46 [1] : vector<8x32xf32> to vector<8xf32>
    %85 = vector.shape_cast %84 : vector<8xf32> to vector<8x1xf32>
    %cst_47 = arith.constant 3.200000e+01 : f32
    %86 = vector.broadcast %cst_47 : f32 to vector<8x1xf32>
    %87 = arith.divf %85, %86 : vector<8x1xf32>
    %88 = vector.broadcast %87 : vector<8x1xf32> to vector<8x32xf32>
    %89 = arith.subf %83, %88 : vector<8x32xf32>
    %90 = arith.mulf %89, %89 : vector<8x32xf32>
    %cst_48 = arith.constant dense<0.000000e+00> : vector<8xf32>
    %91 = vector.multi_reduction <add>, %90, %cst_48 [1] : vector<8x32xf32> to vector<8xf32>
    %92 = vector.shape_cast %91 : vector<8xf32> to vector<8x1xf32>
    %cst_49 = arith.constant 3.200000e+01 : f32
    %93 = vector.broadcast %cst_49 : f32 to vector<8x1xf32>
    %94 = arith.divf %92, %93 : vector<8x1xf32>
    %cst_50 = arith.constant 9.99999974E-6 : f32
    %95 = vector.broadcast %cst_50 : f32 to vector<8x1xf32>
    %96 = arith.addf %94, %95 : vector<8x1xf32>
    %97 = math.rsqrt %96 : vector<8x1xf32>
    %98 = vector.broadcast %97 : vector<8x1xf32> to vector<8x32xf32>
    %99 = arith.mulf %89, %98 : vector<8x32xf32>
    %100 = vector.broadcast %3 : vector<1x32xf32> to vector<8x32xf32>
    %101 = arith.mulf %99, %100 : vector<8x32xf32>
    %102 = vector.broadcast %4 : vector<1x32xf32> to vector<8x32xf32>
    %103 = arith.addf %101, %102 : vector<8x32xf32>
    %104 = vector.extract_strided_slice %2 {offsets = [0, 64], sizes = [8, 32], strides = [1, 1]} : vector<8x96xf32> to vector<8x32xf32>
    %105 = arith.addf %103, %104 : vector<8x32xf32>
    %106 = arith.truncf %105 : vector<8x32xf32> to vector<8x32xbf16>
    %c0_51 = arith.constant 0 : index
    %c0_52 = arith.constant 0 : index
    %c64 = arith.constant 64 : index
    %107 = vector.load %arg14[%c0_51, %c0_52, %c64] : memref<1x8x96xbf16, #tpu.memory_space<vmem>>, vector<1x8x32xbf16>
    %108 = vector.shape_cast %107 : vector<1x8x32xbf16> to vector<8x32xbf16>
    %109 = vector.shape_cast %106 : vector<8x32xbf16> to vector<1x8x32xbf16>
    tpu.vector_store %arg14[%c0_51, %c0_52, %c64], %109 {strides = array<i32>} : memref<1x8x96xbf16, #tpu.memory_space<vmem>>, vector<1x8x32xbf16>,
    return
  }
  func.func @transform_0(%arg0: i32) -> (i32, i32, i32) {
    %c0_i32 = arith.constant 0 : i32
    %c0_i32_0 = arith.constant 0 : i32
    %c0_i32_1 = arith.constant 0 : i32
    return %arg0, %c0_i32, %c0_i32_0 : i32, i32, i32
  }
  func.func @transform_1(%arg0: i32) -> (i32, i32, i32) {
    %c0_i32 = arith.constant 0 : i32
    %c0_i32_0 = arith.constant 0 : i32
    %c0_i32_1 = arith.constant 0 : i32
    return %arg0, %c0_i32, %c0_i32_0 : i32, i32, i32
  }
  func.func @transform_2(%arg0: i32) -> (i32, i32, i32) {
    %c0_i32 = arith.constant 0 : i32
    %c0_i32_0 = arith.constant 0 : i32
    %c0_i32_1 = arith.constant 0 : i32
    return %arg0, %c0_i32, %c0_i32_0 : i32, i32, i32
  }
  func.func @transform_3(%arg0: i32) -> (i32, i32, i32) {
    %c0_i32 = arith.constant 0 : i32
    %c0_i32_0 = arith.constant 0 : i32
    %c0_i32_1 = arith.constant 0 : i32
    return %arg0, %c0_i32, %c0_i32_0 : i32, i32, i32
  }
  func.func @transform_4(%arg0: i32) -> (i32, i32) {
    %c0_i32 = arith.constant 0 : i32
    %c0_i32_0 = arith.constant 0 : i32
    %c0_i32_1 = arith.constant 0 : i32
    return %c0_i32, %c0_i32_0 : i32, i32
  }
  func.func @transform_5(%arg0: i32) -> (i32, i32) {
    %c0_i32 = arith.constant 0 : i32
    %c0_i32_0 = arith.constant 0 : i32
    %c0_i32_1 = arith.constant 0 : i32
    return %c0_i32, %c0_i32_0 : i32, i32
  }
  func.func @transform_6(%arg0: i32) -> (i32, i32) {
    %c0_i32 = arith.constant 0 : i32
    %c0_i32_0 = arith.constant 0 : i32
    %c0_i32_1 = arith.constant 0 : i32
    return %c0_i32, %c0_i32_0 : i32, i32
  }
  func.func @transform_7(%arg0: i32) -> (i32, i32) {
    %c0_i32 = arith.constant 0 : i32
    %c0_i32_0 = arith.constant 0 : i32
    %c0_i32_1 = arith.constant 0 : i32
    return %c0_i32, %c0_i32_0 : i32, i32
  }
  func.func @transform_8(%arg0: i32) -> (i32, i32) {
    %c0_i32 = arith.constant 0 : i32
    %c0_i32_0 = arith.constant 0 : i32
    %c0_i32_1 = arith.constant 0 : i32
    return %c0_i32, %c0_i32_0 : i32, i32
  }
  func.func @transform_9(%arg0: i32) -> (i32, i32) {
    %c0_i32 = arith.constant 0 : i32
    %c0_i32_0 = arith.constant 0 : i32
    %c0_i32_1 = arith.constant 0 : i32
    return %c0_i32, %c0_i32_0 : i32, i32
  }
  func.func @transform_10(%arg0: i32) -> (i32, i32) {
    %c0_i32 = arith.constant 0 : i32
    %c0_i32_0 = arith.constant 0 : i32
    %c0_i32_1 = arith.constant 0 : i32
    return %c0_i32, %c0_i32_0 : i32, i32
  }
  func.func @transform_11(%arg0: i32) -> (i32, i32) {
    %c0_i32 = arith.constant 0 : i32
    %c0_i32_0 = arith.constant 0 : i32
    %c0_i32_1 = arith.constant 0 : i32
    return %c0_i32, %c0_i32_0 : i32, i32
  }
  func.func @transform_12(%arg0: i32) -> (i32, i32) {
    %c0_i32 = arith.constant 0 : i32
    %c0_i32_0 = arith.constant 0 : i32
    %c0_i32_1 = arith.constant 0 : i32
    return %c0_i32, %c0_i32_0 : i32, i32
  }
  func.func @transform_13(%arg0: i32) -> (i32, i32, i32) {
    %c0_i32 = arith.constant 0 : i32
    %c0_i32_0 = arith.constant 0 : i32
    %c0_i32_1 = arith.constant 0 : i32
    return %arg0, %c0_i32, %c0_i32_0 : i32, i32, i32
  }
}

module attributes {stable_mosaic.version = 11 : i64} {
  func.func @_attn_block_kernel(%arg0: i32, %arg1: memref<1x24x32xbf16, #tpu.memory_space<vmem>>, %arg2: memref<1x32xf32, #tpu.memory_space<vmem>>, %arg3: memref<1x32xf32, #tpu.memory_space<vmem>>, %arg4: memref<32x96xbf16, #tpu.memory_space<vmem>>, %arg5: memref<1x96xf32, #tpu.memory_space<vmem>>, %arg6: memref<32x32xbf16, #tpu.memory_space<vmem>>, %arg7: memref<1x32xf32, #tpu.memory_space<vmem>>, %arg8: memref<1x24x32xbf16, #tpu.memory_space<vmem>>, %arg9: memref<24x32xbf16, #tpu.memory_space<vmem>>) attributes {dimension_semantics = [#tpu.dimension_semantics<parallel>], iteration_bounds = array<i64: 2>, scalar_prefetch = 0 : i64, scratch_operands = 1 : i64, tpu.core_type = #tpu.core_type<tc>, window_params = [{transform_indices = @transform_0, window_bounds = array<i64: 1, 24, 32>}, {pipeline_mode = #tpu.pipeline_mode<synchronous>, transform_indices = @transform_1, window_bounds = array<i64: 1, 32>}, {pipeline_mode = #tpu.pipeline_mode<synchronous>, transform_indices = @transform_2, window_bounds = array<i64: 1, 32>}, {pipeline_mode = #tpu.pipeline_mode<synchronous>, transform_indices = @transform_3, window_bounds = array<i64: 32, 96>}, {pipeline_mode = #tpu.pipeline_mode<synchronous>, transform_indices = @transform_4, window_bounds = array<i64: 1, 96>}, {pipeline_mode = #tpu.pipeline_mode<synchronous>, transform_indices = @transform_5, window_bounds = array<i64: 32, 32>}, {pipeline_mode = #tpu.pipeline_mode<synchronous>, transform_indices = @transform_6, window_bounds = array<i64: 1, 32>}, {transform_indices = @transform_7, window_bounds = array<i64: 1, 24, 32>}]} {
    %c0 = arith.constant 0 : index
    %c0_0 = arith.constant 0 : index
    %c0_1 = arith.constant 0 : index
    %0 = vector.load %arg1[%c0, %c0_0, %c0_1] : memref<1x24x32xbf16, #tpu.memory_space<vmem>>, vector<1x24x32xbf16>
    %1 = vector.shape_cast %0 : vector<1x24x32xbf16> to vector<24x32xbf16>
    %2 = arith.extf %1 : vector<24x32xbf16> to vector<24x32xf32>
    %c0_2 = arith.constant 0 : index
    %c0_3 = arith.constant 0 : index
    %3 = vector.load %arg2[%c0_2, %c0_3] : memref<1x32xf32, #tpu.memory_space<vmem>>, vector<1x32xf32>
    %c0_4 = arith.constant 0 : index
    %c0_5 = arith.constant 0 : index
    %4 = vector.load %arg3[%c0_4, %c0_5] : memref<1x32xf32, #tpu.memory_space<vmem>>, vector<1x32xf32>
    %cst = arith.constant dense<0.000000e+00> : vector<24xf32>
    %5 = vector.multi_reduction <add>, %2, %cst [1] : vector<24x32xf32> to vector<24xf32>
    %6 = vector.shape_cast %5 : vector<24xf32> to vector<24x1xf32>
    %cst_6 = arith.constant 3.200000e+01 : f32
    %7 = vector.broadcast %cst_6 : f32 to vector<24x1xf32>
    %8 = arith.divf %6, %7 : vector<24x1xf32>
    %9 = vector.broadcast %8 : vector<24x1xf32> to vector<24x32xf32>
    %10 = arith.subf %2, %9 : vector<24x32xf32>
    %11 = arith.mulf %10, %10 : vector<24x32xf32>
    %cst_7 = arith.constant dense<0.000000e+00> : vector<24xf32>
    %12 = vector.multi_reduction <add>, %11, %cst_7 [1] : vector<24x32xf32> to vector<24xf32>
    %13 = vector.shape_cast %12 : vector<24xf32> to vector<24x1xf32>
    %cst_8 = arith.constant 3.200000e+01 : f32
    %14 = vector.broadcast %cst_8 : f32 to vector<24x1xf32>
    %15 = arith.divf %13, %14 : vector<24x1xf32>
    %cst_9 = arith.constant 9.99999974E-6 : f32
    %16 = vector.broadcast %cst_9 : f32 to vector<24x1xf32>
    %17 = arith.addf %15, %16 : vector<24x1xf32>
    %18 = math.rsqrt %17 : vector<24x1xf32>
    %19 = vector.broadcast %18 : vector<24x1xf32> to vector<24x32xf32>
    %20 = arith.mulf %10, %19 : vector<24x32xf32>
    %21 = vector.broadcast %3 : vector<1x32xf32> to vector<24x32xf32>
    %22 = arith.mulf %20, %21 : vector<24x32xf32>
    %23 = vector.broadcast %4 : vector<1x32xf32> to vector<24x32xf32>
    %24 = arith.addf %22, %23 : vector<24x32xf32>
    %25 = arith.truncf %24 : vector<24x32xf32> to vector<24x32xbf16>
    %c0_10 = arith.constant 0 : index
    %c0_11 = arith.constant 0 : index
    %26 = vector.load %arg4[%c0_10, %c0_11] : memref<32x96xbf16, #tpu.memory_space<vmem>>, vector<32x96xbf16>
    %cst_12 = arith.constant dense<0.000000e+00> : vector<24x96xf32>
    %27 = tpu.matmul %25, %26, %cst_12 {dimension_numbers = #tpu.dot_dimension_numbers<[1], [0], [0], [1], [0, 0, 1, 1], [], []>} : vector<24x32xbf16>, vector<32x96xbf16>, vector<24x96xf32> -> vector<24x96xf32>
    %c0_13 = arith.constant 0 : index
    %c0_14 = arith.constant 0 : index
    %28 = vector.load %arg5[%c0_13, %c0_14] : memref<1x96xf32, #tpu.memory_space<vmem>>, vector<1x96xf32>
    %29 = vector.broadcast %28 : vector<1x96xf32> to vector<24x96xf32>
    %30 = arith.addf %27, %29 : vector<24x96xf32>
    %31 = arith.truncf %30 : vector<24x96xf32> to vector<24x96xbf16>
    %32 = tpu.iota {dimensions = array<i32: 0>} : vector<24x24xi32>
    %33 = tpu.iota {dimensions = array<i32: 1>} : vector<24x24xi32>
    %34 = arith.cmpi sge, %32, %33 : vector<24x24xi32>
    %35 = vector.extract_strided_slice %31 {offsets = [0, 0], sizes = [24, 8], strides = [1, 1]} : vector<24x96xbf16> to vector<24x8xbf16>
    %36 = vector.extract_strided_slice %31 {offsets = [0, 32], sizes = [24, 8], strides = [1, 1]} : vector<24x96xbf16> to vector<24x8xbf16>
    %37 = vector.extract_strided_slice %31 {offsets = [0, 64], sizes = [24, 8], strides = [1, 1]} : vector<24x96xbf16> to vector<24x8xbf16>
    %cst_15 = arith.constant dense<0.000000e+00> : vector<24x24xf32>
    %38 = tpu.matmul %35, %36, %cst_15 {dimension_numbers = #tpu.dot_dimension_numbers<[1], [1], [0], [0], [0, 0, 1, 0], [], []>} : vector<24x8xbf16>, vector<24x8xbf16>, vector<24x24xf32> -> vector<24x24xf32>
    %cst_16 = arith.constant 0.353553385 : f32
    %39 = vector.broadcast %cst_16 : f32 to vector<24x24xf32>
    %40 = arith.mulf %38, %39 : vector<24x24xf32>
    %cst_17 = arith.constant -1.000000e+30 : f32
    %41 = vector.broadcast %cst_17 : f32 to vector<24x24xf32>
    %42 = arith.select %34, %40, %41 : vector<24x24xi1>, vector<24x24xf32>
    %cst_18 = arith.constant dense<0xFF800000> : vector<24xf32>
    %43 = vector.multi_reduction <maximumf>, %42, %cst_18 [1] : vector<24x24xf32> to vector<24xf32>
    %44 = vector.shape_cast %43 : vector<24xf32> to vector<24x1xf32>
    %45 = vector.broadcast %44 : vector<24x1xf32> to vector<24x24xf32>
    %46 = arith.subf %42, %45 : vector<24x24xf32>
    %47 = math.exp %46 : vector<24x24xf32>
    %cst_19 = arith.constant dense<0.000000e+00> : vector<24xf32>
    %48 = vector.multi_reduction <add>, %47, %cst_19 [1] : vector<24x24xf32> to vector<24xf32>
    %49 = vector.shape_cast %48 : vector<24xf32> to vector<24x1xf32>
    %50 = tpu.reciprocal %49 {approx = true} : vector<24x1xf32> -> vector<24x1xf32>
    %51 = arith.truncf %47 : vector<24x24xf32> to vector<24x24xbf16>
    %cst_20 = arith.constant dense<0.000000e+00> : vector<24x8xf32>
    %52 = tpu.matmul %51, %37, %cst_20 {dimension_numbers = #tpu.dot_dimension_numbers<[1], [0], [0], [1], [0, 0, 1, 1], [], []>} : vector<24x24xbf16>, vector<24x8xbf16>, vector<24x8xf32> -> vector<24x8xf32>
    %53 = vector.broadcast %50 : vector<24x1xf32> to vector<24x8xf32>
    %54 = arith.mulf %52, %53 : vector<24x8xf32>
    %55 = arith.truncf %54 : vector<24x8xf32> to vector<24x8xbf16>
    %c0_21 = arith.constant 0 : index
    %c0_22 = arith.constant 0 : index
    %56 = vector.load %arg9[%c0_21, %c0_22] : memref<24x32xbf16, #tpu.memory_space<vmem>>, vector<24x8xbf16>
    tpu.vector_store %arg9[%c0_21, %c0_22], %55 {strides = array<i32>} : memref<24x32xbf16, #tpu.memory_space<vmem>>, vector<24x8xbf16>,
    %57 = vector.extract_strided_slice %31 {offsets = [0, 8], sizes = [24, 8], strides = [1, 1]} : vector<24x96xbf16> to vector<24x8xbf16>
    %58 = vector.extract_strided_slice %31 {offsets = [0, 40], sizes = [24, 8], strides = [1, 1]} : vector<24x96xbf16> to vector<24x8xbf16>
    %59 = vector.extract_strided_slice %31 {offsets = [0, 72], sizes = [24, 8], strides = [1, 1]} : vector<24x96xbf16> to vector<24x8xbf16>
    %cst_23 = arith.constant dense<0.000000e+00> : vector<24x24xf32>
    %60 = tpu.matmul %57, %58, %cst_23 {dimension_numbers = #tpu.dot_dimension_numbers<[1], [1], [0], [0], [0, 0, 1, 0], [], []>} : vector<24x8xbf16>, vector<24x8xbf16>, vector<24x24xf32> -> vector<24x24xf32>
    %cst_24 = arith.constant 0.353553385 : f32
    %61 = vector.broadcast %cst_24 : f32 to vector<24x24xf32>
    %62 = arith.mulf %60, %61 : vector<24x24xf32>
    %cst_25 = arith.constant -1.000000e+30 : f32
    %63 = vector.broadcast %cst_25 : f32 to vector<24x24xf32>
    %64 = arith.select %34, %62, %63 : vector<24x24xi1>, vector<24x24xf32>
    %cst_26 = arith.constant dense<0xFF800000> : vector<24xf32>
    %65 = vector.multi_reduction <maximumf>, %64, %cst_26 [1] : vector<24x24xf32> to vector<24xf32>
    %66 = vector.shape_cast %65 : vector<24xf32> to vector<24x1xf32>
    %67 = vector.broadcast %66 : vector<24x1xf32> to vector<24x24xf32>
    %68 = arith.subf %64, %67 : vector<24x24xf32>
    %69 = math.exp %68 : vector<24x24xf32>
    %cst_27 = arith.constant dense<0.000000e+00> : vector<24xf32>
    %70 = vector.multi_reduction <add>, %69, %cst_27 [1] : vector<24x24xf32> to vector<24xf32>
    %71 = vector.shape_cast %70 : vector<24xf32> to vector<24x1xf32>
    %72 = tpu.reciprocal %71 {approx = true} : vector<24x1xf32> -> vector<24x1xf32>
    %73 = arith.truncf %69 : vector<24x24xf32> to vector<24x24xbf16>
    %cst_28 = arith.constant dense<0.000000e+00> : vector<24x8xf32>
    %74 = tpu.matmul %73, %59, %cst_28 {dimension_numbers = #tpu.dot_dimension_numbers<[1], [0], [0], [1], [0, 0, 1, 1], [], []>} : vector<24x24xbf16>, vector<24x8xbf16>, vector<24x8xf32> -> vector<24x8xf32>
    %75 = vector.broadcast %72 : vector<24x1xf32> to vector<24x8xf32>
    %76 = arith.mulf %74, %75 : vector<24x8xf32>
    %77 = arith.truncf %76 : vector<24x8xf32> to vector<24x8xbf16>
    %c0_29 = arith.constant 0 : index
    %c8 = arith.constant 8 : index
    %78 = vector.load %arg9[%c0_29, %c8] : memref<24x32xbf16, #tpu.memory_space<vmem>>, vector<24x8xbf16>
    tpu.vector_store %arg9[%c0_29, %c8], %77 {strides = array<i32>} : memref<24x32xbf16, #tpu.memory_space<vmem>>, vector<24x8xbf16>,
    %79 = vector.extract_strided_slice %31 {offsets = [0, 16], sizes = [24, 8], strides = [1, 1]} : vector<24x96xbf16> to vector<24x8xbf16>
    %80 = vector.extract_strided_slice %31 {offsets = [0, 48], sizes = [24, 8], strides = [1, 1]} : vector<24x96xbf16> to vector<24x8xbf16>
    %81 = vector.extract_strided_slice %31 {offsets = [0, 80], sizes = [24, 8], strides = [1, 1]} : vector<24x96xbf16> to vector<24x8xbf16>
    %cst_30 = arith.constant dense<0.000000e+00> : vector<24x24xf32>
    %82 = tpu.matmul %79, %80, %cst_30 {dimension_numbers = #tpu.dot_dimension_numbers<[1], [1], [0], [0], [0, 0, 1, 0], [], []>} : vector<24x8xbf16>, vector<24x8xbf16>, vector<24x24xf32> -> vector<24x24xf32>
    %cst_31 = arith.constant 0.353553385 : f32
    %83 = vector.broadcast %cst_31 : f32 to vector<24x24xf32>
    %84 = arith.mulf %82, %83 : vector<24x24xf32>
    %cst_32 = arith.constant -1.000000e+30 : f32
    %85 = vector.broadcast %cst_32 : f32 to vector<24x24xf32>
    %86 = arith.select %34, %84, %85 : vector<24x24xi1>, vector<24x24xf32>
    %cst_33 = arith.constant dense<0xFF800000> : vector<24xf32>
    %87 = vector.multi_reduction <maximumf>, %86, %cst_33 [1] : vector<24x24xf32> to vector<24xf32>
    %88 = vector.shape_cast %87 : vector<24xf32> to vector<24x1xf32>
    %89 = vector.broadcast %88 : vector<24x1xf32> to vector<24x24xf32>
    %90 = arith.subf %86, %89 : vector<24x24xf32>
    %91 = math.exp %90 : vector<24x24xf32>
    %cst_34 = arith.constant dense<0.000000e+00> : vector<24xf32>
    %92 = vector.multi_reduction <add>, %91, %cst_34 [1] : vector<24x24xf32> to vector<24xf32>
    %93 = vector.shape_cast %92 : vector<24xf32> to vector<24x1xf32>
    %94 = tpu.reciprocal %93 {approx = true} : vector<24x1xf32> -> vector<24x1xf32>
    %95 = arith.truncf %91 : vector<24x24xf32> to vector<24x24xbf16>
    %cst_35 = arith.constant dense<0.000000e+00> : vector<24x8xf32>
    %96 = tpu.matmul %95, %81, %cst_35 {dimension_numbers = #tpu.dot_dimension_numbers<[1], [0], [0], [1], [0, 0, 1, 1], [], []>} : vector<24x24xbf16>, vector<24x8xbf16>, vector<24x8xf32> -> vector<24x8xf32>
    %97 = vector.broadcast %94 : vector<24x1xf32> to vector<24x8xf32>
    %98 = arith.mulf %96, %97 : vector<24x8xf32>
    %99 = arith.truncf %98 : vector<24x8xf32> to vector<24x8xbf16>
    %c0_36 = arith.constant 0 : index
    %c16 = arith.constant 16 : index
    %100 = vector.load %arg9[%c0_36, %c16] : memref<24x32xbf16, #tpu.memory_space<vmem>>, vector<24x8xbf16>
    tpu.vector_store %arg9[%c0_36, %c16], %99 {strides = array<i32>} : memref<24x32xbf16, #tpu.memory_space<vmem>>, vector<24x8xbf16>,
    %101 = vector.extract_strided_slice %31 {offsets = [0, 24], sizes = [24, 8], strides = [1, 1]} : vector<24x96xbf16> to vector<24x8xbf16>
    %102 = vector.extract_strided_slice %31 {offsets = [0, 56], sizes = [24, 8], strides = [1, 1]} : vector<24x96xbf16> to vector<24x8xbf16>
    %103 = vector.extract_strided_slice %31 {offsets = [0, 88], sizes = [24, 8], strides = [1, 1]} : vector<24x96xbf16> to vector<24x8xbf16>
    %cst_37 = arith.constant dense<0.000000e+00> : vector<24x24xf32>
    %104 = tpu.matmul %101, %102, %cst_37 {dimension_numbers = #tpu.dot_dimension_numbers<[1], [1], [0], [0], [0, 0, 1, 0], [], []>} : vector<24x8xbf16>, vector<24x8xbf16>, vector<24x24xf32> -> vector<24x24xf32>
    %cst_38 = arith.constant 0.353553385 : f32
    %105 = vector.broadcast %cst_38 : f32 to vector<24x24xf32>
    %106 = arith.mulf %104, %105 : vector<24x24xf32>
    %cst_39 = arith.constant -1.000000e+30 : f32
    %107 = vector.broadcast %cst_39 : f32 to vector<24x24xf32>
    %108 = arith.select %34, %106, %107 : vector<24x24xi1>, vector<24x24xf32>
    %cst_40 = arith.constant dense<0xFF800000> : vector<24xf32>
    %109 = vector.multi_reduction <maximumf>, %108, %cst_40 [1] : vector<24x24xf32> to vector<24xf32>
    %110 = vector.shape_cast %109 : vector<24xf32> to vector<24x1xf32>
    %111 = vector.broadcast %110 : vector<24x1xf32> to vector<24x24xf32>
    %112 = arith.subf %108, %111 : vector<24x24xf32>
    %113 = math.exp %112 : vector<24x24xf32>
    %cst_41 = arith.constant dense<0.000000e+00> : vector<24xf32>
    %114 = vector.multi_reduction <add>, %113, %cst_41 [1] : vector<24x24xf32> to vector<24xf32>
    %115 = vector.shape_cast %114 : vector<24xf32> to vector<24x1xf32>
    %116 = tpu.reciprocal %115 {approx = true} : vector<24x1xf32> -> vector<24x1xf32>
    %117 = arith.truncf %113 : vector<24x24xf32> to vector<24x24xbf16>
    %cst_42 = arith.constant dense<0.000000e+00> : vector<24x8xf32>
    %118 = tpu.matmul %117, %103, %cst_42 {dimension_numbers = #tpu.dot_dimension_numbers<[1], [0], [0], [1], [0, 0, 1, 1], [], []>} : vector<24x24xbf16>, vector<24x8xbf16>, vector<24x8xf32> -> vector<24x8xf32>
    %119 = vector.broadcast %116 : vector<24x1xf32> to vector<24x8xf32>
    %120 = arith.mulf %118, %119 : vector<24x8xf32>
    %121 = arith.truncf %120 : vector<24x8xf32> to vector<24x8xbf16>
    %c0_43 = arith.constant 0 : index
    %c24 = arith.constant 24 : index
    %122 = vector.load %arg9[%c0_43, %c24] : memref<24x32xbf16, #tpu.memory_space<vmem>>, vector<24x8xbf16>
    tpu.vector_store %arg9[%c0_43, %c24], %121 {strides = array<i32>} : memref<24x32xbf16, #tpu.memory_space<vmem>>, vector<24x8xbf16>,
    %c0_44 = arith.constant 0 : index
    %c0_45 = arith.constant 0 : index
    %123 = vector.load %arg9[%c0_44, %c0_45] : memref<24x32xbf16, #tpu.memory_space<vmem>>, vector<24x32xbf16>
    %c0_46 = arith.constant 0 : index
    %c0_47 = arith.constant 0 : index
    %124 = vector.load %arg6[%c0_46, %c0_47] : memref<32x32xbf16, #tpu.memory_space<vmem>>, vector<32x32xbf16>
    %cst_48 = arith.constant dense<0.000000e+00> : vector<24x32xf32>
    %125 = tpu.matmul %123, %124, %cst_48 {dimension_numbers = #tpu.dot_dimension_numbers<[1], [0], [0], [1], [0, 0, 1, 1], [], []>} : vector<24x32xbf16>, vector<32x32xbf16>, vector<24x32xf32> -> vector<24x32xf32>
    %c0_49 = arith.constant 0 : index
    %c0_50 = arith.constant 0 : index
    %126 = vector.load %arg7[%c0_49, %c0_50] : memref<1x32xf32, #tpu.memory_space<vmem>>, vector<1x32xf32>
    %127 = vector.broadcast %126 : vector<1x32xf32> to vector<24x32xf32>
    %128 = arith.addf %125, %127 : vector<24x32xf32>
    %129 = arith.addf %128, %2 : vector<24x32xf32>
    %130 = arith.truncf %129 : vector<24x32xf32> to vector<24x32xbf16>
    %c0_51 = arith.constant 0 : index
    %c0_52 = arith.constant 0 : index
    %c0_53 = arith.constant 0 : index
    %131 = vector.load %arg8[%c0_51, %c0_52, %c0_53] : memref<1x24x32xbf16, #tpu.memory_space<vmem>>, vector<1x24x32xbf16>
    %132 = vector.shape_cast %131 : vector<1x24x32xbf16> to vector<24x32xbf16>
    %133 = vector.shape_cast %130 : vector<24x32xbf16> to vector<1x24x32xbf16>
    tpu.vector_store %arg8[%c0_51, %c0_52, %c0_53], %133 {strides = array<i32>} : memref<1x24x32xbf16, #tpu.memory_space<vmem>>, vector<1x24x32xbf16>,
    return
  }
  func.func @transform_0(%arg0: i32) -> (i32, i32, i32) {
    %c0_i32 = arith.constant 0 : i32
    %c0_i32_0 = arith.constant 0 : i32
    %c0_i32_1 = arith.constant 0 : i32
    return %arg0, %c0_i32, %c0_i32_0 : i32, i32, i32
  }
  func.func @transform_1(%arg0: i32) -> (i32, i32) {
    %c0_i32 = arith.constant 0 : i32
    %c0_i32_0 = arith.constant 0 : i32
    %c0_i32_1 = arith.constant 0 : i32
    return %c0_i32, %c0_i32_0 : i32, i32
  }
  func.func @transform_2(%arg0: i32) -> (i32, i32) {
    %c0_i32 = arith.constant 0 : i32
    %c0_i32_0 = arith.constant 0 : i32
    %c0_i32_1 = arith.constant 0 : i32
    return %c0_i32, %c0_i32_0 : i32, i32
  }
  func.func @transform_3(%arg0: i32) -> (i32, i32) {
    %c0_i32 = arith.constant 0 : i32
    %c0_i32_0 = arith.constant 0 : i32
    %c0_i32_1 = arith.constant 0 : i32
    return %c0_i32, %c0_i32_0 : i32, i32
  }
  func.func @transform_4(%arg0: i32) -> (i32, i32) {
    %c0_i32 = arith.constant 0 : i32
    %c0_i32_0 = arith.constant 0 : i32
    %c0_i32_1 = arith.constant 0 : i32
    return %c0_i32, %c0_i32_0 : i32, i32
  }
  func.func @transform_5(%arg0: i32) -> (i32, i32) {
    %c0_i32 = arith.constant 0 : i32
    %c0_i32_0 = arith.constant 0 : i32
    %c0_i32_1 = arith.constant 0 : i32
    return %c0_i32, %c0_i32_0 : i32, i32
  }
  func.func @transform_6(%arg0: i32) -> (i32, i32) {
    %c0_i32 = arith.constant 0 : i32
    %c0_i32_0 = arith.constant 0 : i32
    %c0_i32_1 = arith.constant 0 : i32
    return %c0_i32, %c0_i32_0 : i32, i32
  }
  func.func @transform_7(%arg0: i32) -> (i32, i32, i32) {
    %c0_i32 = arith.constant 0 : i32
    %c0_i32_0 = arith.constant 0 : i32
    %c0_i32_1 = arith.constant 0 : i32
    return %arg0, %c0_i32, %c0_i32_0 : i32, i32, i32
  }
}

module attributes {stable_mosaic.version = 11 : i64} {
  func.func @_mlp_block_kernel(%arg0: i32, %arg1: memref<24x32xbf16, #tpu.memory_space<vmem>>, %arg2: memref<1x32xf32, #tpu.memory_space<vmem>>, %arg3: memref<1x32xf32, #tpu.memory_space<vmem>>, %arg4: memref<32x128xbf16, #tpu.memory_space<vmem>>, %arg5: memref<1x128xf32, #tpu.memory_space<vmem>>, %arg6: memref<128x32xbf16, #tpu.memory_space<vmem>>, %arg7: memref<1x32xf32, #tpu.memory_space<vmem>>, %arg8: memref<24x32xbf16, #tpu.memory_space<vmem>>) attributes {dimension_semantics = [#tpu.dimension_semantics<parallel>], iteration_bounds = array<i64: 2>, scalar_prefetch = 0 : i64, scratch_operands = 0 : i64, tpu.core_type = #tpu.core_type<tc>, window_params = [{transform_indices = @transform_0, window_bounds = array<i64: 24, 32>}, {pipeline_mode = #tpu.pipeline_mode<synchronous>, transform_indices = @transform_1, window_bounds = array<i64: 1, 32>}, {pipeline_mode = #tpu.pipeline_mode<synchronous>, transform_indices = @transform_2, window_bounds = array<i64: 1, 32>}, {pipeline_mode = #tpu.pipeline_mode<synchronous>, transform_indices = @transform_3, window_bounds = array<i64: 32, 128>}, {pipeline_mode = #tpu.pipeline_mode<synchronous>, transform_indices = @transform_4, window_bounds = array<i64: 1, 128>}, {pipeline_mode = #tpu.pipeline_mode<synchronous>, transform_indices = @transform_5, window_bounds = array<i64: 128, 32>}, {pipeline_mode = #tpu.pipeline_mode<synchronous>, transform_indices = @transform_6, window_bounds = array<i64: 1, 32>}, {transform_indices = @transform_7, window_bounds = array<i64: 24, 32>}]} {
    %c0 = arith.constant 0 : index
    %c0_0 = arith.constant 0 : index
    %0 = vector.load %arg1[%c0, %c0_0] : memref<24x32xbf16, #tpu.memory_space<vmem>>, vector<24x32xbf16>
    %1 = arith.extf %0 : vector<24x32xbf16> to vector<24x32xf32>
    %c0_1 = arith.constant 0 : index
    %c0_2 = arith.constant 0 : index
    %2 = vector.load %arg2[%c0_1, %c0_2] : memref<1x32xf32, #tpu.memory_space<vmem>>, vector<1x32xf32>
    %c0_3 = arith.constant 0 : index
    %c0_4 = arith.constant 0 : index
    %3 = vector.load %arg3[%c0_3, %c0_4] : memref<1x32xf32, #tpu.memory_space<vmem>>, vector<1x32xf32>
    %cst = arith.constant dense<0.000000e+00> : vector<24xf32>
    %4 = vector.multi_reduction <add>, %1, %cst [1] : vector<24x32xf32> to vector<24xf32>
    %5 = vector.shape_cast %4 : vector<24xf32> to vector<24x1xf32>
    %cst_5 = arith.constant 3.200000e+01 : f32
    %6 = vector.broadcast %cst_5 : f32 to vector<24x1xf32>
    %7 = arith.divf %5, %6 : vector<24x1xf32>
    %8 = vector.broadcast %7 : vector<24x1xf32> to vector<24x32xf32>
    %9 = arith.subf %1, %8 : vector<24x32xf32>
    %10 = arith.mulf %9, %9 : vector<24x32xf32>
    %cst_6 = arith.constant dense<0.000000e+00> : vector<24xf32>
    %11 = vector.multi_reduction <add>, %10, %cst_6 [1] : vector<24x32xf32> to vector<24xf32>
    %12 = vector.shape_cast %11 : vector<24xf32> to vector<24x1xf32>
    %cst_7 = arith.constant 3.200000e+01 : f32
    %13 = vector.broadcast %cst_7 : f32 to vector<24x1xf32>
    %14 = arith.divf %12, %13 : vector<24x1xf32>
    %cst_8 = arith.constant 9.99999974E-6 : f32
    %15 = vector.broadcast %cst_8 : f32 to vector<24x1xf32>
    %16 = arith.addf %14, %15 : vector<24x1xf32>
    %17 = math.rsqrt %16 : vector<24x1xf32>
    %18 = vector.broadcast %17 : vector<24x1xf32> to vector<24x32xf32>
    %19 = arith.mulf %9, %18 : vector<24x32xf32>
    %20 = vector.broadcast %2 : vector<1x32xf32> to vector<24x32xf32>
    %21 = arith.mulf %19, %20 : vector<24x32xf32>
    %22 = vector.broadcast %3 : vector<1x32xf32> to vector<24x32xf32>
    %23 = arith.addf %21, %22 : vector<24x32xf32>
    %24 = arith.truncf %23 : vector<24x32xf32> to vector<24x32xbf16>
    %c0_9 = arith.constant 0 : index
    %c0_10 = arith.constant 0 : index
    %25 = vector.load %arg4[%c0_9, %c0_10] : memref<32x128xbf16, #tpu.memory_space<vmem>>, vector<32x128xbf16>
    %cst_11 = arith.constant dense<0.000000e+00> : vector<24x128xf32>
    %26 = tpu.matmul %24, %25, %cst_11 {dimension_numbers = #tpu.dot_dimension_numbers<[1], [0], [0], [1], [0, 0, 1, 1], [], []>} : vector<24x32xbf16>, vector<32x128xbf16>, vector<24x128xf32> -> vector<24x128xf32>
    %c0_12 = arith.constant 0 : index
    %c0_13 = arith.constant 0 : index
    %27 = vector.load %arg5[%c0_12, %c0_13] : memref<1x128xf32, #tpu.memory_space<vmem>>, vector<1x128xf32>
    %28 = vector.broadcast %27 : vector<1x128xf32> to vector<24x128xf32>
    %29 = arith.addf %26, %28 : vector<24x128xf32>
    %cst_14 = arith.constant 5.000000e-01 : f32
    %30 = vector.broadcast %cst_14 : f32 to vector<24x128xf32>
    %31 = arith.mulf %30, %29 : vector<24x128xf32>
    %cst_15 = arith.constant 4.471500e-02 : f32
    %32 = vector.broadcast %cst_15 : f32 to vector<24x128xf32>
    %33 = arith.mulf %32, %29 : vector<24x128xf32>
    %34 = arith.mulf %33, %29 : vector<24x128xf32>
    %35 = arith.mulf %34, %29 : vector<24x128xf32>
    %36 = arith.addf %29, %35 : vector<24x128xf32>
    %cst_16 = arith.constant 0.797884583 : f32
    %37 = vector.broadcast %cst_16 : f32 to vector<24x128xf32>
    %38 = arith.mulf %37, %36 : vector<24x128xf32>
    %39 = math.tanh %38 : vector<24x128xf32>
    %cst_17 = arith.constant 1.000000e+00 : f32
    %40 = vector.broadcast %cst_17 : f32 to vector<24x128xf32>
    %41 = arith.addf %40, %39 : vector<24x128xf32>
    %42 = arith.mulf %31, %41 : vector<24x128xf32>
    %43 = arith.truncf %42 : vector<24x128xf32> to vector<24x128xbf16>
    %c0_18 = arith.constant 0 : index
    %c0_19 = arith.constant 0 : index
    %44 = vector.load %arg6[%c0_18, %c0_19] : memref<128x32xbf16, #tpu.memory_space<vmem>>, vector<128x32xbf16>
    %cst_20 = arith.constant dense<0.000000e+00> : vector<24x32xf32>
    %45 = tpu.matmul %43, %44, %cst_20 {dimension_numbers = #tpu.dot_dimension_numbers<[1], [0], [0], [1], [0, 0, 1, 1], [], []>} : vector<24x128xbf16>, vector<128x32xbf16>, vector<24x32xf32> -> vector<24x32xf32>
    %c0_21 = arith.constant 0 : index
    %c0_22 = arith.constant 0 : index
    %46 = vector.load %arg7[%c0_21, %c0_22] : memref<1x32xf32, #tpu.memory_space<vmem>>, vector<1x32xf32>
    %47 = vector.broadcast %46 : vector<1x32xf32> to vector<24x32xf32>
    %48 = arith.addf %45, %47 : vector<24x32xf32>
    %49 = arith.addf %48, %1 : vector<24x32xf32>
    %50 = arith.truncf %49 : vector<24x32xf32> to vector<24x32xbf16>
    %c0_23 = arith.constant 0 : index
    %c0_24 = arith.constant 0 : index
    %51 = vector.load %arg8[%c0_23, %c0_24] : memref<24x32xbf16, #tpu.memory_space<vmem>>, vector<24x32xbf16>
    tpu.vector_store %arg8[%c0_23, %c0_24], %50 {strides = array<i32>} : memref<24x32xbf16, #tpu.memory_space<vmem>>, vector<24x32xbf16>,
    return
  }
  func.func @transform_0(%arg0: i32) -> (i32, i32) {
    %c0_i32 = arith.constant 0 : i32
    %c0_i32_0 = arith.constant 0 : i32
    return %arg0, %c0_i32 : i32, i32
  }
  func.func @transform_1(%arg0: i32) -> (i32, i32) {
    %c0_i32 = arith.constant 0 : i32
    %c0_i32_0 = arith.constant 0 : i32
    %c0_i32_1 = arith.constant 0 : i32
    return %c0_i32, %c0_i32_0 : i32, i32
  }
  func.func @transform_2(%arg0: i32) -> (i32, i32) {
    %c0_i32 = arith.constant 0 : i32
    %c0_i32_0 = arith.constant 0 : i32
    %c0_i32_1 = arith.constant 0 : i32
    return %c0_i32, %c0_i32_0 : i32, i32
  }
  func.func @transform_3(%arg0: i32) -> (i32, i32) {
    %c0_i32 = arith.constant 0 : i32
    %c0_i32_0 = arith.constant 0 : i32
    %c0_i32_1 = arith.constant 0 : i32
    return %c0_i32, %c0_i32_0 : i32, i32
  }
  func.func @transform_4(%arg0: i32) -> (i32, i32) {
    %c0_i32 = arith.constant 0 : i32
    %c0_i32_0 = arith.constant 0 : i32
    %c0_i32_1 = arith.constant 0 : i32
    return %c0_i32, %c0_i32_0 : i32, i32
  }
  func.func @transform_5(%arg0: i32) -> (i32, i32) {
    %c0_i32 = arith.constant 0 : i32
    %c0_i32_0 = arith.constant 0 : i32
    %c0_i32_1 = arith.constant 0 : i32
    return %c0_i32, %c0_i32_0 : i32, i32
  }
  func.func @transform_6(%arg0: i32) -> (i32, i32) {
    %c0_i32 = arith.constant 0 : i32
    %c0_i32_0 = arith.constant 0 : i32
    %c0_i32_1 = arith.constant 0 : i32
    return %c0_i32, %c0_i32_0 : i32, i32
  }
  func.func @transform_7(%arg0: i32) -> (i32, i32) {
    %c0_i32 = arith.constant 0 : i32
    %c0_i32_0 = arith.constant 0 : i32
    return %arg0, %c0_i32 : i32, i32
  }
}

module attributes {stable_mosaic.version = 11 : i64} {
  func.func @_head_kernel(%arg0: i32, %arg1: memref<8x32xbf16, #tpu.memory_space<vmem>>, %arg2: memref<1x32xf32, #tpu.memory_space<vmem>>, %arg3: memref<1x32xf32, #tpu.memory_space<vmem>>, %arg4: memref<32x128xbf16, #tpu.memory_space<vmem>>, %arg5: memref<1x128xf32, #tpu.memory_space<vmem>>, %arg6: memref<8x128xf32, #tpu.memory_space<vmem>>) attributes {dimension_semantics = [#tpu.dimension_semantics<parallel>], iteration_bounds = array<i64: 2>, scalar_prefetch = 0 : i64, scratch_operands = 0 : i64, tpu.core_type = #tpu.core_type<tc>, window_params = [{transform_indices = @transform_0, window_bounds = array<i64: 8, 32>}, {pipeline_mode = #tpu.pipeline_mode<synchronous>, transform_indices = @transform_1, window_bounds = array<i64: 1, 32>}, {pipeline_mode = #tpu.pipeline_mode<synchronous>, transform_indices = @transform_2, window_bounds = array<i64: 1, 32>}, {pipeline_mode = #tpu.pipeline_mode<synchronous>, transform_indices = @transform_3, window_bounds = array<i64: 32, 128>}, {pipeline_mode = #tpu.pipeline_mode<synchronous>, transform_indices = @transform_4, window_bounds = array<i64: 1, 128>}, {transform_indices = @transform_5, window_bounds = array<i64: 8, 128>}]} {
    %c0 = arith.constant 0 : index
    %c0_0 = arith.constant 0 : index
    %0 = vector.load %arg1[%c0, %c0_0] : memref<8x32xbf16, #tpu.memory_space<vmem>>, vector<8x32xbf16>
    %1 = arith.extf %0 : vector<8x32xbf16> to vector<8x32xf32>
    %c0_1 = arith.constant 0 : index
    %c0_2 = arith.constant 0 : index
    %2 = vector.load %arg2[%c0_1, %c0_2] : memref<1x32xf32, #tpu.memory_space<vmem>>, vector<1x32xf32>
    %c0_3 = arith.constant 0 : index
    %c0_4 = arith.constant 0 : index
    %3 = vector.load %arg3[%c0_3, %c0_4] : memref<1x32xf32, #tpu.memory_space<vmem>>, vector<1x32xf32>
    %cst = arith.constant dense<0.000000e+00> : vector<8xf32>
    %4 = vector.multi_reduction <add>, %1, %cst [1] : vector<8x32xf32> to vector<8xf32>
    %5 = vector.shape_cast %4 : vector<8xf32> to vector<8x1xf32>
    %cst_5 = arith.constant 3.200000e+01 : f32
    %6 = vector.broadcast %cst_5 : f32 to vector<8x1xf32>
    %7 = arith.divf %5, %6 : vector<8x1xf32>
    %8 = vector.broadcast %7 : vector<8x1xf32> to vector<8x32xf32>
    %9 = arith.subf %1, %8 : vector<8x32xf32>
    %10 = arith.mulf %9, %9 : vector<8x32xf32>
    %cst_6 = arith.constant dense<0.000000e+00> : vector<8xf32>
    %11 = vector.multi_reduction <add>, %10, %cst_6 [1] : vector<8x32xf32> to vector<8xf32>
    %12 = vector.shape_cast %11 : vector<8xf32> to vector<8x1xf32>
    %cst_7 = arith.constant 3.200000e+01 : f32
    %13 = vector.broadcast %cst_7 : f32 to vector<8x1xf32>
    %14 = arith.divf %12, %13 : vector<8x1xf32>
    %cst_8 = arith.constant 9.99999974E-6 : f32
    %15 = vector.broadcast %cst_8 : f32 to vector<8x1xf32>
    %16 = arith.addf %14, %15 : vector<8x1xf32>
    %17 = math.rsqrt %16 : vector<8x1xf32>
    %18 = vector.broadcast %17 : vector<8x1xf32> to vector<8x32xf32>
    %19 = arith.mulf %9, %18 : vector<8x32xf32>
    %20 = vector.broadcast %2 : vector<1x32xf32> to vector<8x32xf32>
    %21 = arith.mulf %19, %20 : vector<8x32xf32>
    %22 = vector.broadcast %3 : vector<1x32xf32> to vector<8x32xf32>
    %23 = arith.addf %21, %22 : vector<8x32xf32>
    %24 = arith.truncf %23 : vector<8x32xf32> to vector<8x32xbf16>
    %c0_9 = arith.constant 0 : index
    %c0_10 = arith.constant 0 : index
    %25 = vector.load %arg4[%c0_9, %c0_10] : memref<32x128xbf16, #tpu.memory_space<vmem>>, vector<32x128xbf16>
    %cst_11 = arith.constant dense<0.000000e+00> : vector<8x128xf32>
    %26 = tpu.matmul %24, %25, %cst_11 {dimension_numbers = #tpu.dot_dimension_numbers<[1], [0], [0], [1], [0, 0, 1, 1], [], []>} : vector<8x32xbf16>, vector<32x128xbf16>, vector<8x128xf32> -> vector<8x128xf32>
    %c0_12 = arith.constant 0 : index
    %c0_13 = arith.constant 0 : index
    %27 = vector.load %arg5[%c0_12, %c0_13] : memref<1x128xf32, #tpu.memory_space<vmem>>, vector<1x128xf32>
    %28 = vector.broadcast %27 : vector<1x128xf32> to vector<8x128xf32>
    %29 = arith.addf %26, %28 : vector<8x128xf32>
    %30 = math.tanh %29 : vector<8x128xf32>
    %c0_14 = arith.constant 0 : index
    %c0_15 = arith.constant 0 : index
    %31 = vector.load %arg6[%c0_14, %c0_15] : memref<8x128xf32, #tpu.memory_space<vmem>>, vector<8x128xf32>
    tpu.vector_store %arg6[%c0_14, %c0_15], %30 {strides = array<i32>} : memref<8x128xf32, #tpu.memory_space<vmem>>, vector<8x128xf32>,
    return
  }
  func.func @transform_0(%arg0: i32) -> (i32, i32) {
    %c0_i32 = arith.constant 0 : i32
    %c0_i32_0 = arith.constant 0 : i32
    return %arg0, %c0_i32 : i32, i32
  }
  func.func @transform_1(%arg0: i32) -> (i32, i32) {
    %c0_i32 = arith.constant 0 : i32
    %c0_i32_0 = arith.constant 0 : i32
    %c0_i32_1 = arith.constant 0 : i32
    return %c0_i32, %c0_i32_0 : i32, i32
  }
  func.func @transform_2(%arg0: i32) -> (i32, i32) {
    %c0_i32 = arith.constant 0 : i32
    %c0_i32_0 = arith.constant 0 : i32
    %c0_i32_1 = arith.constant 0 : i32
    return %c0_i32, %c0_i32_0 : i32, i32
  }
  func.func @transform_3(%arg0: i32) -> (i32, i32) {
    %c0_i32 = arith.constant 0 : i32
    %c0_i32_0 = arith.constant 0 : i32
    %c0_i32_1 = arith.constant 0 : i32
    return %c0_i32, %c0_i32_0 : i32, i32
  }
  func.func @transform_4(%arg0: i32) -> (i32, i32) {
    %c0_i32 = arith.constant 0 : i32
    %c0_i32_0 = arith.constant 0 : i32
    %c0_i32_1 = arith.constant 0 : i32
    return %c0_i32, %c0_i32_0 : i32, i32
  }
  func.func @transform_5(%arg0: i32) -> (i32, i32) {
    %c0_i32 = arith.constant 0 : i32
    %c0_i32_0 = arith.constant 0 : i32
    return %arg0, %c0_i32 : i32, i32
  }
}

</mosaic_0001>

<llo_original>
// kernel: low_level_transformer_forward.8
$region0: #{low_level_transformer_forward.8}
  #allocation0 [shape = 'u32[]', space=smem, size = 0x4, offset = 0x4, fixed_abs, tag = 'smem constant byte address 0x4 - core index']
  #allocation1 [shape = 'u32[144,128]{1,0:T(1,128)}', space=vmem, size = 0x12000, scoped, tag = 'internal scratch']
  %s0 = inlined_call_operand.vmem [shape: bf16[48,32], index: 0, kind: input, shape index: {}]
  %s1 = inlined_call_operand.vmem [shape: f32[1,32], index: 1, kind: input, shape index: {}]
  %s2 = inlined_call_operand.vmem [shape: f32[1,32], index: 2, kind: input, shape index: {}]
  %s3 = inlined_call_operand.vmem [shape: bf16[32,128], index: 3, kind: input, shape index: {}]
  %s4 = inlined_call_operand.vmem [shape: f32[1,128], index: 4, kind: input, shape index: {}]
  %s5 = inlined_call_operand.vmem [shape: bf16[128,32], index: 5, kind: input, shape index: {}]
  %s6 = inlined_call_operand.vmem [shape: f32[1,32], index: 6, kind: input, shape index: {}]
  %s7 = inlined_call_operand.vmem [shape: bf16[48,32], index: 7, kind: output, shape index: {}]
  %s8 = sld [smem:[#allocation0]]
  $region61: #{low_level_transformer_forward.8} parent=0
    _
  %s10 = ssub.s32 1, %s8
  %s11 = scalar_select 0, %s10, %s8
  loop: start=0, step=1, limit=4
  $region2: #{low_level_transformer_forward.8} parent=0 // loop_pre_header
    _
  $region3: #{low_level_transformer_forward.8} parent=0 // loop_header
    %s13 = sphi 0, %s17
    %p14 = scmp.ge.s32.totalorder %s13, 4
    %s23 = sphi 0, %s25
    %s26 = sphi 0, %s23
    %s27 = sphi 0, %s26
    %s43 = sphi 0, %s27
    %s47 = sphi 0, %s47
    %s49 = sphi 0, %s47
    %s50 = sphi 0, %s49
    %s64 = sphi 0, %s50
    %s68 = sphi 0, %s68
    %s70 = sphi 0, %s68
    %s71 = sphi 0, %s70
    %s85 = sphi 0, %s71
    %s89 = sphi 0, %s89
    %s91 = sphi 0, %s89
    %s92 = sphi 0, %s91
    %s106 = sphi 0, %s92
    %s110 = sphi 0, %s110
    %s112 = sphi 0, %s110
    %s113 = sphi 0, %s112
    %s127 = sphi 0, %s113
    %s131 = sphi 0, %s131
    %s133 = sphi 0, %s131
    %s134 = sphi 0, %s133
    %s148 = sphi 0, %s134
    %s152 = sphi 0, %s152
    %s154 = sphi 0, %s152
    %s155 = sphi 0, %s154
    %s169 = sphi 0, %s155
    %s175 = sphi 0, %s177
    %s178 = sphi 0, %s175
    %s179 = sphi 0, %s178
    %s195 = sphi 0, %s179
  $region4: #{low_level_transformer_forward.8} parent=0 // loop_header_branch
    %16 = sbr.rel (%p14) target = $region8
  $region5: #{low_level_transformer_forward.8} parent=0 // loop_body
    %s18 = ssub.s32 %s13, 1
    %s19 = ssub.s32 %s13, 2
    %s20 = sadd.s32 %s13, 1
    %s21 = ssub.s32 %s13, %s20
    %p22 = scmp.eq.s32.totalorder %s21, 0
    %s24 = sadd.s32 %s23, 1
    %s25 = scalar_select %p22, %s23, %s24
    %p28 = pneg %p22
    %p29 = scmp.eq.s32.totalorder %s13, 1
    %p30 = por %p28, %p29
    %p31 = scmp.ne.s32.totalorder %s23, %s26
    %p32 = scmp.eq.s32.totalorder %s13, 0
    %p33 = por %p31, %p32
    %p34 = scmp.ne.s32.totalorder %s23, %s26
    %p35 = scmp.eq.s32.totalorder %s18, 1
    %p36 = por %p34, %p35
    %p37 = scmp.ne.s32.totalorder %s26, %s27
    %p38 = scmp.eq.s32.totalorder %s18, 0
    %p39 = por %p37, %p38
    %p40 = scmp.ne.s32.totalorder %s26, %s27
    %p41 = scmp.eq.s32.totalorder %s19, 1
    %p42 = por %p40, %p41
    %p44 = scmp.ne.s32.totalorder %s27, %s43
    %p45 = scmp.eq.s32.totalorder %s19, 0
    %p46 = por %p44, %p45
    %s48 = sadd.s32 %s47, 1
    %p51 = scmp.eq.s32.totalorder %s13, 1
    %p52 = scmp.ne.s32.totalorder %s47, %s49
    %p53 = scmp.eq.s32.totalorder %s13, 0
    %p54 = por %p52, %p53
    %p55 = scmp.ne.s32.totalorder %s47, %s49
    %p56 = scmp.eq.s32.totalorder %s18, 1
    %p57 = por %p55, %p56
    %p58 = scmp.ne.s32.totalorder %s49, %s50
    %p59 = scmp.eq.s32.totalorder %s18, 0
    %p60 = por %p58, %p59
    %p61 = scmp.ne.s32.totalorder %s49, %s50
    %p62 = scmp.eq.s32.totalorder %s19, 1
    %p63 = por %p61, %p62
    %p65 = scmp.ne.s32.totalorder %s50, %s64
    %p66 = scmp.eq.s32.totalorder %s19, 0
    %p67 = por %p65, %p66
    %s69 = sadd.s32 %s68, 1
    %p72 = scmp.eq.s32.totalorder %s13, 1
    %p73 = scmp.ne.s32.totalorder %s68, %s70
    %p74 = scmp.eq.s32.totalorder %s13, 0
    %p75 = por %p73, %p74
    %p76 = scmp.ne.s32.totalorder %s68, %s70
    %p77 = scmp.eq.s32.totalorder %s18, 1
    %p78 = por %p76, %p77
    %p79 = scmp.ne.s32.totalorder %s70, %s71
    %p80 = scmp.eq.s32.totalorder %s18, 0
    %p81 = por %p79, %p80
    %p82 = scmp.ne.s32.totalorder %s70, %s71
    %p83 = scmp.eq.s32.totalorder %s19, 1
    %p84 = por %p82, %p83
    %p86 = scmp.ne.s32.totalorder %s71, %s85
    %p87 = scmp.eq.s32.totalorder %s19, 0
    %p88 = por %p86, %p87
    %s90 = sadd.s32 %s89, 1
    %p93 = scmp.eq.s32.totalorder %s13, 1
    %p94 = scmp.ne.s32.totalorder %s89, %s91
    %p95 = scmp.eq.s32.totalorder %s13, 0
    %p96 = por %p94, %p95
    %p97 = scmp.ne.s32.totalorder %s89, %s91
    %p98 = scmp.eq.s32.totalorder %s18, 1
    %p99 = por %p97, %p98
    %p100 = scmp.ne.s32.totalorder %s91, %s92
    %p101 = scmp.eq.s32.totalorder %s18, 0
    %p102 = por %p100, %p101
    %p103 = scmp.ne.s32.totalorder %s91, %s92
    %p104 = scmp.eq.s32.totalorder %s19, 1
    %p105 = por %p103, %p104
    %p107 = scmp.ne.s32.totalorder %s92, %s106
    %p108 = scmp.eq.s32.totalorder %s19, 0
    %p109 = por %p107, %p108
    %s111 = sadd.s32 %s110, 1
    %p114 = scmp.eq.s32.totalorder %s13, 1
    %p115 = scmp.ne.s32.totalorder %s110, %s112
    %p116 = scmp.eq.s32.totalorder %s13, 0
    %p117 = por %p115, %p116
    %p118 = scmp.ne.s32.totalorder %s110, %s112
    %p119 = scmp.eq.s32.totalorder %s18, 1
    %p120 = por %p118, %p119
    %p121 = scmp.ne.s32.totalorder %s112, %s113
    %p122 = scmp.eq.s32.totalorder %s18, 0
    %p123 = por %p121, %p122
    %p124 = scmp.ne.s32.totalorder %s112, %s113
    %p125 = scmp.eq.s32.totalorder %s19, 1
    %p126 = por %p124, %p125
    %p128 = scmp.ne.s32.totalorder %s113, %s127
    %p129 = scmp.eq.s32.totalorder %s19, 0
    %p130 = por %p128, %p129
    %s132 = sadd.s32 %s131, 1
    %p135 = scmp.eq.s32.totalorder %s13, 1
    %p136 = scmp.ne.s32.totalorder %s131, %s133
    %p137 = scmp.eq.s32.totalorder %s13, 0
    %p138 = por %p136, %p137
    %p139 = scmp.ne.s32.totalorder %s131, %s133
    %p140 = scmp.eq.s32.totalorder %s18, 1
    %p141 = por %p139, %p140
    %p142 = scmp.ne.s32.totalorder %s133, %s134
    %p143 = scmp.eq.s32.totalorder %s18, 0
    %p144 = por %p142, %p143
    %p145 = scmp.ne.s32.totalorder %s133, %s134
    %p146 = scmp.eq.s32.totalorder %s19, 1
    %p147 = por %p145, %p146
    %p149 = scmp.ne.s32.totalorder %s134, %s148
    %p150 = scmp.eq.s32.totalorder %s19, 0
    %p151 = por %p149, %p150
    %s153 = sadd.s32 %s152, 1
    %p156 = scmp.eq.s32.totalorder %s13, 1
    %p157 = scmp.ne.s32.totalorder %s152, %s154
    %p158 = scmp.eq.s32.totalorder %s13, 0
    %p159 = por %p157, %p158
    %p160 = scmp.ne.s32.totalorder %s152, %s154
    %p161 = scmp.eq.s32.totalorder %s18, 1
    %p162 = por %p160, %p161
    %p163 = scmp.ne.s32.totalorder %s154, %s155
    %p164 = scmp.eq.s32.totalorder %s18, 0
    %p165 = por %p163, %p164
    %p166 = scmp.ne.s32.totalorder %s154, %s155
    %p167 = scmp.eq.s32.totalorder %s19, 1
    %p168 = por %p166, %p167
    %p170 = scmp.ne.s32.totalorder %s155, %s169
    %p171 = scmp.eq.s32.totalorder %s19, 0
    %p172 = por %p170, %p171
    %s173 = ssub.s32 %s13, %s20
    %p174 = scmp.eq.s32.totalorder %s173, 0
    %s176 = sadd.s32 %s175, 1
    %s177 = scalar_select %p174, %s175, %s176
    %p180 = pneg %p174
    %p181 = scmp.eq.s32.totalorder %s13, 1
    %p182 = por %p180, %p181
    %p183 = scmp.ne.s32.totalorder %s175, %s178
    %p184 = scmp.eq.s32.totalorder %s13, 0
    %p185 = por %p183, %p184
    %p186 = scmp.ne.s32.totalorder %s175, %s178
    %p187 = scmp.eq.s32.totalorder %s18, 1
    %p188 = por %p186, %p187
    %p189 = scmp.ne.s32.totalorder %s178, %s179
    %p190 = scmp.eq.s32.totalorder %s18, 0
    %p191 = por %p189, %p190
    %p192 = scmp.ne.s32.totalorder %s178, %s179
    %p193 = scmp.eq.s32.totalorder %s19, 1
    %p194 = por %p192, %p193
    %p196 = scmp.ne.s32.totalorder %s179, %s195
    %p197 = scmp.eq.s32.totalorder %s19, 0
    %p198 = por %p196, %p197
    %p199 = scmp.le.s32.totalorder 1, %s13
    %p200 = scmp.lt.s32.totalorder %s13, 3
    %p201 = pnand %p199, %p200
    %p202 = pneg %p201
    // Predicated region
    $region9: #{low_level_transformer_forward.8} parent=5 // pred_check
      _
    $region10: #{low_level_transformer_forward.8} parent=5 // pred_check_branch
      %204 = sbr.rel (%p201) target = $region12
    $region11: #{low_level_transformer_forward.8} parent=5 // pred_region
      %s205 = ssub.s32 %s13, 1
      // Predicated region
      $region13: #{low_level_transformer_forward.8} parent=11 // pred_check
        %p206 = pneg %p60
      $region14: #{low_level_transformer_forward.8} parent=11 // pred_check_branch
        %208 = sbr.rel (%p206) target = $region16
      $region15: #{low_level_transformer_forward.8} parent=11 // pred_region
        _
      $region16: #{low_level_transformer_forward.8} parent=11 // pred_fallthru
        _
      // Predicated region
      $region17: #{low_level_transformer_forward.8} parent=11 // pred_check
        %p209 = pneg %p81
      $region18: #{low_level_transformer_forward.8} parent=11 // pred_check_branch
        %211 = sbr.rel (%p209) target = $region20
      $region19: #{low_level_transformer_forward.8} parent=11 // pred_region
        _
      $region20: #{low_level_transformer_forward.8} parent=11 // pred_fallthru
        _
      // Predicated region
      $region21: #{low_level_transformer_forward.8} parent=11 // pred_check
        %p212 = pneg %p102
      $region22: #{low_level_transformer_forward.8} parent=11 // pred_check_branch
        %214 = sbr.rel (%p212) target = $region24
      $region23: #{low_level_transformer_forward.8} parent=11 // pred_region
        _
      $region24: #{low_level_transformer_forward.8} parent=11 // pred_fallthru
        _
      // Predicated region
      $region25: #{low_level_transformer_forward.8} parent=11 // pred_check
        %p215 = pneg %p123
      $region26: #{low_level_transformer_forward.8} parent=11 // pred_check_branch
        %217 = sbr.rel (%p215) target = $region28
      $region27: #{low_level_transformer_forward.8} parent=11 // pred_region
        _
      $region28: #{low_level_transformer_forward.8} parent=11 // pred_fallthru
        _
      // Predicated region
      $region29: #{low_level_transformer_forward.8} parent=11 // pred_check
        %p218 = pneg %p144
      $region30: #{low_level_transformer_forward.8} parent=11 // pred_check_branch
        %220 = sbr.rel (%p218) target = $region32
      $region31: #{low_level_transformer_forward.8} parent=11 // pred_region
        _
      $region32: #{low_level_transformer_forward.8} parent=11 // pred_fallthru
        _
      // Predicated region
      $region33: #{low_level_transformer_forward.8} parent=11 // pred_check
        %p221 = pneg %p165
      $region34: #{low_level_transformer_forward.8} parent=11 // pred_check_branch
        %223 = sbr.rel (%p221) target = $region36
      $region35: #{low_level_transformer_forward.8} parent=11 // pred_region
        _
      $region36: #{low_level_transformer_forward.8} parent=11 // pred_fallthru
        _
    $region12: #{low_level_transformer_forward.8} parent=5 // pred_fallthru
      _
    %p224 = scmp.lt.s32.totalorder %s13, 2
    // Predicated region
    $region37: #{low_level_transformer_forward.8} parent=5 // pred_check
      %p225 = pneg %p224
    $region38: #{low_level_transformer_forward.8} parent=5 // pred_check_branch
      %227 = sbr.rel (%p225) target = $region40
    $region39: #{low_level_transformer_forward.8} parent=5 // pred_region
      // Predicated region
      $region41: #{low_level_transformer_forward.8} parent=39 // pred_check
        %p228 = pneg %p33
      $region42: #{low_level_transformer_forward.8} parent=39 // pred_check_branch
        %230 = sbr.rel (%p228) target = $region44
      $region43: #{low_level_transformer_forward.8} parent=39 // pred_region
        %s231 = smul.u32 3, %s13
        %p232 = scmp.lt.s32.totalorder %s231, 5
        %s233 = scalar_select %p232, %s231, 5
        %s234 = smul.addr %s233, 4
        %s235 = scalar_lea.vmem %s0, %s234
        %s236 = smul.u32 3, %s13
      $region44: #{low_level_transformer_forward.8} parent=39 // pred_fallthru
        _
    $region40: #{low_level_transformer_forward.8} parent=5 // pred_fallthru
      _
    %p237 = scmp.le.s32.totalorder 1, %s13
    %p238 = scmp.lt.s32.totalorder %s13, 3
    %p239 = pnand %p237, %p238
    %p240 = pneg %p239
    // Predicated region
    $region45: #{low_level_transformer_forward.8} parent=5 // pred_check
      _
    $region46: #{low_level_transformer_forward.8} parent=5 // pred_check_branch
      %242 = sbr.rel (%p239) target = $region48
    $region47: #{low_level_transformer_forward.8} parent=5 // pred_region
      %s243 = ssub.s32 %s13, 1
      %s244 = smul.u32 3, %s18
      %p245 = scmp.lt.s32.totalorder %s244, 5
      %s246 = scalar_select %p245, %s244, 5
      %s247 = smul.addr %s246, 4
      %s248 = scalar_lea.vmem %s0, %s247
      %p249 = pneg %p39
      %p250 = pneg %p36
      %p251 = pneg %p60
      %p252 = pneg %p57
      %p253 = pneg %p81
      %p254 = pneg %p78
      %p255 = pneg %p102
      %p256 = pneg %p99
      %p257 = pneg %p123
      %p258 = pneg %p120
      %p259 = pneg %p144
      %p260 = pneg %p141
      %p261 = pneg %p165
      %p262 = pneg %p162
      %p263 = pneg %p191
      %p264 = pneg %p188
      %s265 = smul.u32 3, %s18
      %p266 = scmp.lt.s32.totalorder %s265, 5
      %s267 = scalar_select %p266, %s265, 5
      %s268 = smul.addr %s267, 4
      %s269 = scalar_lea.vmem %s7, %s268
      %s270 = smul.u32 3, %s18
      %p271 = scmp.lt.s32.totalorder %s270, 5
      %s272 = scalar_select %p271, %s270, 5
      %s273 = smul.addr %s272, 4
      %s274 = scalar_lea.vmem %s0, %s273
      %s275 = smul.u32 3, %s18
      %s276 = smul.u32 3, %s18
      %p277 = scmp.lt.s32.totalorder %s276, 5
      %s278 = scalar_select %p277, %s276, 5
      %s279 = smul.addr %s278, 4
      %s280 = scalar_lea.vmem %s7, %s279
      %s281 = smul.u32 3, %s18
      %v283 = vld [vmem:[%s274] sm:$0xf]
      %v284 = vld [vmem:[%s274 + $0x4] sm:$0xf]
      %v285 = vld [vmem:[%s274 + $0x8] sm:$0xf]
      %v286 = vunpack.c.l.bf16 %v283
      %v287 = vunpack.c.l.bf16 %v284
      %v288 = vunpack.c.l.bf16 %v285
      %v289 = vld [vmem:[%s1] sm:$0x1]
      %v290 = vld [vmem:[%s2] sm:$0x1]
      %vm291 = vcmask 261120
      %v292 = vsel %vm291, %v286, 0.0
      %293 = vadd.xlane.f32.xlu0 %v292
      %v294 = vpop.xlane.xlu0 %293
      %v295 = vsel %vm291, %v287, 0.0
      %296 = vadd.xlane.f32.xlu0 %v295
      %v297 = vpop.xlane.xlu0 %296
      %v298 = vsel %vm291, %v288, 0.0
      %299 = vadd.xlane.f32.xlu0 %v298
      %v300 = vpop.xlane.xlu0 %299
      %v301 = vrcp.pop 32.0
      %v302 = vmul.f32 %v294, %v301
      %v303 = vmul.f32 %v297, %v301
      %v304 = vmul.f32 %v300, %v301
      %v305 = vsub.f32 %v286, %v302
      %v306 = vsub.f32 %v287, %v303
      %v307 = vsub.f32 %v288, %v304
      %v308 = vmul.f32 %v305, %v305
      %v309 = vmul.f32 %v306, %v306
      %v310 = vmul.f32 %v307, %v307
      %v311 = vsel %vm291, %v308, 0.0
      %312 = vadd.xlane.f32.xlu0 %v311
      %v313 = vpop.xlane.xlu0 %312
      %v314 = vsel %vm291, %v309, 0.0
      %315 = vadd.xlane.f32.xlu0 %v314
      %v316 = vpop.xlane.xlu0 %315
      %v317 = vsel %vm291, %v310, 0.0
      %318 = vadd.xlane.f32.xlu0 %v317
      %v319 = vpop.xlane.xlu0 %318
      %v320 = vmul.f32 %v313, %v301
      %v321 = vmul.f32 %v316, %v301
      %v322 = vmul.f32 %v319, %v301
      %v323 = vadd.f32 %v320, 1e-05
      %v324 = vadd.f32 %v321, 1e-05
      %v325 = vadd.f32 %v322, 1e-05
      %v326 = vrsqrt.pop %v323
      %v327 = vrsqrt.pop %v324
      %v328 = vrsqrt.pop %v325
      %v329 = vmul.f32 %v305, %v326
      %v330 = vmul.f32 %v306, %v327
      %v331 = vmul.f32 %v307, %v328
      %v333 = vlaneseq
      %v334 = vshrl.u32 %v333, 7
      %v335 = vsub.s32 0, %v334
      %v336 = vrot.slane %v289, %v335
      %v338 = vmul.f32 %v329, %v336
      %v339 = vmul.f32 %v330, %v336
      %v340 = vmul.f32 %v331, %v336
      %v342 = vlaneseq
      %v343 = vshrl.u32 %v342, 7
      %v344 = vsub.s32 0, %v343
      %v345 = vrot.slane %v290, %v344
      %v347 = vadd.f32 %v338, %v345
      %v348 = vadd.f32 %v339, %v345
      %v349 = vadd.f32 %v340, %v345
      %v350 = vpack.c.bf16 %v348, %v347
      %v351 = vpack.c.bf16 %v349, %v349
      %v352 = vld [vmem:[%s3] sm:$0xf]
      %v353 = vld [vmem:[%s3 + $0x4] sm:$0xf]
      %v354 = vld [vmem:[%s3 + $0x8] sm:$0xf]
      %v355 = vld [vmem:[%s3 + $0xc] sm:$0xf]
      %v356 = vld [vmem:[%s4] sm:$0x1]
      %v358 = vlaneseq
      %v359 = vshrl.u32 %v358, 7
      %v360 = vsub.s32 0, %v359
      %v361 = vrot.slane %v356, %v360
      %v367 = vunpack.c.l.b16 %v352
      %v368 = vunpack.c.l.b16 %v353
      %v369 = vunpack.c.l.b16 %v354
      %v370 = vunpack.c.l.b16 %v355
      %v371 = vpack.c.b16 %v368, %v367
      %v372 = vpack.c.b16 %v370, %v369
      %v376 = vsel %vm291, %v350, 0
      %v379 = vsel %vm291, %v351, 0
      %381 = vmatprep.subr.bf16.mxu0 0
      %382 = vmatpush1.bf16.msra.mxu0 0
      %383 = vmatprep.subr.bf16.mxu0 0
      %384 = vmatpush1.bf16.msra.mxu0 0
      %385 = vmatprep.subr.bf16.mxu0 0
      %386 = vmatpush1.bf16.msra.mxu0 0
      %387 = vmatprep.subr.bf16.mxu0 0
      %388 = vmatpush1.bf16.msra.mxu0 0
      %389 = vmatprep.subr.bf16.mxu0 0
      %390 = vmatpush1.bf16.msra.mxu0 0
      %391 = vmatprep.subr.bf16.mxu0 0
      %392 = vmatpush1.bf16.msra.mxu0 0
      %393 = vmatprep.subr.bf16.mxu0 0
      %394 = vmatpush1.bf16.msra.mxu0 %v372
      %395 = vmatprep.subr.bf16.mxu0 0
      %396 = vmatpush1.bf16.msra.mxu0 %v371
      %397 = vmatprep.subr.bf16.mxu0 0
      %398 = vmatpush2.bf16.msra.mxu0 0
      %399 = vmatprep.subr.bf16.mxu0 0
      %400 = vmatpush2.bf16.msra.mxu0 0
      %401 = vmatprep.subr.bf16.mxu0 0
      %402 = vmatpush2.bf16.msra.mxu0 0
      %403 = vmatprep.subr.bf16.mxu0 0
      %404 = vmatpush2.bf16.msra.mxu0 0
      %405 = vmatprep.subr.bf16.mxu0 0
      %406 = vmatpush2.bf16.msra.mxu0 0
      %407 = vmatprep.subr.bf16.mxu0 0
      %408 = vmatpush2.bf16.msra.mxu0 0
      %409 = vmatprep.subr.bf16.mxu0 0
      %410 = vmatpush2.bf16.msra.mxu0 0
      %411 = vmatprep.subr.bf16.mxu0 0
      %412 = vmatpush2.bf16.msra.mxu0 0
      %413 = vmatprep.mubr.bf16.mxu0 0
      %414 = vmatmul.mubr.bf16.gmra.mxu0 %v376
      %v415 = vpop.f32.mrf.mxu0
      %v416 = vadd.f32 %v361, %v415
      %v417 = vpop.f32.mrf.mxu0
      %v418 = vpop.f32.mrf.mxu0
      %v419 = vadd.f32 %v361, %v418
      %v420 = vpop.f32.mrf.mxu0
      %421 = vmatprep.mubr.bf16.mxu0 0
      %422 = vmatmul.mubr.bf16.gmra.mxu0 %v379
      %v423 = vpop.f32.mrf.mxu0
      %v424 = vadd.f32 %v361, %v423
      %v425 = vpop.f32.mrf.mxu0
      %v426 = vpop.f32.mrf.mxu0
      %v427 = vpop.f32.mrf.mxu0
      %428 = vdwg.mxu0
      %v429 = vmul.f32 %v416, 0.5
      %v430 = vmul.f32 %v419, 0.5
      %v431 = vmul.f32 %v424, 0.5
      %v432 = vmul.f32 %v416, 0.044715
      %v433 = vmul.f32 %v419, 0.044715
      %v434 = vmul.f32 %v424, 0.044715
      %v435 = vmul.f32 %v432, %v416
      %v436 = vmul.f32 %v433, %v419
      %v437 = vmul.f32 %v434, %v424
      %v438 = vmul.f32 %v435, %v416
      %v439 = vmul.f32 %v436, %v419
      %v440 = vmul.f32 %v437, %v424
      %v441 = vadd.f32 %v416, %v438
      %v442 = vadd.f32 %v419, %v439
      %v443 = vadd.f32 %v424, %v440
      %v444 = vmul.f32 %v441, 0.7978846
      %v445 = vmul.f32 %v442, 0.7978846
      %v446 = vmul.f32 %v443, 0.7978846
      %v447 = vtanh.pop %v444
      %v448 = vtanh.pop %v445
      %v449 = vtanh.pop %v446
      %v450 = vadd.f32 %v447, 1.0
      %v451 = vadd.f32 %v448, 1.0
      %v452 = vadd.f32 %v449, 1.0
      %v453 = vmul.f32 %v429, %v450
      %v454 = vmul.f32 %v430, %v451
      %v455 = vmul.f32 %v431, %v452
      %v456 = vpack.c.bf16 %v454, %v453
      %v457 = vpack.c.bf16 %v455, %v455
      %v458 = vld [vmem:[%s5] sm:$0xf]
      %v459 = vld [vmem:[%s5 + $0x4] sm:$0xf]
      %v460 = vld [vmem:[%s5 + $0x8] sm:$0xf]
      %v461 = vld [vmem:[%s5 + $0xc] sm:$0xf]
      %v462 = vld [vmem:[%s5 + $0x10] sm:$0xf]
      %v463 = vld [vmem:[%s5 + $0x14] sm:$0xf]
      %v464 = vld [vmem:[%s5 + $0x18] sm:$0xf]
      %v465 = vld [vmem:[%s5 + $0x1c] sm:$0xf]
      %v466 = vld [vmem:[%s5 + $0x20] sm:$0xf]
      %v467 = vld [vmem:[%s5 + $0x24] sm:$0xf]
      %v468 = vld [vmem:[%s5 + $0x28] sm:$0xf]
      %v469 = vld [vmem:[%s5 + $0x2c] sm:$0xf]
      %v470 = vld [vmem:[%s5 + $0x30] sm:$0xf]
      %v471 = vld [vmem:[%s5 + $0x34] sm:$0xf]
      %v472 = vld [vmem:[%s5 + $0x38] sm:$0xf]
      %v473 = vld [vmem:[%s5 + $0x3c] sm:$0xf]
      %v474 = vld [vmem:[%s6] sm:$0x1]
      %v476 = vlaneseq
      %v477 = vshrl.u32 %v476, 7
      %v478 = vsub.s32 0, %v477
      %v479 = vrot.slane %v474, %v478
      %v497 = vunpack.c.l.b16 %v458
      %v498 = vunpack.c.l.b16 %v459
      %v499 = vunpack.c.l.b16 %v460
      %v500 = vunpack.c.l.b16 %v461
      %v501 = vunpack.c.l.b16 %v462
      %v502 = vunpack.c.l.b16 %v463
      %v503 = vunpack.c.l.b16 %v464
      %v504 = vunpack.c.l.b16 %v465
      %v505 = vunpack.c.l.b16 %v466
      %v506 = vunpack.c.l.b16 %v467
      %v507 = vunpack.c.l.b16 %v468
      %v508 = vunpack.c.l.b16 %v469
      %v509 = vunpack.c.l.b16 %v470
      %v510 = vunpack.c.l.b16 %v471
      %v511 = vunpack.c.l.b16 %v472
      %v512 = vunpack.c.l.b16 %v473
      %v513 = vpack.c.b16 %v498, %v497
      %v514 = vpack.c.b16 %v500, %v499
      %v515 = vpack.c.b16 %v502, %v501
      %v516 = vpack.c.b16 %v504, %v503
      %v517 = vpack.c.b16 %v506, %v505
      %v518 = vpack.c.b16 %v508, %v507
      %v519 = vpack.c.b16 %v510, %v509
      %v520 = vpack.c.b16 %v512, %v511
      %529 = vmatprep.subr.bf16.mxu0 0
      %530 = vmatpush1.bf16.msra.mxu0 %v520
      %531 = vmatprep.subr.bf16.mxu0 0
      %532 = vmatpush1.bf16.msra.mxu0 %v519
      %533 = vmatprep.subr.bf16.mxu0 0
      %534 = vmatpush1.bf16.msra.mxu0 %v518
      %535 = vmatprep.subr.bf16.mxu0 0
      %536 = vmatpush1.bf16.msra.mxu0 %v517
      %537 = vmatprep.subr.bf16.mxu0 0
      %538 = vmatpush1.bf16.msra.mxu0 %v516
      %539 = vmatprep.subr.bf16.mxu0 0
      %540 = vmatpush1.bf16.msra.mxu0 %v515
      %541 = vmatprep.subr.bf16.mxu0 0
      %542 = vmatpush1.bf16.msra.mxu0 %v514
      %543 = vmatprep.subr.bf16.mxu0 0
      %544 = vmatpush1.bf16.msra.mxu0 %v513
      %545 = vmatprep.subr.bf16.mxu0 0
      %546 = vmatpush2.bf16.msra.mxu0 0
      %547 = vmatprep.subr.bf16.mxu0 0
      %548 = vmatpush2.bf16.msra.mxu0 0
      %549 = vmatprep.subr.bf16.mxu0 0
      %550 = vmatpush2.bf16.msra.mxu0 0
      %551 = vmatprep.subr.bf16.mxu0 0
      %552 = vmatpush2.bf16.msra.mxu0 0
      %553 = vmatprep.subr.bf16.mxu0 0
      %554 = vmatpush2.bf16.msra.mxu0 0
      %555 = vmatprep.subr.bf16.mxu0 0
      %556 = vmatpush2.bf16.msra.mxu0 0
      %557 = vmatprep.subr.bf16.mxu0 0
      %558 = vmatpush2.bf16.msra.mxu0 0
      %559 = vmatprep.subr.bf16.mxu0 0
      %560 = vmatpush2.bf16.msra.mxu0 0
      %561 = vmatprep.mubr.bf16.mxu0 0
      %562 = vmatmul.mubr.bf16.gmra.mxu0 %v456
      %v563 = vpop.f32.mrf.mxu0
      %v564 = vadd.f32 %v479, %v563
      %v565 = vpop.f32.mrf.mxu0
      %v566 = vpop.f32.mrf.mxu0
      %v567 = vadd.f32 %v479, %v566
      %v568 = vpop.f32.mrf.mxu0
      %569 = vmatprep.mubr.bf16.mxu0 0
      %570 = vmatmul.mubr.bf16.gmra.mxu0 %v457
      %v571 = vpop.f32.mrf.mxu0
      %v572 = vadd.f32 %v479, %v571
      %v573 = vpop.f32.mrf.mxu0
      %v574 = vpop.f32.mrf.mxu0
      %v575 = vpop.f32.mrf.mxu0
      %576 = vdwg.mxu0
      %v577 = vadd.f32 %v564, %v286
      %v578 = vadd.f32 %v567, %v287
      %v579 = vadd.f32 %v572, %v288
      %v580 = vpack.c.bf16 %v578, %v577
      %v581 = vpack.c.bf16 %v579, %v579
      %v584 = vunpack.c.l.b16 %v580
      %v585 = vunpack.c.h.b16 %v580
      %v586 = vunpack.c.l.b16 %v581
      %v587 = vpack.c.b16 %v584, %v584
      %v588 = vpack.c.b16 %v585, %v585
      %v589 = vpack.c.b16 %v586, %v586
      %vm593 = vcmask 257024
      %594 = vst.msk [vmem:[%s280] sm:$0xf] %vm593, %v587
      %595 = vst.msk [vmem:[%s280 + $0x4] sm:$0xf] %vm593, %v588
      %596 = vst.msk [vmem:[%s280 + $0x8] sm:$0xf] %vm593, %v589
      %s597 = smul.u32 3, %s18
      %p598 = scmp.lt.s32.totalorder %s597, 5
      %s599 = scalar_select %p598, %s597, 5
      %s600 = smul.addr %s599, 4
      %s601 = scalar_lea.vmem %s7, %s600
      // Predicated region
      $region49: #{low_level_transformer_forward.8} parent=47 // pred_check
        %p602 = pneg %p188
      $region50: #{low_level_transformer_forward.8} parent=47 // pred_check_branch
        %604 = sbr.rel (%p602) target = $region52
      $region51: #{low_level_transformer_forward.8} parent=47 // pred_region
        %s605 = smul.u32 3, %s18
      $region52: #{low_level_transformer_forward.8} parent=47 // pred_fallthru
        _
    $region48: #{low_level_transformer_forward.8} parent=5 // pred_fallthru
      _
    %p606 = scmp.le.s32.totalorder 2, %s13
    // Predicated region
    $region53: #{low_level_transformer_forward.8} parent=5 // pred_check
      %p607 = pneg %p606
    $region54: #{low_level_transformer_forward.8} parent=5 // pred_check_branch
      %609 = sbr.rel (%p607) target = $region56
    $region55: #{low_level_transformer_forward.8} parent=5 // pred_region
      %s610 = ssub.s32 %s13, 2
      // Predicated region
      $region57: #{low_level_transformer_forward.8} parent=55 // pred_check
        %p611 = pneg %p194
      $region58: #{low_level_transformer_forward.8} parent=55 // pred_check_branch
        %613 = sbr.rel (%p611) target = $region60
      $region59: #{low_level_transformer_forward.8} parent=55 // pred_region
        %s614 = smul.u32 3, %s19
        %p615 = scmp.lt.s32.totalorder %s614, 5
        %s616 = scalar_select %p615, %s614, 5
        %s617 = smul.addr %s616, 4
        %s618 = scalar_lea.vmem %s7, %s617
      $region60: #{low_level_transformer_forward.8} parent=55 // pred_fallthru
        _
    $region56: #{low_level_transformer_forward.8} parent=5 // pred_fallthru
      _
  $region6: #{low_level_transformer_forward.8} parent=0 // loop_footer
    %s17 = sadd.s32 1, %s13
  $region7: #{low_level_transformer_forward.8} parent=0 // loop_footer_branch
    %12 = sbr.rel target = $region3
  $region8: #{low_level_transformer_forward.8} parent=0 // loop_exit
    _

// kernel: low_level_transformer_forward.6
$region0: #{low_level_transformer_forward.6}
  #allocation0 [shape = 'u32[]', space=smem, size = 0x4, offset = 0x4, fixed_abs, tag = 'smem constant byte address 0x4 - core index']
  #allocation1 [shape = 'u32[144,128]{1,0:T(1,128)}', space=vmem, size = 0x12000, scoped, tag = 'internal scratch']
  %s0 = inlined_call_operand.vmem [shape: f32[2,8,12], index: 0, kind: input, shape index: {}]
  %s1 = inlined_call_operand.vmem [shape: f32[2,8,6], index: 1, kind: input, shape index: {}]
  %s2 = inlined_call_operand.vmem [shape: f32[2,8,12], index: 2, kind: input, shape index: {}]
  %s3 = inlined_call_operand.vmem [shape: f32[2,8,32], index: 3, kind: input, shape index: {}]
  %s4 = inlined_call_operand.vmem [shape: f32[8,96], index: 4, kind: input, shape index: {}]
  %s5 = inlined_call_operand.vmem [shape: bf16[12,32], index: 5, kind: input, shape index: {}]
  %s6 = inlined_call_operand.vmem [shape: f32[1,32], index: 6, kind: input, shape index: {}]
  %s7 = inlined_call_operand.vmem [shape: bf16[6,32], index: 7, kind: input, shape index: {}]
  %s8 = inlined_call_operand.vmem [shape: f32[1,32], index: 8, kind: input, shape index: {}]
  %s9 = inlined_call_operand.vmem [shape: bf16[12,32], index: 9, kind: input, shape index: {}]
  %s10 = inlined_call_operand.vmem [shape: f32[1,32], index: 10, kind: input, shape index: {}]
  %s11 = inlined_call_operand.vmem [shape: f32[1,32], index: 11, kind: input, shape index: {}]
  %s12 = inlined_call_operand.vmem [shape: f32[1,32], index: 12, kind: input, shape index: {}]
  %s13 = inlined_call_operand.vmem [shape: bf16[2,8,96], index: 13, kind: output, shape index: {}]
  %s14 = sld [smem:[#allocation0]]
  $region85: #{low_level_transformer_forward.6} parent=0
    _
  %s16 = ssub.s32 1, %s14
  %s17 = scalar_select 0, %s16, %s14
  loop: start=0, step=1, limit=4
  $region2: #{low_level_transformer_forward.6} parent=0 // loop_pre_header
    _
  $region3: #{low_level_transformer_forward.6} parent=0 // loop_header
    %s19 = sphi 0, %s23
    %p20 = scmp.ge.s32.totalorder %s19, 4
    %s29 = sphi 0, %s31
    %s32 = sphi 0, %s29
    %s33 = sphi 0, %s32
    %s49 = sphi 0, %s33
    %s55 = sphi 0, %s57
    %s58 = sphi 0, %s55
    %s59 = sphi 0, %s58
    %s75 = sphi 0, %s59
    %s81 = sphi 0, %s83
    %s84 = sphi 0, %s81
    %s85 = sphi 0, %s84
    %s101 = sphi 0, %s85
    %s107 = sphi 0, %s109
    %s110 = sphi 0, %s107
    %s111 = sphi 0, %s110
    %s127 = sphi 0, %s111
    %s131 = sphi 0, %s131
    %s133 = sphi 0, %s131
    %s134 = sphi 0, %s133
    %s148 = sphi 0, %s134
    %s152 = sphi 0, %s152
    %s154 = sphi 0, %s152
    %s155 = sphi 0, %s154
    %s169 = sphi 0, %s155
    %s173 = sphi 0, %s173
    %s175 = sphi 0, %s173
    %s176 = sphi 0, %s175
    %s190 = sphi 0, %s176
    %s194 = sphi 0, %s194
    %s196 = sphi 0, %s194
    %s197 = sphi 0, %s196
    %s211 = sphi 0, %s197
    %s215 = sphi 0, %s215
    %s217 = sphi 0, %s215
    %s218 = sphi 0, %s217
    %s232 = sphi 0, %s218
    %s236 = sphi 0, %s236
    %s238 = sphi 0, %s236
    %s239 = sphi 0, %s238
    %s253 = sphi 0, %s239
    %s257 = sphi 0, %s257
    %s259 = sphi 0, %s257
    %s260 = sphi 0, %s259
    %s274 = sphi 0, %s260
    %s278 = sphi 0, %s278
    %s280 = sphi 0, %s278
    %s281 = sphi 0, %s280
    %s295 = sphi 0, %s281
    %s299 = sphi 0, %s299
    %s301 = sphi 0, %s299
    %s302 = sphi 0, %s301
    %s316 = sphi 0, %s302
    %s322 = sphi 0, %s324
    %s325 = sphi 0, %s322
    %s326 = sphi 0, %s325
    %s342 = sphi 0, %s326
  $region4: #{low_level_transformer_forward.6} parent=0 // loop_header_branch
    %22 = sbr.rel (%p20) target = $region8
  $region5: #{low_level_transformer_forward.6} parent=0 // loop_body
    %s24 = ssub.s32 %s19, 1
    %s25 = ssub.s32 %s19, 2
    %s26 = sadd.s32 %s19, 1
    %s27 = ssub.s32 %s19, %s26
    %p28 = scmp.eq.s32.totalorder %s27, 0
    %s30 = sadd.s32 %s29, 1
    %s31 = scalar_select %p28, %s29, %s30
    %p34 = pneg %p28
    %p35 = scmp.eq.s32.totalorder %s19, 1
    %p36 = por %p34, %p35
    %p37 = scmp.ne.s32.totalorder %s29, %s32
    %p38 = scmp.eq.s32.totalorder %s19, 0
    %p39 = por %p37, %p38
    %p40 = scmp.ne.s32.totalorder %s29, %s32
    %p41 = scmp.eq.s32.totalorder %s24, 1
    %p42 = por %p40, %p41
    %p43 = scmp.ne.s32.totalorder %s32, %s33
    %p44 = scmp.eq.s32.totalorder %s24, 0
    %p45 = por %p43, %p44
    %p46 = scmp.ne.s32.totalorder %s32, %s33
    %p47 = scmp.eq.s32.totalorder %s25, 1
    %p48 = por %p46, %p47
    %p50 = scmp.ne.s32.totalorder %s33, %s49
    %p51 = scmp.eq.s32.totalorder %s25, 0
    %p52 = por %p50, %p51
    %s53 = ssub.s32 %s19, %s26
    %p54 = scmp.eq.s32.totalorder %s53, 0
    %s56 = sadd.s32 %s55, 1
    %s57 = scalar_select %p54, %s55, %s56
    %p60 = pneg %p54
    %p61 = scmp.eq.s32.totalorder %s19, 1
    %p62 = por %p60, %p61
    %p63 = scmp.ne.s32.totalorder %s55, %s58
    %p64 = scmp.eq.s32.totalorder %s19, 0
    %p65 = por %p63, %p64
    %p66 = scmp.ne.s32.totalorder %s55, %s58
    %p67 = scmp.eq.s32.totalorder %s24, 1
    %p68 = por %p66, %p67
    %p69 = scmp.ne.s32.totalorder %s58, %s59
    %p70 = scmp.eq.s32.totalorder %s24, 0
    %p71 = por %p69, %p70
    %p72 = scmp.ne.s32.totalorder %s58, %s59
    %p73 = scmp.eq.s32.totalorder %s25, 1
    %p74 = por %p72, %p73
    %p76 = scmp.ne.s32.totalorder %s59, %s75
    %p77 = scmp.eq.s32.totalorder %s25, 0
    %p78 = por %p76, %p77
    %s79 = ssub.s32 %s19, %s26
    %p80 = scmp.eq.s32.totalorder %s79, 0
    %s82 = sadd.s32 %s81, 1
    %s83 = scalar_select %p80, %s81, %s82
    %p86 = pneg %p80
    %p87 = scmp.eq.s32.totalorder %s19, 1
    %p88 = por %p86, %p87
    %p89 = scmp.ne.s32.totalorder %s81, %s84
    %p90 = scmp.eq.s32.totalorder %s19, 0
    %p91 = por %p89, %p90
    %p92 = scmp.ne.s32.totalorder %s81, %s84
    %p93 = scmp.eq.s32.totalorder %s24, 1
    %p94 = por %p92, %p93
    %p95 = scmp.ne.s32.totalorder %s84, %s85
    %p96 = scmp.eq.s32.totalorder %s24, 0
    %p97 = por %p95, %p96
    %p98 = scmp.ne.s32.totalorder %s84, %s85
    %p99 = scmp.eq.s32.totalorder %s25, 1
    %p100 = por %p98, %p99
    %p102 = scmp.ne.s32.totalorder %s85, %s101
    %p103 = scmp.eq.s32.totalorder %s25, 0
    %p104 = por %p102, %p103
    %s105 = ssub.s32 %s19, %s26
    %p106 = scmp.eq.s32.totalorder %s105, 0
    %s108 = sadd.s32 %s107, 1
    %s109 = scalar_select %p106, %s107, %s108
    %p112 = pneg %p106
    %p113 = scmp.eq.s32.totalorder %s19, 1
    %p114 = por %p112, %p113
    %p115 = scmp.ne.s32.totalorder %s107, %s110
    %p116 = scmp.eq.s32.totalorder %s19, 0
    %p117 = por %p115, %p116
    %p118 = scmp.ne.s32.totalorder %s107, %s110
    %p119 = scmp.eq.s32.totalorder %s24, 1
    %p120 = por %p118, %p119
    %p121 = scmp.ne.s32.totalorder %s110, %s111
    %p122 = scmp.eq.s32.totalorder %s24, 0
    %p123 = por %p121, %p122
    %p124 = scmp.ne.s32.totalorder %s110, %s111
    %p125 = scmp.eq.s32.totalorder %s25, 1
    %p126 = por %p124, %p125
    %p128 = scmp.ne.s32.totalorder %s111, %s127
    %p129 = scmp.eq.s32.totalorder %s25, 0
    %p130 = por %p128, %p129
    %s132 = sadd.s32 %s131, 1
    %p135 = scmp.eq.s32.totalorder %s19, 1
    %p136 = scmp.ne.s32.totalorder %s131, %s133
    %p137 = scmp.eq.s32.totalorder %s19, 0
    %p138 = por %p136, %p137
    %p139 = scmp.ne.s32.totalorder %s131, %s133
    %p140 = scmp.eq.s32.totalorder %s24, 1
    %p141 = por %p139, %p140
    %p142 = scmp.ne.s32.totalorder %s133, %s134
    %p143 = scmp.eq.s32.totalorder %s24, 0
    %p144 = por %p142, %p143
    %p145 = scmp.ne.s32.totalorder %s133, %s134
    %p146 = scmp.eq.s32.totalorder %s25, 1
    %p147 = por %p145, %p146
    %p149 = scmp.ne.s32.totalorder %s134, %s148
    %p150 = scmp.eq.s32.totalorder %s25, 0
    %p151 = por %p149, %p150
    %s153 = sadd.s32 %s152, 1
    %p156 = scmp.eq.s32.totalorder %s19, 1
    %p157 = scmp.ne.s32.totalorder %s152, %s154
    %p158 = scmp.eq.s32.totalorder %s19, 0
    %p159 = por %p157, %p158
    %p160 = scmp.ne.s32.totalorder %s152, %s154
    %p161 = scmp.eq.s32.totalorder %s24, 1
    %p162 = por %p160, %p161
    %p163 = scmp.ne.s32.totalorder %s154, %s155
    %p164 = scmp.eq.s32.totalorder %s24, 0
    %p165 = por %p163, %p164
    %p166 = scmp.ne.s32.totalorder %s154, %s155
    %p167 = scmp.eq.s32.totalorder %s25, 1
    %p168 = por %p166, %p167
    %p170 = scmp.ne.s32.totalorder %s155, %s169
    %p171 = scmp.eq.s32.totalorder %s25, 0
    %p172 = por %p170, %p171
    %s174 = sadd.s32 %s173, 1
    %p177 = scmp.eq.s32.totalorder %s19, 1
    %p178 = scmp.ne.s32.totalorder %s173, %s175
    %p179 = scmp.eq.s32.totalorder %s19, 0
    %p180 = por %p178, %p179
    %p181 = scmp.ne.s32.totalorder %s173, %s175
    %p182 = scmp.eq.s32.totalorder %s24, 1
    %p183 = por %p181, %p182
    %p184 = scmp.ne.s32.totalorder %s175, %s176
    %p185 = scmp.eq.s32.totalorder %s24, 0
    %p186 = por %p184, %p185
    %p187 = scmp.ne.s32.totalorder %s175, %s176
    %p188 = scmp.eq.s32.totalorder %s25, 1
    %p189 = por %p187, %p188
    %p191 = scmp.ne.s32.totalorder %s176, %s190
    %p192 = scmp.eq.s32.totalorder %s25, 0
    %p193 = por %p191, %p192
    %s195 = sadd.s32 %s194, 1
    %p198 = scmp.eq.s32.totalorder %s19, 1
    %p199 = scmp.ne.s32.totalorder %s194, %s196
    %p200 = scmp.eq.s32.totalorder %s19, 0
    %p201 = por %p199, %p200
    %p202 = scmp.ne.s32.totalorder %s194, %s196
    %p203 = scmp.eq.s32.totalorder %s24, 1
    %p204 = por %p202, %p203
    %p205 = scmp.ne.s32.totalorder %s196, %s197
    %p206 = scmp.eq.s32.totalorder %s24, 0
    %p207 = por %p205, %p206
    %p208 = scmp.ne.s32.totalorder %s196, %s197
    %p209 = scmp.eq.s32.totalorder %s25, 1
    %p210 = por %p208, %p209
    %p212 = scmp.ne.s32.totalorder %s197, %s211
    %p213 = scmp.eq.s32.totalorder %s25, 0
    %p214 = por %p212, %p213
    %s216 = sadd.s32 %s215, 1
    %p219 = scmp.eq.s32.totalorder %s19, 1
    %p220 = scmp.ne.s32.totalorder %s215, %s217
    %p221 = scmp.eq.s32.totalorder %s19, 0
    %p222 = por %p220, %p221
    %p223 = scmp.ne.s32.totalorder %s215, %s217
    %p224 = scmp.eq.s32.totalorder %s24, 1
    %p225 = por %p223, %p224
    %p226 = scmp.ne.s32.totalorder %s217, %s218
    %p227 = scmp.eq.s32.totalorder %s24, 0
    %p228 = por %p226, %p227
    %p229 = scmp.ne.s32.totalorder %s217, %s218
    %p230 = scmp.eq.s32.totalorder %s25, 1
    %p231 = por %p229, %p230
    %p233 = scmp.ne.s32.totalorder %s218, %s232
    %p234 = scmp.eq.s32.totalorder %s25, 0
    %p235 = por %p233, %p234
    %s237 = sadd.s32 %s236, 1
    %p240 = scmp.eq.s32.totalorder %s19, 1
    %p241 = scmp.ne.s32.totalorder %s236, %s238
    %p242 = scmp.eq.s32.totalorder %s19, 0
    %p243 = por %p241, %p242
    %p244 = scmp.ne.s32.totalorder %s236, %s238
    %p245 = scmp.eq.s32.totalorder %s24, 1
    %p246 = por %p244, %p245
    %p247 = scmp.ne.s32.totalorder %s238, %s239
    %p248 = scmp.eq.s32.totalorder %s24, 0
    %p249 = por %p247, %p248
    %p250 = scmp.ne.s32.totalorder %s238, %s239
    %p251 = scmp.eq.s32.totalorder %s25, 1
    %p252 = por %p250, %p251
    %p254 = scmp.ne.s32.totalorder %s239, %s253
    %p255 = scmp.eq.s32.totalorder %s25, 0
    %p256 = por %p254, %p255
    %s258 = sadd.s32 %s257, 1
    %p261 = scmp.eq.s32.totalorder %s19, 1
    %p262 = scmp.ne.s32.totalorder %s257, %s259
    %p263 = scmp.eq.s32.totalorder %s19, 0
    %p264 = por %p262, %p263
    %p265 = scmp.ne.s32.totalorder %s257, %s259
    %p266 = scmp.eq.s32.totalorder %s24, 1
    %p267 = por %p265, %p266
    %p268 = scmp.ne.s32.totalorder %s259, %s260
    %p269 = scmp.eq.s32.totalorder %s24, 0
    %p270 = por %p268, %p269
    %p271 = scmp.ne.s32.totalorder %s259, %s260
    %p272 = scmp.eq.s32.totalorder %s25, 1
    %p273 = por %p271, %p272
    %p275 = scmp.ne.s32.totalorder %s260, %s274
    %p276 = scmp.eq.s32.totalorder %s25, 0
    %p277 = por %p275, %p276
    %s279 = sadd.s32 %s278, 1
    %p282 = scmp.eq.s32.totalorder %s19, 1
    %p283 = scmp.ne.s32.totalorder %s278, %s280
    %p284 = scmp.eq.s32.totalorder %s19, 0
    %p285 = por %p283, %p284
    %p286 = scmp.ne.s32.totalorder %s278, %s280
    %p287 = scmp.eq.s32.totalorder %s24, 1
    %p288 = por %p286, %p287
    %p289 = scmp.ne.s32.totalorder %s280, %s281
    %p290 = scmp.eq.s32.totalorder %s24, 0
    %p291 = por %p289, %p290
    %p292 = scmp.ne.s32.totalorder %s280, %s281
    %p293 = scmp.eq.s32.totalorder %s25, 1
    %p294 = por %p292, %p293
    %p296 = scmp.ne.s32.totalorder %s281, %s295
    %p297 = scmp.eq.s32.totalorder %s25, 0
    %p298 = por %p296, %p297
    %s300 = sadd.s32 %s299, 1
    %p303 = scmp.eq.s32.totalorder %s19, 1
    %p304 = scmp.ne.s32.totalorder %s299, %s301
    %p305 = scmp.eq.s32.totalorder %s19, 0
    %p306 = por %p304, %p305
    %p307 = scmp.ne.s32.totalorder %s299, %s301
    %p308 = scmp.eq.s32.totalorder %s24, 1
    %p309 = por %p307, %p308
    %p310 = scmp.ne.s32.totalorder %s301, %s302
    %p311 = scmp.eq.s32.totalorder %s24, 0
    %p312 = por %p310, %p311
    %p313 = scmp.ne.s32.totalorder %s301, %s302
    %p314 = scmp.eq.s32.totalorder %s25, 1
    %p315 = por %p313, %p314
    %p317 = scmp.ne.s32.totalorder %s302, %s316
    %p318 = scmp.eq.s32.totalorder %s25, 0
    %p319 = por %p317, %p318
    %s320 = ssub.s32 %s19, %s26
    %p321 = scmp.eq.s32.totalorder %s320, 0
    %s323 = sadd.s32 %s322, 1
    %s324 = scalar_select %p321, %s322, %s323
    %p327 = pneg %p321
    %p328 = scmp.eq.s32.totalorder %s19, 1
    %p329 = por %p327, %p328
    %p330 = scmp.ne.s32.totalorder %s322, %s325
    %p331 = scmp.eq.s32.totalorder %s19, 0
    %p332 = por %p330, %p331
    %p333 = scmp.ne.s32.totalorder %s322, %s325
    %p334 = scmp.eq.s32.totalorder %s24, 1
    %p335 = por %p333, %p334
    %p336 = scmp.ne.s32.totalorder %s325, %s326
    %p337 = scmp.eq.s32.totalorder %s24, 0
    %p338 = por %p336, %p337
    %p339 = scmp.ne.s32.totalorder %s325, %s326
    %p340 = scmp.eq.s32.totalorder %s25, 1
    %p341 = por %p339, %p340
    %p343 = scmp.ne.s32.totalorder %s326, %s342
    %p344 = scmp.eq.s32.totalorder %s25, 0
    %p345 = por %p343, %p344
    %p346 = scmp.le.s32.totalorder 1, %s19
    %p347 = scmp.lt.s32.totalorder %s19, 3
    %p348 = pnand %p346, %p347
    %p349 = pneg %p348
    // Predicated region
    $region9: #{low_level_transformer_forward.6} parent=5 // pred_check
      _
    $region10: #{low_level_transformer_forward.6} parent=5 // pred_check_branch
      %351 = sbr.rel (%p348) target = $region12
    $region11: #{low_level_transformer_forward.6} parent=5 // pred_region
      %s352 = ssub.s32 %s19, 1
      // Predicated region
      $region13: #{low_level_transformer_forward.6} parent=11 // pred_check
        %p353 = pneg %p144
      $region14: #{low_level_transformer_forward.6} parent=11 // pred_check_branch
        %355 = sbr.rel (%p353) target = $region16
      $region15: #{low_level_transformer_forward.6} parent=11 // pred_region
        _
      $region16: #{low_level_transformer_forward.6} parent=11 // pred_fallthru
        _
      // Predicated region
      $region17: #{low_level_transformer_forward.6} parent=11 // pred_check
        %p356 = pneg %p165
      $region18: #{low_level_transformer_forward.6} parent=11 // pred_check_branch
        %358 = sbr.rel (%p356) target = $region20
      $region19: #{low_level_transformer_forward.6} parent=11 // pred_region
        _
      $region20: #{low_level_transformer_forward.6} parent=11 // pred_fallthru
        _
      // Predicated region
      $region21: #{low_level_transformer_forward.6} parent=11 // pred_check
        %p359 = pneg %p186
      $region22: #{low_level_transformer_forward.6} parent=11 // pred_check_branch
        %361 = sbr.rel (%p359) target = $region24
      $region23: #{low_level_transformer_forward.6} parent=11 // pred_region
        _
      $region24: #{low_level_transformer_forward.6} parent=11 // pred_fallthru
        _
      // Predicated region
      $region25: #{low_level_transformer_forward.6} parent=11 // pred_check
        %p362 = pneg %p207
      $region26: #{low_level_transformer_forward.6} parent=11 // pred_check_branch
        %364 = sbr.rel (%p362) target = $region28
      $region27: #{low_level_transformer_forward.6} parent=11 // pred_region
        _
      $region28: #{low_level_transformer_forward.6} parent=11 // pred_fallthru
        _
      // Predicated region
      $region29: #{low_level_transformer_forward.6} parent=11 // pred_check
        %p365 = pneg %p228
      $region30: #{low_level_transformer_forward.6} parent=11 // pred_check_branch
        %367 = sbr.rel (%p365) target = $region32
      $region31: #{low_level_transformer_forward.6} parent=11 // pred_region
        _
      $region32: #{low_level_transformer_forward.6} parent=11 // pred_fallthru
        _
      // Predicated region
      $region33: #{low_level_transformer_forward.6} parent=11 // pred_check
        %p368 = pneg %p249
      $region34: #{low_level_transformer_forward.6} parent=11 // pred_check_branch
        %370 = sbr.rel (%p368) target = $region36
      $region35: #{low_level_transformer_forward.6} parent=11 // pred_region
        _
      $region36: #{low_level_transformer_forward.6} parent=11 // pred_fallthru
        _
      // Predicated region
      $region37: #{low_level_transformer_forward.6} parent=11 // pred_check
        %p371 = pneg %p270
      $region38: #{low_level_transformer_forward.6} parent=11 // pred_check_branch
        %373 = sbr.rel (%p371) target = $region40
      $region39: #{low_level_transformer_forward.6} parent=11 // pred_region
        _
      $region40: #{low_level_transformer_forward.6} parent=11 // pred_fallthru
        _
      // Predicated region
      $region41: #{low_level_transformer_forward.6} parent=11 // pred_check
        %p374 = pneg %p291
      $region42: #{low_level_transformer_forward.6} parent=11 // pred_check_branch
        %376 = sbr.rel (%p374) target = $region44
      $region43: #{low_level_transformer_forward.6} parent=11 // pred_region
        _
      $region44: #{low_level_transformer_forward.6} parent=11 // pred_fallthru
        _
      // Predicated region
      $region45: #{low_level_transformer_forward.6} parent=11 // pred_check
        %p377 = pneg %p312
      $region46: #{low_level_transformer_forward.6} parent=11 // pred_check_branch
        %379 = sbr.rel (%p377) target = $region48
      $region47: #{low_level_transformer_forward.6} parent=11 // pred_region
        _
      $region48: #{low_level_transformer_forward.6} parent=11 // pred_fallthru
        _
    $region12: #{low_level_transformer_forward.6} parent=5 // pred_fallthru
      _
    %p380 = scmp.lt.s32.totalorder %s19, 2
    // Predicated region
    $region49: #{low_level_transformer_forward.6} parent=5 // pred_check
      %p381 = pneg %p380
    $region50: #{low_level_transformer_forward.6} parent=5 // pred_check_branch
      %383 = sbr.rel (%p381) target = $region52
    $region51: #{low_level_transformer_forward.6} parent=5 // pred_region
      // Predicated region
      $region53: #{low_level_transformer_forward.6} parent=51 // pred_check
        %p384 = pneg %p39
      $region54: #{low_level_transformer_forward.6} parent=51 // pred_check_branch
        %386 = sbr.rel (%p384) target = $region56
      $region55: #{low_level_transformer_forward.6} parent=51 // pred_region
        %p387 = scmp.lt.s32.totalorder %s19, 1
        %s388 = scalar_select %p387, %s19, 1
        %s389 = smul.addr %s388, 8
        %s390 = scalar_lea.vmem %s0, %s389
      $region56: #{low_level_transformer_forward.6} parent=51 // pred_fallthru
        _
      // Predicated region
      $region57: #{low_level_transformer_forward.6} parent=51 // pred_check
        %p391 = pneg %p65
      $region58: #{low_level_transformer_forward.6} parent=51 // pred_check_branch
        %393 = sbr.rel (%p391) target = $region60
      $region59: #{low_level_transformer_forward.6} parent=51 // pred_region
        %p394 = scmp.lt.s32.totalorder %s19, 1
        %s395 = scalar_select %p394, %s19, 1
        %s396 = smul.addr %s395, 8
        %s397 = scalar_lea.vmem %s1, %s396
      $region60: #{low_level_transformer_forward.6} parent=51 // pred_fallthru
        _
      // Predicated region
      $region61: #{low_level_transformer_forward.6} parent=51 // pred_check
        %p398 = pneg %p91
      $region62: #{low_level_transformer_forward.6} parent=51 // pred_check_branch
        %400 = sbr.rel (%p398) target = $region64
      $region63: #{low_level_transformer_forward.6} parent=51 // pred_region
        %p401 = scmp.lt.s32.totalorder %s19, 1
        %s402 = scalar_select %p401, %s19, 1
        %s403 = smul.addr %s402, 8
        %s404 = scalar_lea.vmem %s2, %s403
      $region64: #{low_level_transformer_forward.6} parent=51 // pred_fallthru
        _
      // Predicated region
      $region65: #{low_level_transformer_forward.6} parent=51 // pred_check
        %p405 = pneg %p117
      $region66: #{low_level_transformer_forward.6} parent=51 // pred_check_branch
        %407 = sbr.rel (%p405) target = $region68
      $region67: #{low_level_transformer_forward.6} parent=51 // pred_region
        %p408 = scmp.lt.s32.totalorder %s19, 1
        %s409 = scalar_select %p408, %s19, 1
        %s410 = smul.addr %s409, 8
        %s411 = scalar_lea.vmem %s3, %s410
      $region68: #{low_level_transformer_forward.6} parent=51 // pred_fallthru
        _
    $region52: #{low_level_transformer_forward.6} parent=5 // pred_fallthru
      _
    %p412 = scmp.le.s32.totalorder 1, %s19
    %p413 = scmp.lt.s32.totalorder %s19, 3
    %p414 = pnand %p412, %p413
    %p415 = pneg %p414
    // Predicated region
    $region69: #{low_level_transformer_forward.6} parent=5 // pred_check
      _
    $region70: #{low_level_transformer_forward.6} parent=5 // pred_check_branch
      %417 = sbr.rel (%p414) target = $region72
    $region71: #{low_level_transformer_forward.6} parent=5 // pred_region
      %s418 = ssub.s32 %s19, 1
      %p419 = scmp.lt.s32.totalorder %s24, 1
      %s420 = scalar_select %p419, %s24, 1
      %s421 = smul.addr %s420, 8
      %s422 = scalar_lea.vmem %s0, %s421
      %p423 = pneg %p45
      %p424 = pneg %p42
      %p425 = scmp.lt.s32.totalorder %s24, 1
      %s426 = scalar_select %p425, %s24, 1
      %s427 = smul.addr %s426, 8
      %s428 = scalar_lea.vmem %s1, %s427
      %p429 = pneg %p71
      %p430 = pneg %p68
      %p431 = scmp.lt.s32.totalorder %s24, 1
      %s432 = scalar_select %p431, %s24, 1
      %s433 = smul.addr %s432, 8
      %s434 = scalar_lea.vmem %s2, %s433
      %p435 = pneg %p97
      %p436 = pneg %p94
      %p437 = scmp.lt.s32.totalorder %s24, 1
      %s438 = scalar_select %p437, %s24, 1
      %s439 = smul.addr %s438, 8
      %s440 = scalar_lea.vmem %s3, %s439
      %p441 = pneg %p123
      %p442 = pneg %p120
      %p443 = pneg %p144
      %p444 = pneg %p141
      %p445 = pneg %p165
      %p446 = pneg %p162
      %p447 = pneg %p186
      %p448 = pneg %p183
      %p449 = pneg %p207
      %p450 = pneg %p204
      %p451 = pneg %p228
      %p452 = pneg %p225
      %p453 = pneg %p249
      %p454 = pneg %p246
      %p455 = pneg %p270
      %p456 = pneg %p267
      %p457 = pneg %p291
      %p458 = pneg %p288
      %p459 = pneg %p312
      %p460 = pneg %p309
      %p461 = pneg %p338
      %p462 = pneg %p335
      %p463 = scmp.lt.s32.totalorder %s24, 1
      %s464 = scalar_select %p463, %s24, 1
      %s465 = smul.addr %s464, 4
      %s466 = scalar_lea.vmem %s13, %s465
      %p467 = scmp.lt.s32.totalorder %s24, 1
      %s468 = scalar_select %p467, %s24, 1
      %s469 = smul.addr %s468, 8
      %s470 = scalar_lea.vmem %s0, %s469
      %p471 = scmp.lt.s32.totalorder %s24, 1
      %s472 = scalar_select %p471, %s24, 1
      %s473 = smul.addr %s472, 8
      %s474 = scalar_lea.vmem %s1, %s473
      %p475 = scmp.lt.s32.totalorder %s24, 1
      %s476 = scalar_select %p475, %s24, 1
      %s477 = smul.addr %s476, 8
      %s478 = scalar_lea.vmem %s2, %s477
      %p479 = scmp.lt.s32.totalorder %s24, 1
      %s480 = scalar_select %p479, %s24, 1
      %s481 = smul.addr %s480, 8
      %s482 = scalar_lea.vmem %s3, %s481
      %p483 = scmp.lt.s32.totalorder %s24, 1
      %s484 = scalar_select %p483, %s24, 1
      %s485 = smul.addr %s484, 4
      %s486 = scalar_lea.vmem %s13, %s485
      %v488 = vld [vmem:[%s482] sm:$0xff]
      %v489 = vld [vmem:[%s4] sm:$0xff]
      %v490 = vld [vmem:[%s11] sm:$0x1]
      %v491 = vld [vmem:[%s12] sm:$0x1]
      %v492 = vld [vmem:[%s478] sm:$0xff]
      %v493 = vpack.c.bf16 %v492, %v492
      %v494 = vld [vmem:[%s9] sm:$0xf]
      %v495 = vld [vmem:[%s9 + $0x4] sm:$0x3]
      %v496 = vld [vmem:[%s10] sm:$0x1]
      %v498 = vlaneseq
      %v499 = vshrl.u32 %v498, 7
      %v500 = vsub.s32 0, %v499
      %v501 = vrot.slane %v496, %v500
      %v505 = vunpack.c.l.b16 %v494
      %v506 = vunpack.c.l.b16 %v495
      %v507 = vpack.c.b16 %v506, %v505
      %vm508 = vcmask 97280
      %v510 = vsel %vm508, %v493, 0
      %vm512 = vcmask 1045504
      %v514 = vsel %vm512, %v507, 0
      %516 = vmatprep.subr.bf16.mxu0 0
      %517 = vmatpush1.bf16.msra.mxu0 0
      %518 = vmatprep.subr.bf16.mxu0 0
      %519 = vmatpush1.bf16.msra.mxu0 0
      %520 = vmatprep.subr.bf16.mxu0 0
      %521 = vmatpush1.bf16.msra.mxu0 0
      %522 = vmatprep.subr.bf16.mxu0 0
      %523 = vmatpush1.bf16.msra.mxu0 0
      %524 = vmatprep.subr.bf16.mxu0 0
      %525 = vmatpush1.bf16.msra.mxu0 0
      %526 = vmatprep.subr.bf16.mxu0 0
      %527 = vmatpush1.bf16.msra.mxu0 0
      %528 = vmatprep.subr.bf16.mxu0 0
      %529 = vmatpush1.bf16.msra.mxu0 0
      %530 = vmatprep.subr.bf16.mxu0 0
      %531 = vmatpush1.bf16.msra.mxu0 %v514
      %532 = vmatprep.subr.bf16.mxu0 0
      %533 = vmatpush2.bf16.msra.mxu0 0
      %534 = vmatprep.subr.bf16.mxu0 0
      %535 = vmatpush2.bf16.msra.mxu0 0
      %536 = vmatprep.subr.bf16.mxu0 0
      %537 = vmatpush2.bf16.msra.mxu0 0
      %538 = vmatprep.subr.bf16.mxu0 0
      %539 = vmatpush2.bf16.msra.mxu0 0
      %540 = vmatprep.subr.bf16.mxu0 0
      %541 = vmatpush2.bf16.msra.mxu0 0
      %542 = vmatprep.subr.bf16.mxu0 0
      %543 = vmatpush2.bf16.msra.mxu0 0
      %544 = vmatprep.subr.bf16.mxu0 0
      %545 = vmatpush2.bf16.msra.mxu0 0
      %546 = vmatprep.subr.bf16.mxu0 0
      %547 = vmatpush2.bf16.msra.mxu0 0
      %548 = vmatprep.mubr.bf16.mxu0 0
      %549 = vmatmul.mubr.bf16.gmra.mxu0 %v510
      %v550 = vpop.f32.mrf.mxu0
      %v551 = vadd.f32 %v501, %v550
      %v552 = vpop.f32.mrf.mxu0
      %v553 = vpop.f32.mrf.mxu0
      %v554 = vpop.f32.mrf.mxu0
      %555 = vdwg.mxu0
      %v556 = vadd.f32 %v551, %v488
      %vm557 = vcmask 261120
      %v558 = vsel %vm557, %v556, 0.0
      %559 = vadd.xlane.f32.xlu0 %v558
      %v560 = vpop.xlane.xlu0 %559
      %v561 = vrcp.pop 32.0
      %v562 = vmul.f32 %v560, %v561
      %v563 = vsub.f32 %v556, %v562
      %v564 = vmul.f32 %v563, %v563
      %v565 = vsel %vm557, %v564, 0.0
      %566 = vadd.xlane.f32.xlu0 %v565
      %v567 = vpop.xlane.xlu0 %566
      %v568 = vmul.f32 %v567, %v561
      %v569 = vadd.f32 %v568, 1e-05
      %v570 = vrsqrt.pop %v569
      %v571 = vmul.f32 %v563, %v570
      %v573 = vlaneseq
      %v574 = vshrl.u32 %v573, 7
      %v575 = vsub.s32 0, %v574
      %v576 = vrot.slane %v490, %v575
      %v578 = vmul.f32 %v571, %v576
      %v580 = vlaneseq
      %v581 = vshrl.u32 %v580, 7
      %v582 = vsub.s32 0, %v581
      %v583 = vrot.slane %v491, %v582
      %v585 = vadd.f32 %v578, %v583
      %v586 = vadd.f32 %v585, %v489
      %v587 = vpack.c.bf16 %v586, %v586
      %vm588 = vcmask 257024
      %589 = vst.msk [vmem:[%s486] sm:$0xf] %vm588, %v587
      %v590 = vld [vmem:[%s470] sm:$0xff]
      %v591 = vpack.c.bf16 %v590, %v590
      %v592 = vld [vmem:[%s5] sm:$0xf]
      %v593 = vld [vmem:[%s5 + $0x4] sm:$0x3]
      %v594 = vld [vmem:[%s6] sm:$0x1]
      %v596 = vlaneseq
      %v597 = vshrl.u32 %v596, 7
      %v598 = vsub.s32 0, %v597
      %v599 = vrot.slane %v594, %v598
      %v603 = vunpack.c.l.b16 %v592
      %v604 = vunpack.c.l.b16 %v593
      %v605 = vpack.c.b16 %v604, %v603
      %v607 = vsel %vm508, %v591, 0
      %v610 = vsel %vm512, %v605, 0
      %612 = vmatprep.subr.bf16.mxu0 0
      %613 = vmatpush1.bf16.msra.mxu0 0
      %614 = vmatprep.subr.bf16.mxu0 0
      %615 = vmatpush1.bf16.msra.mxu0 0
      %616 = vmatprep.subr.bf16.mxu0 0
      %617 = vmatpush1.bf16.msra.mxu0 0
      %618 = vmatprep.subr.bf16.mxu0 0
      %619 = vmatpush1.bf16.msra.mxu0 0
      %620 = vmatprep.subr.bf16.mxu0 0
      %621 = vmatpush1.bf16.msra.mxu0 0
      %622 = vmatprep.subr.bf16.mxu0 0
      %623 = vmatpush1.bf16.msra.mxu0 0
      %624 = vmatprep.subr.bf16.mxu0 0
      %625 = vmatpush1.bf16.msra.mxu0 0
      %626 = vmatprep.subr.bf16.mxu0 0
      %627 = vmatpush1.bf16.msra.mxu0 %v610
      %628 = vmatprep.subr.bf16.mxu0 0
      %629 = vmatpush2.bf16.msra.mxu0 0
      %630 = vmatprep.subr.bf16.mxu0 0
      %631 = vmatpush2.bf16.msra.mxu0 0
      %632 = vmatprep.subr.bf16.mxu0 0
      %633 = vmatpush2.bf16.msra.mxu0 0
      %634 = vmatprep.subr.bf16.mxu0 0
      %635 = vmatpush2.bf16.msra.mxu0 0
      %636 = vmatprep.subr.bf16.mxu0 0
      %637 = vmatpush2.bf16.msra.mxu0 0
      %638 = vmatprep.subr.bf16.mxu0 0
      %639 = vmatpush2.bf16.msra.mxu0 0
      %640 = vmatprep.subr.bf16.mxu0 0
      %641 = vmatpush2.bf16.msra.mxu0 0
      %642 = vmatprep.subr.bf16.mxu0 0
      %643 = vmatpush2.bf16.msra.mxu0 0
      %644 = vmatprep.mubr.bf16.mxu0 0
      %645 = vmatmul.mubr.bf16.gmra.mxu0 %v607
      %v646 = vpop.f32.mrf.mxu0
      %v647 = vadd.f32 %v599, %v646
      %v648 = vpop.f32.mrf.mxu0
      %v649 = vpop.f32.mrf.mxu0
      %v650 = vpop.f32.mrf.mxu0
      %651 = vdwg.mxu0
      %v652 = vadd.f32 %v647, %v488
      %v653 = vsel %vm557, %v652, 0.0
      %654 = vadd.xlane.f32.xlu0 %v653
      %v655 = vpop.xlane.xlu0 %654
      %v656 = vmul.f32 %v655, %v561
      %v657 = vsub.f32 %v652, %v656
      %v658 = vmul.f32 %v657, %v657
      %v659 = vsel %vm557, %v658, 0.0
      %660 = vadd.xlane.f32.xlu0 %v659
      %v661 = vpop.xlane.xlu0 %660
      %v662 = vmul.f32 %v661, %v561
      %v663 = vadd.f32 %v662, 1e-05
      %v664 = vrsqrt.pop %v663
      %v665 = vmul.f32 %v657, %v664
      %v666 = vmul.f32 %v665, %v576
      %v667 = vadd.f32 %v666, %v583
      %669 = vrot.lane.b32.xlu0 %v489, 96
      %v670 = vpop.permute.xlu0 %669
      %v672 = vadd.f32 %v667, %v670
      %v673 = vpack.c.bf16 %v672, %v672
      %v675 = vunpack.c.l.b16 %v673
      %v676 = vpack.c.b16 %v675, %v675
      %677 = vrot.lane.b32.xlu0 %v676, 32
      %v678 = vpop.permute.xlu0 %677
      %vm680 = vcmask 519424
      %681 = vst.msk [vmem:[%s486] sm:$0xf] %vm680, %v678
      %v682 = vld [vmem:[%s474] sm:$0xff]
      %v683 = vpack.c.bf16 %v682, %v682
      %v684 = vld [vmem:[%s7] sm:$0x7]
      %v685 = vld [vmem:[%s8] sm:$0x1]
      %v687 = vlaneseq
      %v688 = vshrl.u32 %v687, 7
      %v689 = vsub.s32 0, %v688
      %v690 = vrot.slane %v685, %v689
      %vm692 = vcmask 48128
      %v694 = vsel %vm692, %v683, 0
      %vm696 = vcmask 1042432
      %v698 = vsel %vm696, %v684, 0
      %700 = vmatprep.subr.bf16.mxu0 0
      %701 = vmatpush1.bf16.msra.mxu0 0
      %702 = vmatprep.subr.bf16.mxu0 0
      %703 = vmatpush1.bf16.msra.mxu0 0
      %704 = vmatprep.subr.bf16.mxu0 0
      %705 = vmatpush1.bf16.msra.mxu0 0
      %706 = vmatprep.subr.bf16.mxu0 0
      %707 = vmatpush1.bf16.msra.mxu0 0
      %708 = vmatprep.subr.bf16.mxu0 0
      %709 = vmatpush1.bf16.msra.mxu0 0
      %710 = vmatprep.subr.bf16.mxu0 0
      %711 = vmatpush1.bf16.msra.mxu0 0
      %712 = vmatprep.subr.bf16.mxu0 0
      %713 = vmatpush1.bf16.msra.mxu0 0
      %714 = vmatprep.subr.bf16.mxu0 0
      %715 = vmatpush1.bf16.msra.mxu0 %v698
      %716 = vmatprep.subr.bf16.mxu0 0
      %717 = vmatpush2.bf16.msra.mxu0 0
      %718 = vmatprep.subr.bf16.mxu0 0
      %719 = vmatpush2.bf16.msra.mxu0 0
      %720 = vmatprep.subr.bf16.mxu0 0
      %721 = vmatpush2.bf16.msra.mxu0 0
      %722 = vmatprep.subr.bf16.mxu0 0
      %723 = vmatpush2.bf16.msra.mxu0 0
      %724 = vmatprep.subr.bf16.mxu0 0
      %725 = vmatpush2.bf16.msra.mxu0 0
      %726 = vmatprep.subr.bf16.mxu0 0
      %727 = vmatpush2.bf16.msra.mxu0 0
      %728 = vmatprep.subr.bf16.mxu0 0
      %729 = vmatpush2.bf16.msra.mxu0 0
      %730 = vmatprep.subr.bf16.mxu0 0
      %731 = vmatpush2.bf16.msra.mxu0 0
      %732 = vmatprep.mubr.bf16.mxu0 0
      %733 = vmatmul.mubr.bf16.gmra.mxu0 %v694
      %v734 = vpop.f32.mrf.mxu0
      %v735 = vadd.f32 %v690, %v734
      %v736 = vpop.f32.mrf.mxu0
      %v737 = vpop.f32.mrf.mxu0
      %v738 = vpop.f32.mrf.mxu0
      %739 = vdwg.mxu0
      %v740 = vadd.f32 %v735, %v488
      %v741 = vsel %vm557, %v740, 0.0
      %742 = vadd.xlane.f32.xlu0 %v741
      %v743 = vpop.xlane.xlu0 %742
      %v744 = vmul.f32 %v743, %v561
      %v745 = vsub.f32 %v740, %v744
      %v746 = vmul.f32 %v745, %v745
      %v747 = vsel %vm557, %v746, 0.0
      %748 = vadd.xlane.f32.xlu0 %v747
      %v749 = vpop.xlane.xlu0 %748
      %v750 = vmul.f32 %v749, %v561
      %v751 = vadd.f32 %v750, 1e-05
      %v752 = vrsqrt.pop %v751
      %v753 = vmul.f32 %v745, %v752
      %v754 = vmul.f32 %v753, %v576
      %v755 = vadd.f32 %v754, %v583
      %756 = vrot.lane.b32.xlu0 %v489, 64
      %v757 = vpop.permute.xlu0 %756
      %v759 = vadd.f32 %v755, %v757
      %v760 = vpack.c.bf16 %v759, %v759
      %v762 = vunpack.c.l.b16 %v760
      %v763 = vpack.c.b16 %v762, %v762
      %764 = vrot.lane.b32.xlu0 %v763, 64
      %v765 = vpop.permute.xlu0 %764
      %vm767 = vcmask 781824
      %768 = vst.msk [vmem:[%s486] sm:$0xf] %vm767, %v765
      %p769 = scmp.lt.s32.totalorder %s24, 1
      %s770 = scalar_select %p769, %s24, 1
      %s771 = smul.addr %s770, 4
      %s772 = scalar_lea.vmem %s13, %s771
      // Predicated region
      $region73: #{low_level_transformer_forward.6} parent=71 // pred_check
        %p773 = pneg %p335
      $region74: #{low_level_transformer_forward.6} parent=71 // pred_check_branch
        %775 = sbr.rel (%p773) target = $region76
      $region75: #{low_level_transformer_forward.6} parent=71 // pred_region
        _
      $region76: #{low_level_transformer_forward.6} parent=71 // pred_fallthru
        _
    $region72: #{low_level_transformer_forward.6} parent=5 // pred_fallthru
      _
    %p776 = scmp.le.s32.totalorder 2, %s19
    // Predicated region
    $region77: #{low_level_transformer_forward.6} parent=5 // pred_check
      %p777 = pneg %p776
    $region78: #{low_level_transformer_forward.6} parent=5 // pred_check_branch
      %779 = sbr.rel (%p777) target = $region80
    $region79: #{low_level_transformer_forward.6} parent=5 // pred_region
      %s780 = ssub.s32 %s19, 2
      // Predicated region
      $region81: #{low_level_transformer_forward.6} parent=79 // pred_check
        %p781 = pneg %p341
      $region82: #{low_level_transformer_forward.6} parent=79 // pred_check_branch
        %783 = sbr.rel (%p781) target = $region84
      $region83: #{low_level_transformer_forward.6} parent=79 // pred_region
        %p784 = scmp.lt.s32.totalorder %s25, 1
        %s785 = scalar_select %p784, %s25, 1
        %s786 = smul.addr %s785, 4
        %s787 = scalar_lea.vmem %s13, %s786
      $region84: #{low_level_transformer_forward.6} parent=79 // pred_fallthru
        _
    $region80: #{low_level_transformer_forward.6} parent=5 // pred_fallthru
      _
  $region6: #{low_level_transformer_forward.6} parent=0 // loop_footer
    %s23 = sadd.s32 1, %s19
  $region7: #{low_level_transformer_forward.6} parent=0 // loop_footer_branch
    %18 = sbr.rel target = $region3
  $region8: #{low_level_transformer_forward.6} parent=0 // loop_exit
    _

// kernel: low_level_transformer_forward.11
$region0: #{low_level_transformer_forward.11}
  #allocation0 [shape = 'u32[]', space=smem, size = 0x4, offset = 0x4, fixed_abs, tag = 'smem constant byte address 0x4 - core index']
  #allocation1 [shape = 'u32[144,128]{1,0:T(1,128)}', space=vmem, size = 0x12000, scoped, tag = 'internal scratch']
  %s0 = inlined_call_operand.vmem [shape: bf16[16,32], index: 0, kind: input, shape index: {}]
  %s1 = inlined_call_operand.vmem [shape: f32[1,32], index: 1, kind: input, shape index: {}]
  %s2 = inlined_call_operand.vmem [shape: f32[1,32], index: 2, kind: input, shape index: {}]
  %s3 = inlined_call_operand.vmem [shape: bf16[32,128], index: 3, kind: input, shape index: {}]
  %s4 = inlined_call_operand.vmem [shape: f32[1,128], index: 4, kind: input, shape index: {}]
  %s5 = inlined_call_operand.vmem [shape: f32[16,128], index: 5, kind: output, shape index: {}]
  %s6 = sld [smem:[#allocation0]]
  $region53: #{low_level_transformer_forward.11} parent=0
    _
  %s8 = ssub.s32 1, %s6
  %s9 = scalar_select 0, %s8, %s6
  loop: start=0, step=1, limit=4
  $region2: #{low_level_transformer_forward.11} parent=0 // loop_pre_header
    _
  $region3: #{low_level_transformer_forward.11} parent=0 // loop_header
    %s11 = sphi 0, %s15
    %p12 = scmp.ge.s32.totalorder %s11, 4
    %s21 = sphi 0, %s23
    %s24 = sphi 0, %s21
    %s25 = sphi 0, %s24
    %s41 = sphi 0, %s25
    %s45 = sphi 0, %s45
    %s47 = sphi 0, %s45
    %s48 = sphi 0, %s47
    %s62 = sphi 0, %s48
    %s66 = sphi 0, %s66
    %s68 = sphi 0, %s66
    %s69 = sphi 0, %s68
    %s83 = sphi 0, %s69
    %s87 = sphi 0, %s87
    %s89 = sphi 0, %s87
    %s90 = sphi 0, %s89
    %s104 = sphi 0, %s90
    %s108 = sphi 0, %s108
    %s110 = sphi 0, %s108
    %s111 = sphi 0, %s110
    %s125 = sphi 0, %s111
    %s131 = sphi 0, %s133
    %s134 = sphi 0, %s131
    %s135 = sphi 0, %s134
    %s151 = sphi 0, %s135
  $region4: #{low_level_transformer_forward.11} parent=0 // loop_header_branch
    %14 = sbr.rel (%p12) target = $region8
  $region5: #{low_level_transformer_forward.11} parent=0 // loop_body
    %s16 = ssub.s32 %s11, 1
    %s17 = ssub.s32 %s11, 2
    %s18 = sadd.s32 %s11, 1
    %s19 = ssub.s32 %s11, %s18
    %p20 = scmp.eq.s32.totalorder %s19, 0
    %s22 = sadd.s32 %s21, 1
    %s23 = scalar_select %p20, %s21, %s22
    %p26 = pneg %p20
    %p27 = scmp.eq.s32.totalorder %s11, 1
    %p28 = por %p26, %p27
    %p29 = scmp.ne.s32.totalorder %s21, %s24
    %p30 = scmp.eq.s32.totalorder %s11, 0
    %p31 = por %p29, %p30
    %p32 = scmp.ne.s32.totalorder %s21, %s24
    %p33 = scmp.eq.s32.totalorder %s16, 1
    %p34 = por %p32, %p33
    %p35 = scmp.ne.s32.totalorder %s24, %s25
    %p36 = scmp.eq.s32.totalorder %s16, 0
    %p37 = por %p35, %p36
    %p38 = scmp.ne.s32.totalorder %s24, %s25
    %p39 = scmp.eq.s32.totalorder %s17, 1
    %p40 = por %p38, %p39
    %p42 = scmp.ne.s32.totalorder %s25, %s41
    %p43 = scmp.eq.s32.totalorder %s17, 0
    %p44 = por %p42, %p43
    %s46 = sadd.s32 %s45, 1
    %p49 = scmp.eq.s32.totalorder %s11, 1
    %p50 = scmp.ne.s32.totalorder %s45, %s47
    %p51 = scmp.eq.s32.totalorder %s11, 0
    %p52 = por %p50, %p51
    %p53 = scmp.ne.s32.totalorder %s45, %s47
    %p54 = scmp.eq.s32.totalorder %s16, 1
    %p55 = por %p53, %p54
    %p56 = scmp.ne.s32.totalorder %s47, %s48
    %p57 = scmp.eq.s32.totalorder %s16, 0
    %p58 = por %p56, %p57
    %p59 = scmp.ne.s32.totalorder %s47, %s48
    %p60 = scmp.eq.s32.totalorder %s17, 1
    %p61 = por %p59, %p60
    %p63 = scmp.ne.s32.totalorder %s48, %s62
    %p64 = scmp.eq.s32.totalorder %s17, 0
    %p65 = por %p63, %p64
    %s67 = sadd.s32 %s66, 1
    %p70 = scmp.eq.s32.totalorder %s11, 1
    %p71 = scmp.ne.s32.totalorder %s66, %s68
    %p72 = scmp.eq.s32.totalorder %s11, 0
    %p73 = por %p71, %p72
    %p74 = scmp.ne.s32.totalorder %s66, %s68
    %p75 = scmp.eq.s32.totalorder %s16, 1
    %p76 = por %p74, %p75
    %p77 = scmp.ne.s32.totalorder %s68, %s69
    %p78 = scmp.eq.s32.totalorder %s16, 0
    %p79 = por %p77, %p78
    %p80 = scmp.ne.s32.totalorder %s68, %s69
    %p81 = scmp.eq.s32.totalorder %s17, 1
    %p82 = por %p80, %p81
    %p84 = scmp.ne.s32.totalorder %s69, %s83
    %p85 = scmp.eq.s32.totalorder %s17, 0
    %p86 = por %p84, %p85
    %s88 = sadd.s32 %s87, 1
    %p91 = scmp.eq.s32.totalorder %s11, 1
    %p92 = scmp.ne.s32.totalorder %s87, %s89
    %p93 = scmp.eq.s32.totalorder %s11, 0
    %p94 = por %p92, %p93
    %p95 = scmp.ne.s32.totalorder %s87, %s89
    %p96 = scmp.eq.s32.totalorder %s16, 1
    %p97 = por %p95, %p96
    %p98 = scmp.ne.s32.totalorder %s89, %s90
    %p99 = scmp.eq.s32.totalorder %s16, 0
    %p100 = por %p98, %p99
    %p101 = scmp.ne.s32.totalorder %s89, %s90
    %p102 = scmp.eq.s32.totalorder %s17, 1
    %p103 = por %p101, %p102
    %p105 = scmp.ne.s32.totalorder %s90, %s104
    %p106 = scmp.eq.s32.totalorder %s17, 0
    %p107 = por %p105, %p106
    %s109 = sadd.s32 %s108, 1
    %p112 = scmp.eq.s32.totalorder %s11, 1
    %p113 = scmp.ne.s32.totalorder %s108, %s110
    %p114 = scmp.eq.s32.totalorder %s11, 0
    %p115 = por %p113, %p114
    %p116 = scmp.ne.s32.totalorder %s108, %s110
    %p117 = scmp.eq.s32.totalorder %s16, 1
    %p118 = por %p116, %p117
    %p119 = scmp.ne.s32.totalorder %s110, %s111
    %p120 = scmp.eq.s32.totalorder %s16, 0
    %p121 = por %p119, %p120
    %p122 = scmp.ne.s32.totalorder %s110, %s111
    %p123 = scmp.eq.s32.totalorder %s17, 1
    %p124 = por %p122, %p123
    %p126 = scmp.ne.s32.totalorder %s111, %s125
    %p127 = scmp.eq.s32.totalorder %s17, 0
    %p128 = por %p126, %p127
    %s129 = ssub.s32 %s11, %s18
    %p130 = scmp.eq.s32.totalorder %s129, 0
    %s132 = sadd.s32 %s131, 1
    %s133 = scalar_select %p130, %s131, %s132
    %p136 = pneg %p130
    %p137 = scmp.eq.s32.totalorder %s11, 1
    %p138 = por %p136, %p137
    %p139 = scmp.ne.s32.totalorder %s131, %s134
    %p140 = scmp.eq.s32.totalorder %s11, 0
    %p141 = por %p139, %p140
    %p142 = scmp.ne.s32.totalorder %s131, %s134
    %p143 = scmp.eq.s32.totalorder %s16, 1
    %p144 = por %p142, %p143
    %p145 = scmp.ne.s32.totalorder %s134, %s135
    %p146 = scmp.eq.s32.totalorder %s16, 0
    %p147 = por %p145, %p146
    %p148 = scmp.ne.s32.totalorder %s134, %s135
    %p149 = scmp.eq.s32.totalorder %s17, 1
    %p150 = por %p148, %p149
    %p152 = scmp.ne.s32.totalorder %s135, %s151
    %p153 = scmp.eq.s32.totalorder %s17, 0
    %p154 = por %p152, %p153
    %p155 = scmp.le.s32.totalorder 1, %s11
    %p156 = scmp.lt.s32.totalorder %s11, 3
    %p157 = pnand %p155, %p156
    %p158 = pneg %p157
    // Predicated region
    $region9: #{low_level_transformer_forward.11} parent=5 // pred_check
      _
    $region10: #{low_level_transformer_forward.11} parent=5 // pred_check_branch
      %160 = sbr.rel (%p157) target = $region12
    $region11: #{low_level_transformer_forward.11} parent=5 // pred_region
      %s161 = ssub.s32 %s11, 1
      // Predicated region
      $region13: #{low_level_transformer_forward.11} parent=11 // pred_check
        %p162 = pneg %p58
      $region14: #{low_level_transformer_forward.11} parent=11 // pred_check_branch
        %164 = sbr.rel (%p162) target = $region16
      $region15: #{low_level_transformer_forward.11} parent=11 // pred_region
        _
      $region16: #{low_level_transformer_forward.11} parent=11 // pred_fallthru
        _
      // Predicated region
      $region17: #{low_level_transformer_forward.11} parent=11 // pred_check
        %p165 = pneg %p79
      $region18: #{low_level_transformer_forward.11} parent=11 // pred_check_branch
        %167 = sbr.rel (%p165) target = $region20
      $region19: #{low_level_transformer_forward.11} parent=11 // pred_region
        _
      $region20: #{low_level_transformer_forward.11} parent=11 // pred_fallthru
        _
      // Predicated region
      $region21: #{low_level_transformer_forward.11} parent=11 // pred_check
        %p168 = pneg %p100
      $region22: #{low_level_transformer_forward.11} parent=11 // pred_check_branch
        %170 = sbr.rel (%p168) target = $region24
      $region23: #{low_level_transformer_forward.11} parent=11 // pred_region
        _
      $region24: #{low_level_transformer_forward.11} parent=11 // pred_fallthru
        _
      // Predicated region
      $region25: #{low_level_transformer_forward.11} parent=11 // pred_check
        %p171 = pneg %p121
      $region26: #{low_level_transformer_forward.11} parent=11 // pred_check_branch
        %173 = sbr.rel (%p171) target = $region28
      $region27: #{low_level_transformer_forward.11} parent=11 // pred_region
        _
      $region28: #{low_level_transformer_forward.11} parent=11 // pred_fallthru
        _
    $region12: #{low_level_transformer_forward.11} parent=5 // pred_fallthru
      _
    %p174 = scmp.lt.s32.totalorder %s11, 2
    // Predicated region
    $region29: #{low_level_transformer_forward.11} parent=5 // pred_check
      %p175 = pneg %p174
    $region30: #{low_level_transformer_forward.11} parent=5 // pred_check_branch
      %177 = sbr.rel (%p175) target = $region32
    $region31: #{low_level_transformer_forward.11} parent=5 // pred_region
      // Predicated region
      $region33: #{low_level_transformer_forward.11} parent=31 // pred_check
        %p178 = pneg %p31
      $region34: #{low_level_transformer_forward.11} parent=31 // pred_check_branch
        %180 = sbr.rel (%p178) target = $region36
      $region35: #{low_level_transformer_forward.11} parent=31 // pred_region
        %p181 = scmp.lt.s32.totalorder %s11, 1
        %s182 = scalar_select %p181, %s11, 1
        %s183 = smul.addr %s182, 4
        %s184 = scalar_lea.vmem %s0, %s183
      $region36: #{low_level_transformer_forward.11} parent=31 // pred_fallthru
        _
    $region32: #{low_level_transformer_forward.11} parent=5 // pred_fallthru
      _
    %p185 = scmp.le.s32.totalorder 1, %s11
    %p186 = scmp.lt.s32.totalorder %s11, 3
    %p187 = pnand %p185, %p186
    %p188 = pneg %p187
    // Predicated region
    $region37: #{low_level_transformer_forward.11} parent=5 // pred_check
      _
    $region38: #{low_level_transformer_forward.11} parent=5 // pred_check_branch
      %190 = sbr.rel (%p187) target = $region40
    $region39: #{low_level_transformer_forward.11} parent=5 // pred_region
      %s191 = ssub.s32 %s11, 1
      %p192 = scmp.lt.s32.totalorder %s16, 1
      %s193 = scalar_select %p192, %s16, 1
      %s194 = smul.addr %s193, 4
      %s195 = scalar_lea.vmem %s0, %s194
      %p196 = pneg %p37
      %p197 = pneg %p34
      %p198 = pneg %p58
      %p199 = pneg %p55
      %p200 = pneg %p79
      %p201 = pneg %p76
      %p202 = pneg %p100
      %p203 = pneg %p97
      %p204 = pneg %p121
      %p205 = pneg %p118
      %p206 = pneg %p147
      %p207 = pneg %p144
      %p208 = scmp.lt.s32.totalorder %s16, 1
      %s209 = scalar_select %p208, %s16, 1
      %s210 = smul.addr %s209, 8
      %s211 = scalar_lea.vmem %s5, %s210
      %p212 = scmp.lt.s32.totalorder %s16, 1
      %s213 = scalar_select %p212, %s16, 1
      %s214 = smul.addr %s213, 4
      %s215 = scalar_lea.vmem %s0, %s214
      %p216 = scmp.lt.s32.totalorder %s16, 1
      %s217 = scalar_select %p216, %s16, 1
      %s218 = smul.addr %s217, 8
      %s219 = scalar_lea.vmem %s5, %s218
      %v221 = vld [vmem:[%s215] sm:$0xf]
      %v222 = vunpack.c.l.bf16 %v221
      %v223 = vld [vmem:[%s1] sm:$0x1]
      %v224 = vld [vmem:[%s2] sm:$0x1]
      %vm225 = vcmask 261120
      %v226 = vsel %vm225, %v222, 0.0
      %227 = vadd.xlane.f32.xlu0 %v226
      %v228 = vpop.xlane.xlu0 %227
      %v229 = vrcp.pop 32.0
      %v230 = vmul.f32 %v228, %v229
      %v231 = vsub.f32 %v222, %v230
      %v232 = vmul.f32 %v231, %v231
      %v233 = vsel %vm225, %v232, 0.0
      %234 = vadd.xlane.f32.xlu0 %v233
      %v235 = vpop.xlane.xlu0 %234
      %v236 = vmul.f32 %v235, %v229
      %v237 = vadd.f32 %v236, 1e-05
      %v238 = vrsqrt.pop %v237
      %v239 = vmul.f32 %v231, %v238
      %v241 = vlaneseq
      %v242 = vshrl.u32 %v241, 7
      %v243 = vsub.s32 0, %v242
      %v244 = vrot.slane %v223, %v243
      %v246 = vmul.f32 %v239, %v244
      %v248 = vlaneseq
      %v249 = vshrl.u32 %v248, 7
      %v250 = vsub.s32 0, %v249
      %v251 = vrot.slane %v224, %v250
      %v253 = vadd.f32 %v246, %v251
      %v254 = vpack.c.bf16 %v253, %v253
      %v255 = vld [vmem:[%s3] sm:$0xf]
      %v256 = vld [vmem:[%s3 + $0x4] sm:$0xf]
      %v257 = vld [vmem:[%s3 + $0x8] sm:$0xf]
      %v258 = vld [vmem:[%s3 + $0xc] sm:$0xf]
      %v259 = vld [vmem:[%s4] sm:$0x1]
      %v261 = vlaneseq
      %v262 = vshrl.u32 %v261, 7
      %v263 = vsub.s32 0, %v262
      %v264 = vrot.slane %v259, %v263
      %v270 = vunpack.c.l.b16 %v255
      %v271 = vunpack.c.l.b16 %v256
      %v272 = vunpack.c.l.b16 %v257
      %v273 = vunpack.c.l.b16 %v258
      %v274 = vpack.c.b16 %v271, %v270
      %v275 = vpack.c.b16 %v273, %v272
      %v279 = vsel %vm225, %v254, 0
      %281 = vmatprep.subr.bf16.mxu0 0
      %282 = vmatpush1.bf16.msra.mxu0 0
      %283 = vmatprep.subr.bf16.mxu0 0
      %284 = vmatpush1.bf16.msra.mxu0 0
      %285 = vmatprep.subr.bf16.mxu0 0
      %286 = vmatpush1.bf16.msra.mxu0 0
      %287 = vmatprep.subr.bf16.mxu0 0
      %288 = vmatpush1.bf16.msra.mxu0 0
      %289 = vmatprep.subr.bf16.mxu0 0
      %290 = vmatpush1.bf16.msra.mxu0 0
      %291 = vmatprep.subr.bf16.mxu0 0
      %292 = vmatpush1.bf16.msra.mxu0 0
      %293 = vmatprep.subr.bf16.mxu0 0
      %294 = vmatpush1.bf16.msra.mxu0 %v275
      %295 = vmatprep.subr.bf16.mxu0 0
      %296 = vmatpush1.bf16.msra.mxu0 %v274
      %297 = vmatprep.subr.bf16.mxu0 0
      %298 = vmatpush2.bf16.msra.mxu0 0
      %299 = vmatprep.subr.bf16.mxu0 0
      %300 = vmatpush2.bf16.msra.mxu0 0
      %301 = vmatprep.subr.bf16.mxu0 0
      %302 = vmatpush2.bf16.msra.mxu0 0
      %303 = vmatprep.subr.bf16.mxu0 0
      %304 = vmatpush2.bf16.msra.mxu0 0
      %305 = vmatprep.subr.bf16.mxu0 0
      %306 = vmatpush2.bf16.msra.mxu0 0
      %307 = vmatprep.subr.bf16.mxu0 0
      %308 = vmatpush2.bf16.msra.mxu0 0
      %309 = vmatprep.subr.bf16.mxu0 0
      %310 = vmatpush2.bf16.msra.mxu0 0
      %311 = vmatprep.subr.bf16.mxu0 0
      %312 = vmatpush2.bf16.msra.mxu0 0
      %313 = vmatprep.mubr.bf16.mxu0 0
      %314 = vmatmul.mubr.bf16.gmra.mxu0 %v279
      %v315 = vpop.f32.mrf.mxu0
      %v316 = vadd.f32 %v264, %v315
      %v317 = vpop.f32.mrf.mxu0
      %v318 = vpop.f32.mrf.mxu0
      %v319 = vpop.f32.mrf.mxu0
      %320 = vdwg.mxu0
      %v321 = vtanh.pop %v316
      %322 = vst [vmem:[%s219] sm:$0xff] %v321
      %p323 = scmp.lt.s32.totalorder %s16, 1
      %s324 = scalar_select %p323, %s16, 1
      %s325 = smul.addr %s324, 8
      %s326 = scalar_lea.vmem %s5, %s325
      // Predicated region
      $region41: #{low_level_transformer_forward.11} parent=39 // pred_check
        %p327 = pneg %p144
      $region42: #{low_level_transformer_forward.11} parent=39 // pred_check_branch
        %329 = sbr.rel (%p327) target = $region44
      $region43: #{low_level_transformer_forward.11} parent=39 // pred_region
        _
      $region44: #{low_level_transformer_forward.11} parent=39 // pred_fallthru
        _
    $region40: #{low_level_transformer_forward.11} parent=5 // pred_fallthru
      _
    %p330 = scmp.le.s32.totalorder 2, %s11
    // Predicated region
    $region45: #{low_level_transformer_forward.11} parent=5 // pred_check
      %p331 = pneg %p330
    $region46: #{low_level_transformer_forward.11} parent=5 // pred_check_branch
      %333 = sbr.rel (%p331) target = $region48
    $region47: #{low_level_transformer_forward.11} parent=5 // pred_region
      %s334 = ssub.s32 %s11, 2
      // Predicated region
      $region49: #{low_level_transformer_forward.11} parent=47 // pred_check
        %p335 = pneg %p150
      $region50: #{low_level_transformer_forward.11} parent=47 // pred_check_branch
        %337 = sbr.rel (%p335) target = $region52
      $region51: #{low_level_transformer_forward.11} parent=47 // pred_region
        %p338 = scmp.lt.s32.totalorder %s17, 1
        %s339 = scalar_select %p338, %s17, 1
        %s340 = smul.addr %s339, 8
        %s341 = scalar_lea.vmem %s5, %s340
      $region52: #{low_level_transformer_forward.11} parent=47 // pred_fallthru
        _
    $region48: #{low_level_transformer_forward.11} parent=5 // pred_fallthru
      _
  $region6: #{low_level_transformer_forward.11} parent=0 // loop_footer
    %s15 = sadd.s32 1, %s11
  $region7: #{low_level_transformer_forward.11} parent=0 // loop_footer_branch
    %10 = sbr.rel target = $region3
  $region8: #{low_level_transformer_forward.11} parent=0 // loop_exit
    _

// kernel: low_level_transformer_forward.7
$region0: #{low_level_transformer_forward.7}
  #allocation0 [shape = 'u32[]', space=smem, size = 0x4, offset = 0x4, fixed_abs, tag = 'smem constant byte address 0x4 - core index']
  #allocation1 [shape = 'u32[144,128]{1,0:T(1,128)}', space=vmem, size = 0x12000, scoped, tag = 'internal scratch']
  #allocation2 [shape = 'bf16[24,32]{1,0:T(8,128)(2,1)}', space=vmem, size = 0x1800, scoped, tag = 'scratch operand']
  %s0 = inlined_call_operand.vmem [shape: bf16[2,24,32], index: 0, kind: input, shape index: {}]
  %s1 = inlined_call_operand.vmem [shape: f32[1,32], index: 1, kind: input, shape index: {}]
  %s2 = inlined_call_operand.vmem [shape: f32[1,32], index: 2, kind: input, shape index: {}]
  %s3 = inlined_call_operand.vmem [shape: bf16[32,96], index: 3, kind: input, shape index: {}]
  %s4 = inlined_call_operand.vmem [shape: f32[1,96], index: 4, kind: input, shape index: {}]
  %s5 = inlined_call_operand.vmem [shape: bf16[32,32], index: 5, kind: input, shape index: {}]
  %s6 = inlined_call_operand.vmem [shape: f32[1,32], index: 6, kind: input, shape index: {}]
  %s7 = inlined_call_operand.vmem [shape: bf16[2,24,32], index: 7, kind: output, shape index: {}]
  %s8 = sld [smem:[#allocation0]]
  $region61: #{low_level_transformer_forward.7} parent=0
    _
  %s10 = ssub.s32 1, %s8
  %s11 = scalar_select 0, %s10, %s8
  loop: start=0, step=1, limit=4
  $region2: #{low_level_transformer_forward.7} parent=0 // loop_pre_header
    _
  $region3: #{low_level_transformer_forward.7} parent=0 // loop_header
    %s13 = sphi 0, %s17
    %p14 = scmp.ge.s32.totalorder %s13, 4
    %s23 = sphi 0, %s25
    %s26 = sphi 0, %s23
    %s27 = sphi 0, %s26
    %s43 = sphi 0, %s27
    %s47 = sphi 0, %s47
    %s49 = sphi 0, %s47
    %s50 = sphi 0, %s49
    %s64 = sphi 0, %s50
    %s68 = sphi 0, %s68
    %s70 = sphi 0, %s68
    %s71 = sphi 0, %s70
    %s85 = sphi 0, %s71
    %s89 = sphi 0, %s89
    %s91 = sphi 0, %s89
    %s92 = sphi 0, %s91
    %s106 = sphi 0, %s92
    %s110 = sphi 0, %s110
    %s112 = sphi 0, %s110
    %s113 = sphi 0, %s112
    %s127 = sphi 0, %s113
    %s131 = sphi 0, %s131
    %s133 = sphi 0, %s131
    %s134 = sphi 0, %s133
    %s148 = sphi 0, %s134
    %s152 = sphi 0, %s152
    %s154 = sphi 0, %s152
    %s155 = sphi 0, %s154
    %s169 = sphi 0, %s155
    %s175 = sphi 0, %s177
    %s178 = sphi 0, %s175
    %s179 = sphi 0, %s178
    %s195 = sphi 0, %s179
  $region4: #{low_level_transformer_forward.7} parent=0 // loop_header_branch
    %16 = sbr.rel (%p14) target = $region8
  $region5: #{low_level_transformer_forward.7} parent=0 // loop_body
    %s18 = ssub.s32 %s13, 1
    %s19 = ssub.s32 %s13, 2
    %s20 = sadd.s32 %s13, 1
    %s21 = ssub.s32 %s13, %s20
    %p22 = scmp.eq.s32.totalorder %s21, 0
    %s24 = sadd.s32 %s23, 1
    %s25 = scalar_select %p22, %s23, %s24
    %p28 = pneg %p22
    %p29 = scmp.eq.s32.totalorder %s13, 1
    %p30 = por %p28, %p29
    %p31 = scmp.ne.s32.totalorder %s23, %s26
    %p32 = scmp.eq.s32.totalorder %s13, 0
    %p33 = por %p31, %p32
    %p34 = scmp.ne.s32.totalorder %s23, %s26
    %p35 = scmp.eq.s32.totalorder %s18, 1
    %p36 = por %p34, %p35
    %p37 = scmp.ne.s32.totalorder %s26, %s27
    %p38 = scmp.eq.s32.totalorder %s18, 0
    %p39 = por %p37, %p38
    %p40 = scmp.ne.s32.totalorder %s26, %s27
    %p41 = scmp.eq.s32.totalorder %s19, 1
    %p42 = por %p40, %p41
    %p44 = scmp.ne.s32.totalorder %s27, %s43
    %p45 = scmp.eq.s32.totalorder %s19, 0
    %p46 = por %p44, %p45
    %s48 = sadd.s32 %s47, 1
    %p51 = scmp.eq.s32.totalorder %s13, 1
    %p52 = scmp.ne.s32.totalorder %s47, %s49
    %p53 = scmp.eq.s32.totalorder %s13, 0
    %p54 = por %p52, %p53
    %p55 = scmp.ne.s32.totalorder %s47, %s49
    %p56 = scmp.eq.s32.totalorder %s18, 1
    %p57 = por %p55, %p56
    %p58 = scmp.ne.s32.totalorder %s49, %s50
    %p59 = scmp.eq.s32.totalorder %s18, 0
    %p60 = por %p58, %p59
    %p61 = scmp.ne.s32.totalorder %s49, %s50
    %p62 = scmp.eq.s32.totalorder %s19, 1
    %p63 = por %p61, %p62
    %p65 = scmp.ne.s32.totalorder %s50, %s64
    %p66 = scmp.eq.s32.totalorder %s19, 0
    %p67 = por %p65, %p66
    %s69 = sadd.s32 %s68, 1
    %p72 = scmp.eq.s32.totalorder %s13, 1
    %p73 = scmp.ne.s32.totalorder %s68, %s70
    %p74 = scmp.eq.s32.totalorder %s13, 0
    %p75 = por %p73, %p74
    %p76 = scmp.ne.s32.totalorder %s68, %s70
    %p77 = scmp.eq.s32.totalorder %s18, 1
    %p78 = por %p76, %p77
    %p79 = scmp.ne.s32.totalorder %s70, %s71
    %p80 = scmp.eq.s32.totalorder %s18, 0
    %p81 = por %p79, %p80
    %p82 = scmp.ne.s32.totalorder %s70, %s71
    %p83 = scmp.eq.s32.totalorder %s19, 1
    %p84 = por %p82, %p83
    %p86 = scmp.ne.s32.totalorder %s71, %s85
    %p87 = scmp.eq.s32.totalorder %s19, 0
    %p88 = por %p86, %p87
    %s90 = sadd.s32 %s89, 1
    %p93 = scmp.eq.s32.totalorder %s13, 1
    %p94 = scmp.ne.s32.totalorder %s89, %s91
    %p95 = scmp.eq.s32.totalorder %s13, 0
    %p96 = por %p94, %p95
    %p97 = scmp.ne.s32.totalorder %s89, %s91
    %p98 = scmp.eq.s32.totalorder %s18, 1
    %p99 = por %p97, %p98
    %p100 = scmp.ne.s32.totalorder %s91, %s92
    %p101 = scmp.eq.s32.totalorder %s18, 0
    %p102 = por %p100, %p101
    %p103 = scmp.ne.s32.totalorder %s91, %s92
    %p104 = scmp.eq.s32.totalorder %s19, 1
    %p105 = por %p103, %p104
    %p107 = scmp.ne.s32.totalorder %s92, %s106
    %p108 = scmp.eq.s32.totalorder %s19, 0
    %p109 = por %p107, %p108
    %s111 = sadd.s32 %s110, 1
    %p114 = scmp.eq.s32.totalorder %s13, 1
    %p115 = scmp.ne.s32.totalorder %s110, %s112
    %p116 = scmp.eq.s32.totalorder %s13, 0
    %p117 = por %p115, %p116
    %p118 = scmp.ne.s32.totalorder %s110, %s112
    %p119 = scmp.eq.s32.totalorder %s18, 1
    %p120 = por %p118, %p119
    %p121 = scmp.ne.s32.totalorder %s112, %s113
    %p122 = scmp.eq.s32.totalorder %s18, 0
    %p123 = por %p121, %p122
    %p124 = scmp.ne.s32.totalorder %s112, %s113
    %p125 = scmp.eq.s32.totalorder %s19, 1
    %p126 = por %p124, %p125
    %p128 = scmp.ne.s32.totalorder %s113, %s127
    %p129 = scmp.eq.s32.totalorder %s19, 0
    %p130 = por %p128, %p129
    %s132 = sadd.s32 %s131, 1
    %p135 = scmp.eq.s32.totalorder %s13, 1
    %p136 = scmp.ne.s32.totalorder %s131, %s133
    %p137 = scmp.eq.s32.totalorder %s13, 0
    %p138 = por %p136, %p137
    %p139 = scmp.ne.s32.totalorder %s131, %s133
    %p140 = scmp.eq.s32.totalorder %s18, 1
    %p141 = por %p139, %p140
    %p142 = scmp.ne.s32.totalorder %s133, %s134
    %p143 = scmp.eq.s32.totalorder %s18, 0
    %p144 = por %p142, %p143
    %p145 = scmp.ne.s32.totalorder %s133, %s134
    %p146 = scmp.eq.s32.totalorder %s19, 1
    %p147 = por %p145, %p146
    %p149 = scmp.ne.s32.totalorder %s134, %s148
    %p150 = scmp.eq.s32.totalorder %s19, 0
    %p151 = por %p149, %p150
    %s153 = sadd.s32 %s152, 1
    %p156 = scmp.eq.s32.totalorder %s13, 1
    %p157 = scmp.ne.s32.totalorder %s152, %s154
    %p158 = scmp.eq.s32.totalorder %s13, 0
    %p159 = por %p157, %p158
    %p160 = scmp.ne.s32.totalorder %s152, %s154
    %p161 = scmp.eq.s32.totalorder %s18, 1
    %p162 = por %p160, %p161
    %p163 = scmp.ne.s32.totalorder %s154, %s155
    %p164 = scmp.eq.s32.totalorder %s18, 0
    %p165 = por %p163, %p164
    %p166 = scmp.ne.s32.totalorder %s154, %s155
    %p167 = scmp.eq.s32.totalorder %s19, 1
    %p168 = por %p166, %p167
    %p170 = scmp.ne.s32.totalorder %s155, %s169
    %p171 = scmp.eq.s32.totalorder %s19, 0
    %p172 = por %p170, %p171
    %s173 = ssub.s32 %s13, %s20
    %p174 = scmp.eq.s32.totalorder %s173, 0
    %s176 = sadd.s32 %s175, 1
    %s177 = scalar_select %p174, %s175, %s176
    %p180 = pneg %p174
    %p181 = scmp.eq.s32.totalorder %s13, 1
    %p182 = por %p180, %p181
    %p183 = scmp.ne.s32.totalorder %s175, %s178
    %p184 = scmp.eq.s32.totalorder %s13, 0
    %p185 = por %p183, %p184
    %p186 = scmp.ne.s32.totalorder %s175, %s178
    %p187 = scmp.eq.s32.totalorder %s18, 1
    %p188 = por %p186, %p187
    %p189 = scmp.ne.s32.totalorder %s178, %s179
    %p190 = scmp.eq.s32.totalorder %s18, 0
    %p191 = por %p189, %p190
    %p192 = scmp.ne.s32.totalorder %s178, %s179
    %p193 = scmp.eq.s32.totalorder %s19, 1
    %p194 = por %p192, %p193
    %p196 = scmp.ne.s32.totalorder %s179, %s195
    %p197 = scmp.eq.s32.totalorder %s19, 0
    %p198 = por %p196, %p197
    %p199 = scmp.le.s32.totalorder 1, %s13
    %p200 = scmp.lt.s32.totalorder %s13, 3
    %p201 = pnand %p199, %p200
    %p202 = pneg %p201
    // Predicated region
    $region9: #{low_level_transformer_forward.7} parent=5 // pred_check
      _
    $region10: #{low_level_transformer_forward.7} parent=5 // pred_check_branch
      %204 = sbr.rel (%p201) target = $region12
    $region11: #{low_level_transformer_forward.7} parent=5 // pred_region
      %s205 = ssub.s32 %s13, 1
      // Predicated region
      $region13: #{low_level_transformer_forward.7} parent=11 // pred_check
        %p206 = pneg %p60
      $region14: #{low_level_transformer_forward.7} parent=11 // pred_check_branch
        %208 = sbr.rel (%p206) target = $region16
      $region15: #{low_level_transformer_forward.7} parent=11 // pred_region
        _
      $region16: #{low_level_transformer_forward.7} parent=11 // pred_fallthru
        _
      // Predicated region
      $region17: #{low_level_transformer_forward.7} parent=11 // pred_check
        %p209 = pneg %p81
      $region18: #{low_level_transformer_forward.7} parent=11 // pred_check_branch
        %211 = sbr.rel (%p209) target = $region20
      $region19: #{low_level_transformer_forward.7} parent=11 // pred_region
        _
      $region20: #{low_level_transformer_forward.7} parent=11 // pred_fallthru
        _
      // Predicated region
      $region21: #{low_level_transformer_forward.7} parent=11 // pred_check
        %p212 = pneg %p102
      $region22: #{low_level_transformer_forward.7} parent=11 // pred_check_branch
        %214 = sbr.rel (%p212) target = $region24
      $region23: #{low_level_transformer_forward.7} parent=11 // pred_region
        _
      $region24: #{low_level_transformer_forward.7} parent=11 // pred_fallthru
        _
      // Predicated region
      $region25: #{low_level_transformer_forward.7} parent=11 // pred_check
        %p215 = pneg %p123
      $region26: #{low_level_transformer_forward.7} parent=11 // pred_check_branch
        %217 = sbr.rel (%p215) target = $region28
      $region27: #{low_level_transformer_forward.7} parent=11 // pred_region
        _
      $region28: #{low_level_transformer_forward.7} parent=11 // pred_fallthru
        _
      // Predicated region
      $region29: #{low_level_transformer_forward.7} parent=11 // pred_check
        %p218 = pneg %p144
      $region30: #{low_level_transformer_forward.7} parent=11 // pred_check_branch
        %220 = sbr.rel (%p218) target = $region32
      $region31: #{low_level_transformer_forward.7} parent=11 // pred_region
        _
      $region32: #{low_level_transformer_forward.7} parent=11 // pred_fallthru
        _
      // Predicated region
      $region33: #{low_level_transformer_forward.7} parent=11 // pred_check
        %p221 = pneg %p165
      $region34: #{low_level_transformer_forward.7} parent=11 // pred_check_branch
        %223 = sbr.rel (%p221) target = $region36
      $region35: #{low_level_transformer_forward.7} parent=11 // pred_region
        _
      $region36: #{low_level_transformer_forward.7} parent=11 // pred_fallthru
        _
    $region12: #{low_level_transformer_forward.7} parent=5 // pred_fallthru
      _
    %p224 = scmp.lt.s32.totalorder %s13, 2
    // Predicated region
    $region37: #{low_level_transformer_forward.7} parent=5 // pred_check
      %p225 = pneg %p224
    $region38: #{low_level_transformer_forward.7} parent=5 // pred_check_branch
      %227 = sbr.rel (%p225) target = $region40
    $region39: #{low_level_transformer_forward.7} parent=5 // pred_region
      // Predicated region
      $region41: #{low_level_transformer_forward.7} parent=39 // pred_check
        %p228 = pneg %p33
      $region42: #{low_level_transformer_forward.7} parent=39 // pred_check_branch
        %230 = sbr.rel (%p228) target = $region44
      $region43: #{low_level_transformer_forward.7} parent=39 // pred_region
        %p231 = scmp.lt.s32.totalorder %s13, 1
        %s232 = scalar_select %p231, %s13, 1
        %s233 = smul.addr %s232, 3
        %s234 = smul.addr %s233, 4
        %s235 = scalar_lea.vmem %s0, %s234
      $region44: #{low_level_transformer_forward.7} parent=39 // pred_fallthru
        _
    $region40: #{low_level_transformer_forward.7} parent=5 // pred_fallthru
      _
    %p236 = scmp.le.s32.totalorder 1, %s13
    %p237 = scmp.lt.s32.totalorder %s13, 3
    %p238 = pnand %p236, %p237
    %p239 = pneg %p238
    // Predicated region
    $region45: #{low_level_transformer_forward.7} parent=5 // pred_check
      _
    $region46: #{low_level_transformer_forward.7} parent=5 // pred_check_branch
      %241 = sbr.rel (%p238) target = $region48
    $region47: #{low_level_transformer_forward.7} parent=5 // pred_region
      %s242 = ssub.s32 %s13, 1
      %p243 = scmp.lt.s32.totalorder %s18, 1
      %s244 = scalar_select %p243, %s18, 1
      %s245 = smul.addr %s244, 3
      %s246 = smul.addr %s245, 4
      %s247 = scalar_lea.vmem %s0, %s246
      %p248 = pneg %p39
      %p249 = pneg %p36
      %p250 = pneg %p60
      %p251 = pneg %p57
      %p252 = pneg %p81
      %p253 = pneg %p78
      %p254 = pneg %p102
      %p255 = pneg %p99
      %p256 = pneg %p123
      %p257 = pneg %p120
      %p258 = pneg %p144
      %p259 = pneg %p141
      %p260 = pneg %p165
      %p261 = pneg %p162
      %p262 = pneg %p191
      %p263 = pneg %p188
      %p264 = scmp.lt.s32.totalorder %s18, 1
      %s265 = scalar_select %p264, %s18, 1
      %s266 = smul.addr %s265, 3
      %s267 = smul.addr %s266, 4
      %s268 = scalar_lea.vmem %s7, %s267
      %p269 = scmp.lt.s32.totalorder %s18, 1
      %s270 = scalar_select %p269, %s18, 1
      %s271 = smul.addr %s270, 3
      %s272 = smul.addr %s271, 4
      %s273 = scalar_lea.vmem %s0, %s272
      %p274 = scmp.lt.s32.totalorder %s18, 1
      %s275 = scalar_select %p274, %s18, 1
      %s276 = smul.addr %s275, 3
      %s277 = smul.addr %s276, 4
      %s278 = scalar_lea.vmem %s7, %s277
      %v280 = vld [vmem:[%s273] sm:$0xf]
      %v281 = vld [vmem:[%s273 + $0x4] sm:$0xf]
      %v282 = vld [vmem:[%s273 + $0x8] sm:$0xf]
      %v283 = vunpack.c.l.bf16 %v280
      %v284 = vunpack.c.l.bf16 %v281
      %v285 = vunpack.c.l.bf16 %v282
      %v286 = vld [vmem:[%s1] sm:$0x1]
      %v287 = vld [vmem:[%s2] sm:$0x1]
      %vm288 = vcmask 261120
      %v289 = vsel %vm288, %v283, 0.0
      %290 = vadd.xlane.f32.xlu0 %v289
      %v291 = vpop.xlane.xlu0 %290
      %v292 = vsel %vm288, %v284, 0.0
      %293 = vadd.xlane.f32.xlu0 %v292
      %v294 = vpop.xlane.xlu0 %293
      %v295 = vsel %vm288, %v285, 0.0
      %296 = vadd.xlane.f32.xlu0 %v295
      %v297 = vpop.xlane.xlu0 %296
      %v298 = vrcp.pop 32.0
      %v299 = vmul.f32 %v291, %v298
      %v300 = vmul.f32 %v294, %v298
      %v301 = vmul.f32 %v297, %v298
      %v302 = vsub.f32 %v283, %v299
      %v303 = vsub.f32 %v284, %v300
      %v304 = vsub.f32 %v285, %v301
      %v305 = vmul.f32 %v302, %v302
      %v306 = vmul.f32 %v303, %v303
      %v307 = vmul.f32 %v304, %v304
      %v308 = vsel %vm288, %v305, 0.0
      %309 = vadd.xlane.f32.xlu0 %v308
      %v310 = vpop.xlane.xlu0 %309
      %v311 = vsel %vm288, %v306, 0.0
      %312 = vadd.xlane.f32.xlu0 %v311
      %v313 = vpop.xlane.xlu0 %312
      %v314 = vsel %vm288, %v307, 0.0
      %315 = vadd.xlane.f32.xlu0 %v314
      %v316 = vpop.xlane.xlu0 %315
      %v317 = vmul.f32 %v310, %v298
      %v318 = vmul.f32 %v313, %v298
      %v319 = vmul.f32 %v316, %v298
      %v320 = vadd.f32 %v317, 1e-05
      %v321 = vadd.f32 %v318, 1e-05
      %v322 = vadd.f32 %v319, 1e-05
      %v323 = vrsqrt.pop %v320
      %v324 = vrsqrt.pop %v321
      %v325 = vrsqrt.pop %v322
      %v326 = vmul.f32 %v302, %v323
      %v327 = vmul.f32 %v303, %v324
      %v328 = vmul.f32 %v304, %v325
      %v330 = vlaneseq
      %v331 = vshrl.u32 %v330, 7
      %v332 = vsub.s32 0, %v331
      %v333 = vrot.slane %v286, %v332
      %v335 = vmul.f32 %v326, %v333
      %v336 = vmul.f32 %v327, %v333
      %v337 = vmul.f32 %v328, %v333
      %v339 = vlaneseq
      %v340 = vshrl.u32 %v339, 7
      %v341 = vsub.s32 0, %v340
      %v342 = vrot.slane %v287, %v341
      %v344 = vadd.f32 %v335, %v342
      %v345 = vadd.f32 %v336, %v342
      %v346 = vadd.f32 %v337, %v342
      %v347 = vpack.c.bf16 %v345, %v344
      %v348 = vpack.c.bf16 %v346, %v346
      %v349 = vld [vmem:[%s3] sm:$0xf]
      %v350 = vld [vmem:[%s3 + $0x4] sm:$0xf]
      %v351 = vld [vmem:[%s3 + $0x8] sm:$0xf]
      %v352 = vld [vmem:[%s3 + $0xc] sm:$0xf]
      %v353 = vld [vmem:[%s4] sm:$0x1]
      %v355 = vlaneseq
      %v356 = vshrl.u32 %v355, 7
      %v357 = vsub.s32 0, %v356
      %v358 = vrot.slane %v353, %v357
      %v364 = vunpack.c.l.b16 %v349
      %v365 = vunpack.c.l.b16 %v350
      %v366 = vunpack.c.l.b16 %v351
      %v367 = vunpack.c.l.b16 %v352
      %v368 = vpack.c.b16 %v365, %v364
      %v369 = vpack.c.b16 %v367, %v366
      %v373 = vsel %vm288, %v347, 0
      %v376 = vsel %vm288, %v348, 0
      %378 = vmatprep.subr.bf16.mxu0 0
      %379 = vmatpush1.bf16.msra.mxu0 0
      %380 = vmatprep.subr.bf16.mxu0 0
      %381 = vmatpush1.bf16.msra.mxu0 0
      %382 = vmatprep.subr.bf16.mxu0 0
      %383 = vmatpush1.bf16.msra.mxu0 0
      %384 = vmatprep.subr.bf16.mxu0 0
      %385 = vmatpush1.bf16.msra.mxu0 0
      %386 = vmatprep.subr.bf16.mxu0 0
      %387 = vmatpush1.bf16.msra.mxu0 0
      %388 = vmatprep.subr.bf16.mxu0 0
      %389 = vmatpush1.bf16.msra.mxu0 0
      %390 = vmatprep.subr.bf16.mxu0 0
      %391 = vmatpush1.bf16.msra.mxu0 %v369
      %392 = vmatprep.subr.bf16.mxu0 0
      %393 = vmatpush1.bf16.msra.mxu0 %v368
      %394 = vmatprep.subr.bf16.mxu0 0
      %395 = vmatpush2.bf16.msra.mxu0 0
      %396 = vmatprep.subr.bf16.mxu0 0
      %397 = vmatpush2.bf16.msra.mxu0 0
      %398 = vmatprep.subr.bf16.mxu0 0
      %399 = vmatpush2.bf16.msra.mxu0 0
      %400 = vmatprep.subr.bf16.mxu0 0
      %401 = vmatpush2.bf16.msra.mxu0 0
      %402 = vmatprep.subr.bf16.mxu0 0
      %403 = vmatpush2.bf16.msra.mxu0 0
      %404 = vmatprep.subr.bf16.mxu0 0
      %405 = vmatpush2.bf16.msra.mxu0 0
      %406 = vmatprep.subr.bf16.mxu0 0
      %407 = vmatpush2.bf16.msra.mxu0 0
      %408 = vmatprep.subr.bf16.mxu0 0
      %409 = vmatpush2.bf16.msra.mxu0 0
      %410 = vmatprep.mubr.bf16.mxu0 0
      %411 = vmatmul.mubr.bf16.gmra.mxu0 %v373
      %v412 = vpop.f32.mrf.mxu0
      %v413 = vadd.f32 %v358, %v412
      %v414 = vpop.f32.mrf.mxu0
      %v415 = vpop.f32.mrf.mxu0
      %v416 = vadd.f32 %v358, %v415
      %v417 = vpop.f32.mrf.mxu0
      %418 = vmatprep.mubr.bf16.mxu0 0
      %419 = vmatmul.mubr.bf16.gmra.mxu0 %v376
      %v420 = vpop.f32.mrf.mxu0
      %v421 = vadd.f32 %v358, %v420
      %v422 = vpop.f32.mrf.mxu0
      %v423 = vpop.f32.mrf.mxu0
      %v424 = vpop.f32.mrf.mxu0
      %425 = vdwg.mxu0
      %v426 = vpack.c.bf16 %v416, %v413
      %v427 = vpack.c.bf16 %v421, %v421
      %v428 = vlaneseq
      %v429 = vshrl.u32 %v428, 7
      %v430 = vadd.s32 %v429, 8
      %v431 = vadd.s32 %v429, 16
      %v432 = vlaneseq
      %v433 = vand.u32 %v432, 127
      %vm434 = vcmp.ge.s32.totalorder %v429, %v433
      %vm435 = vcmp.ge.s32.totalorder %v430, %v433
      %vm436 = vcmp.ge.s32.totalorder %v431, %v433
      %439 = vrot.lane.b32.xlu0 %v426, 96
      %v440 = vpop.permute.xlu0 %439
      %441 = vrot.lane.b32.xlu0 %v427, 96
      %v442 = vpop.permute.xlu0 %441
      %vm443 = vcmask 64512
      %v445 = vsel %vm443, %v426, 0
      %v448 = vsel %vm443, %v427, 0
      %v451 = vsel %vm443, %v440, 0
      %v454 = vsel %vm443, %v442, 0
      %456 = vmatprep.subr.bf16.mxu0 0
      %457 = vmatpush1.bf16.xpose.msra.mxu0 0
      %458 = vmatprep.subr.bf16.mxu0 0
      %459 = vmatpush1.bf16.xpose.msra.mxu0 0
      %460 = vmatprep.subr.bf16.mxu0 0
      %461 = vmatpush1.bf16.xpose.msra.mxu0 0
      %462 = vmatprep.subr.bf16.mxu0 0
      %463 = vmatpush1.bf16.xpose.msra.mxu0 0
      %464 = vmatprep.subr.bf16.mxu0 0
      %465 = vmatpush1.bf16.xpose.msra.mxu0 0
      %466 = vmatprep.subr.bf16.mxu0 0
      %467 = vmatpush1.bf16.xpose.msra.mxu0 0
      %468 = vmatprep.subr.bf16.mxu0 0
      %469 = vmatpush1.bf16.xpose.msra.mxu0 %v454
      %470 = vmatprep.subr.bf16.mxu0 0
      %471 = vmatpush1.bf16.xpose.msra.mxu0 %v451
      %472 = vmatprep.subr.bf16.mxu0 0
      %473 = vmatpush2.bf16.xpose.msra.mxu0 0
      %474 = vmatprep.subr.bf16.mxu0 0
      %475 = vmatpush2.bf16.xpose.msra.mxu0 0
      %476 = vmatprep.subr.bf16.mxu0 0
      %477 = vmatpush2.bf16.xpose.msra.mxu0 0
      %478 = vmatprep.subr.bf16.mxu0 0
      %479 = vmatpush2.bf16.xpose.msra.mxu0 0
      %480 = vmatprep.subr.bf16.mxu0 0
      %481 = vmatpush2.bf16.xpose.msra.mxu0 0
      %482 = vmatprep.subr.bf16.mxu0 0
      %483 = vmatpush2.bf16.xpose.msra.mxu0 0
      %484 = vmatprep.subr.bf16.mxu0 0
      %485 = vmatpush2.bf16.xpose.msra.mxu0 0
      %486 = vmatprep.subr.bf16.mxu0 0
      %487 = vmatpush2.bf16.xpose.msra.mxu0 0
      %488 = vmatprep.mubr.bf16.mxu0 0
      %489 = vmatmul.mubr.bf16.gmra.mxu0 %v445
      %v490 = vpop.f32.mrf.mxu0
      %v491 = vadd.f32 0.0, %v490
      %v492 = vpop.f32.mrf.mxu0
      %v493 = vpop.f32.mrf.mxu0
      %v494 = vadd.f32 0.0, %v493
      %v495 = vpop.f32.mrf.mxu0
      %496 = vmatprep.mubr.bf16.mxu0 0
      %497 = vmatmul.mubr.bf16.gmra.mxu0 %v448
      %v498 = vpop.f32.mrf.mxu0
      %v499 = vadd.f32 0.0, %v498
      %v500 = vpop.f32.mrf.mxu0
      %v501 = vpop.f32.mrf.mxu0
      %v502 = vpop.f32.mrf.mxu0
      %503 = vdwg.mxu0
      %v504 = vmul.f32 %v491, 0.35355338
      %v505 = vmul.f32 %v494, 0.35355338
      %v506 = vmul.f32 %v499, 0.35355338
      %v507 = vsel %vm434, %v504, -1e+30
      %v508 = vsel %vm435, %v505, -1e+30
      %v509 = vsel %vm436, %v506, -1e+30
      %vm510 = vcmask 195584
      %v511 = vsel %vm510, %v507, -inf
      %512 = vmax.xlane.f32.xlu0 %v511
      %v513 = vpop.xlane.xlu0 %512
      %v514 = vsel %vm510, %v508, -inf
      %515 = vmax.xlane.f32.xlu0 %v514
      %v516 = vpop.xlane.xlu0 %515
      %v517 = vsel %vm510, %v509, -inf
      %518 = vmax.xlane.f32.xlu0 %v517
      %v519 = vpop.xlane.xlu0 %518
      %v520 = vsub.f32 %v507, %v513
      %v521 = vsub.f32 %v508, %v516
      %v522 = vsub.f32 %v509, %v519
      %v523 = vmul.f32 %v520, 1.442695
      %v524 = vpow.pop %v523
      %v525 = vmul.f32 %v521, 1.442695
      %v526 = vpow.pop %v525
      %v527 = vmul.f32 %v522, 1.442695
      %v528 = vpow.pop %v527
      %v529 = vsel %vm510, %v524, 0.0
      %530 = vadd.xlane.f32.xlu0 %v529
      %v531 = vpop.xlane.xlu0 %530
      %v532 = vsel %vm510, %v526, 0.0
      %533 = vadd.xlane.f32.xlu0 %v532
      %v534 = vpop.xlane.xlu0 %533
      %v535 = vsel %vm510, %v528, 0.0
      %536 = vadd.xlane.f32.xlu0 %v535
      %v537 = vpop.xlane.xlu0 %536
      %v538 = vrcp.pop %v531
      %v539 = vrcp.pop %v534
      %v540 = vrcp.pop %v537
      %v541 = vpack.c.bf16 %v526, %v524
      %v542 = vpack.c.bf16 %v528, %v528
      %543 = vrot.lane.b32.xlu0 %v426, 64
      %v544 = vpop.permute.xlu0 %543
      %545 = vrot.lane.b32.xlu0 %v427, 64
      %v546 = vpop.permute.xlu0 %545
      %v549 = vsel %vm510, %v541, 0
      %v552 = vsel %vm510, %v542, 0
      %vm554 = vcmask 1043456
      %v556 = vsel %vm554, %v546, 0
      %558 = vmatprep.subr.bf16.mxu0 0
      %559 = vmatpush1.bf16.msra.mxu0 0
      %560 = vmatprep.subr.bf16.mxu0 0
      %561 = vmatpush1.bf16.msra.mxu0 0
      %562 = vmatprep.subr.bf16.mxu0 0
      %563 = vmatpush1.bf16.msra.mxu0 0
      %564 = vmatprep.subr.bf16.mxu0 0
      %565 = vmatpush1.bf16.msra.mxu0 0
      %566 = vmatprep.subr.bf16.mxu0 0
      %567 = vmatpush1.bf16.msra.mxu0 0
      %568 = vmatprep.subr.bf16.mxu0 0
      %569 = vmatpush1.bf16.msra.mxu0 0
      %570 = vmatprep.subr.bf16.mxu0 0
      %571 = vmatpush1.bf16.msra.mxu0 %v556
      %572 = vmatprep.subr.bf16.mxu0 0
      %573 = vmatpush1.bf16.msra.mxu0 %v544
      %574 = vmatprep.subr.bf16.mxu0 0
      %575 = vmatpush2.bf16.msra.mxu0 0
      %576 = vmatprep.subr.bf16.mxu0 0
      %577 = vmatpush2.bf16.msra.mxu0 0
      %578 = vmatprep.subr.bf16.mxu0 0
      %579 = vmatpush2.bf16.msra.mxu0 0
      %580 = vmatprep.subr.bf16.mxu0 0
      %581 = vmatpush2.bf16.msra.mxu0 0
      %582 = vmatprep.subr.bf16.mxu0 0
      %583 = vmatpush2.bf16.msra.mxu0 0
      %584 = vmatprep.subr.bf16.mxu0 0
      %585 = vmatpush2.bf16.msra.mxu0 0
      %586 = vmatprep.subr.bf16.mxu0 0
      %587 = vmatpush2.bf16.msra.mxu0 0
      %588 = vmatprep.subr.bf16.mxu0 0
      %589 = vmatpush2.bf16.msra.mxu0 0
      %590 = vmatprep.mubr.bf16.mxu0 0
      %591 = vmatmul.mubr.bf16.gmra.mxu0 %v549
      %v592 = vpop.f32.mrf.mxu0
      %v593 = vadd.f32 0.0, %v592
      %v594 = vpop.f32.mrf.mxu0
      %v595 = vpop.f32.mrf.mxu0
      %v596 = vadd.f32 0.0, %v595
      %v597 = vpop.f32.mrf.mxu0
      %598 = vmatprep.mubr.bf16.mxu0 0
      %599 = vmatmul.mubr.bf16.gmra.mxu0 %v552
      %v600 = vpop.f32.mrf.mxu0
      %v601 = vadd.f32 0.0, %v600
      %v602 = vpop.f32.mrf.mxu0
      %v603 = vpop.f32.mrf.mxu0
      %v604 = vpop.f32.mrf.mxu0
      %605 = vdwg.mxu0
      %v606 = vmul.f32 %v593, %v538
      %v607 = vmul.f32 %v596, %v539
      %v608 = vmul.f32 %v601, %v540
      %v609 = vpack.c.bf16 %v607, %v606
      %v610 = vpack.c.bf16 %v608, %v608
      %v613 = vunpack.c.l.b16 %v609
      %v614 = vunpack.c.h.b16 %v609
      %v615 = vunpack.c.l.b16 %v610
      %v616 = vpack.c.b16 %v613, %v613
      %v617 = vpack.c.b16 %v614, %v614
      %v618 = vpack.c.b16 %v615, %v615
      %vm622 = vcmask 60416
      %623 = vst.msk [vmem:[#allocation2] sm:$0xf] %vm622, %v616
      %624 = vst.msk [vmem:[#allocation2 + $0x4] sm:$0xf] %vm622, %v617
      %625 = vst.msk [vmem:[#allocation2 + $0x8] sm:$0xf] %vm622, %v618
      %626 = vrot.lane.b32.xlu0 %v426, 120
      %v627 = vpop.permute.xlu0 %626
      %628 = vrot.lane.b32.xlu0 %v427, 120
      %v629 = vpop.permute.xlu0 %628
      %630 = vrot.lane.b32.xlu0 %v426, 88
      %v631 = vpop.permute.xlu0 %630
      %632 = vrot.lane.b32.xlu0 %v427, 88
      %v633 = vpop.permute.xlu0 %632
      %v635 = vsel %vm443, %v627, 0
      %v638 = vsel %vm443, %v629, 0
      %v641 = vsel %vm443, %v631, 0
      %v644 = vsel %vm443, %v633, 0
      %646 = vmatprep.subr.bf16.mxu0 0
      %647 = vmatpush1.bf16.xpose.msra.mxu0 0
      %648 = vmatprep.subr.bf16.mxu0 0
      %649 = vmatpush1.bf16.xpose.msra.mxu0 0
      %650 = vmatprep.subr.bf16.mxu0 0
      %651 = vmatpush1.bf16.xpose.msra.mxu0 0
      %652 = vmatprep.subr.bf16.mxu0 0
      %653 = vmatpush1.bf16.xpose.msra.mxu0 0
      %654 = vmatprep.subr.bf16.mxu0 0
      %655 = vmatpush1.bf16.xpose.msra.mxu0 0
      %656 = vmatprep.subr.bf16.mxu0 0
      %657 = vmatpush1.bf16.xpose.msra.mxu0 0
      %658 = vmatprep.subr.bf16.mxu0 0
      %659 = vmatpush1.bf16.xpose.msra.mxu0 %v644
      %660 = vmatprep.subr.bf16.mxu0 0
      %661 = vmatpush1.bf16.xpose.msra.mxu0 %v641
      %662 = vmatprep.subr.bf16.mxu0 0
      %663 = vmatpush2.bf16.xpose.msra.mxu0 0
      %664 = vmatprep.subr.bf16.mxu0 0
      %665 = vmatpush2.bf16.xpose.msra.mxu0 0
      %666 = vmatprep.subr.bf16.mxu0 0
      %667 = vmatpush2.bf16.xpose.msra.mxu0 0
      %668 = vmatprep.subr.bf16.mxu0 0
      %669 = vmatpush2.bf16.xpose.msra.mxu0 0
      %670 = vmatprep.subr.bf16.mxu0 0
      %671 = vmatpush2.bf16.xpose.msra.mxu0 0
      %672 = vmatprep.subr.bf16.mxu0 0
      %673 = vmatpush2.bf16.xpose.msra.mxu0 0
      %674 = vmatprep.subr.bf16.mxu0 0
      %675 = vmatpush2.bf16.xpose.msra.mxu0 0
      %676 = vmatprep.subr.bf16.mxu0 0
      %677 = vmatpush2.bf16.xpose.msra.mxu0 0
      %678 = vmatprep.mubr.bf16.mxu0 0
      %679 = vmatmul.mubr.bf16.gmra.mxu0 %v635
      %v680 = vpop.f32.mrf.mxu0
      %v681 = vadd.f32 0.0, %v680
      %v682 = vpop.f32.mrf.mxu0
      %v683 = vpop.f32.mrf.mxu0
      %v684 = vadd.f32 0.0, %v683
      %v685 = vpop.f32.mrf.mxu0
      %686 = vmatprep.mubr.bf16.mxu0 0
      %687 = vmatmul.mubr.bf16.gmra.mxu0 %v638
      %v688 = vpop.f32.mrf.mxu0
      %v689 = vadd.f32 0.0, %v688
      %v690 = vpop.f32.mrf.mxu0
      %v691 = vpop.f32.mrf.mxu0
      %v692 = vpop.f32.mrf.mxu0
      %693 = vdwg.mxu0
      %v694 = vmul.f32 %v681, 0.35355338
      %v695 = vmul.f32 %v684, 0.35355338
      %v696 = vmul.f32 %v689, 0.35355338
      %v697 = vsel %vm434, %v694, -1e+30
      %v698 = vsel %vm435, %v695, -1e+30
      %v699 = vsel %vm436, %v696, -1e+30
      %v700 = vsel %vm510, %v697, -inf
      %701 = vmax.xlane.f32.xlu0 %v700
      %v702 = vpop.xlane.xlu0 %701
      %v703 = vsel %vm510, %v698, -inf
      %704 = vmax.xlane.f32.xlu0 %v703
      %v705 = vpop.xlane.xlu0 %704
      %v706 = vsel %vm510, %v699, -inf
      %707 = vmax.xlane.f32.xlu0 %v706
      %v708 = vpop.xlane.xlu0 %707
      %v709 = vsub.f32 %v697, %v702
      %v710 = vsub.f32 %v698, %v705
      %v711 = vsub.f32 %v699, %v708
      %v712 = vmul.f32 %v709, 1.442695
      %v713 = vpow.pop %v712
      %v714 = vmul.f32 %v710, 1.442695
      %v715 = vpow.pop %v714
      %v716 = vmul.f32 %v711, 1.442695
      %v717 = vpow.pop %v716
      %v718 = vsel %vm510, %v713, 0.0
      %719 = vadd.xlane.f32.xlu0 %v718
      %v720 = vpop.xlane.xlu0 %719
      %v721 = vsel %vm510, %v715, 0.0
      %722 = vadd.xlane.f32.xlu0 %v721
      %v723 = vpop.xlane.xlu0 %722
      %v724 = vsel %vm510, %v717, 0.0
      %725 = vadd.xlane.f32.xlu0 %v724
      %v726 = vpop.xlane.xlu0 %725
      %v727 = vrcp.pop %v720
      %v728 = vrcp.pop %v723
      %v729 = vrcp.pop %v726
      %v730 = vpack.c.bf16 %v715, %v713
      %v731 = vpack.c.bf16 %v717, %v717
      %732 = vrot.lane.b32.xlu0 %v426, 56
      %v733 = vpop.permute.xlu0 %732
      %734 = vrot.lane.b32.xlu0 %v427, 56
      %v735 = vpop.permute.xlu0 %734
      %v738 = vsel %vm510, %v730, 0
      %v741 = vsel %vm510, %v731, 0
      %v744 = vsel %vm554, %v735, 0
      %746 = vmatprep.subr.bf16.mxu0 0
      %747 = vmatpush1.bf16.msra.mxu0 0
      %748 = vmatprep.subr.bf16.mxu0 0
      %749 = vmatpush1.bf16.msra.mxu0 0
      %750 = vmatprep.subr.bf16.mxu0 0
      %751 = vmatpush1.bf16.msra.mxu0 0
      %752 = vmatprep.subr.bf16.mxu0 0
      %753 = vmatpush1.bf16.msra.mxu0 0
      %754 = vmatprep.subr.bf16.mxu0 0
      %755 = vmatpush1.bf16.msra.mxu0 0
      %756 = vmatprep.subr.bf16.mxu0 0
      %757 = vmatpush1.bf16.msra.mxu0 0
      %758 = vmatprep.subr.bf16.mxu0 0
      %759 = vmatpush1.bf16.msra.mxu0 %v744
      %760 = vmatprep.subr.bf16.mxu0 0
      %761 = vmatpush1.bf16.msra.mxu0 %v733
      %762 = vmatprep.subr.bf16.mxu0 0
      %763 = vmatpush2.bf16.msra.mxu0 0
      %764 = vmatprep.subr.bf16.mxu0 0
      %765 = vmatpush2.bf16.msra.mxu0 0
      %766 = vmatprep.subr.bf16.mxu0 0
      %767 = vmatpush2.bf16.msra.mxu0 0
      %768 = vmatprep.subr.bf16.mxu0 0
      %769 = vmatpush2.bf16.msra.mxu0 0
      %770 = vmatprep.subr.bf16.mxu0 0
      %771 = vmatpush2.bf16.msra.mxu0 0
      %772 = vmatprep.subr.bf16.mxu0 0
      %773 = vmatpush2.bf16.msra.mxu0 0
      %774 = vmatprep.subr.bf16.mxu0 0
      %775 = vmatpush2.bf16.msra.mxu0 0
      %776 = vmatprep.subr.bf16.mxu0 0
      %777 = vmatpush2.bf16.msra.mxu0 0
      %778 = vmatprep.mubr.bf16.mxu0 0
      %779 = vmatmul.mubr.bf16.gmra.mxu0 %v738
      %v780 = vpop.f32.mrf.mxu0
      %v781 = vadd.f32 0.0, %v780
      %v782 = vpop.f32.mrf.mxu0
      %v783 = vpop.f32.mrf.mxu0
      %v784 = vadd.f32 0.0, %v783
      %v785 = vpop.f32.mrf.mxu0
      %786 = vmatprep.mubr.bf16.mxu0 0
      %787 = vmatmul.mubr.bf16.gmra.mxu0 %v741
      %v788 = vpop.f32.mrf.mxu0
      %v789 = vadd.f32 0.0, %v788
      %v790 = vpop.f32.mrf.mxu0
      %v791 = vpop.f32.mrf.mxu0
      %v792 = vpop.f32.mrf.mxu0
      %793 = vdwg.mxu0
      %v794 = vmul.f32 %v781, %v727
      %v795 = vmul.f32 %v784, %v728
      %v796 = vmul.f32 %v789, %v729
      %v797 = vpack.c.bf16 %v795, %v794
      %v798 = vpack.c.bf16 %v796, %v796
      %v801 = vunpack.c.l.b16 %v797
      %v802 = vunpack.c.h.b16 %v797
      %v803 = vunpack.c.l.b16 %v798
      %v804 = vpack.c.b16 %v801, %v801
      %v805 = vpack.c.b16 %v802, %v802
      %v806 = vpack.c.b16 %v803, %v803
      %807 = vrot.lane.b32.xlu0 %v804, 8
      %v808 = vpop.permute.xlu0 %807
      %809 = vrot.lane.b32.xlu0 %v805, 8
      %v810 = vpop.permute.xlu0 %809
      %811 = vrot.lane.b32.xlu0 %v806, 8
      %v812 = vpop.permute.xlu0 %811
      %vm816 = vcmask 126016
      %817 = vst.msk [vmem:[#allocation2] sm:$0xf] %vm816, %v808
      %818 = vst.msk [vmem:[#allocation2 + $0x4] sm:$0xf] %vm816, %v810
      %819 = vst.msk [vmem:[#allocation2 + $0x8] sm:$0xf] %vm816, %v812
      %820 = vrot.lane.b32.xlu0 %v426, 112
      %v821 = vpop.permute.xlu0 %820
      %822 = vrot.lane.b32.xlu0 %v427, 112
      %v823 = vpop.permute.xlu0 %822
      %824 = vrot.lane.b32.xlu0 %v426, 80
      %v825 = vpop.permute.xlu0 %824
      %826 = vrot.lane.b32.xlu0 %v427, 80
      %v827 = vpop.permute.xlu0 %826
      %v829 = vsel %vm443, %v821, 0
      %v832 = vsel %vm443, %v823, 0
      %v835 = vsel %vm443, %v825, 0
      %v838 = vsel %vm443, %v827, 0
      %840 = vmatprep.subr.bf16.mxu0 0
      %841 = vmatpush1.bf16.xpose.msra.mxu0 0
      %842 = vmatprep.subr.bf16.mxu0 0
      %843 = vmatpush1.bf16.xpose.msra.mxu0 0
      %844 = vmatprep.subr.bf16.mxu0 0
      %845 = vmatpush1.bf16.xpose.msra.mxu0 0
      %846 = vmatprep.subr.bf16.mxu0 0
      %847 = vmatpush1.bf16.xpose.msra.mxu0 0
      %848 = vmatprep.subr.bf16.mxu0 0
      %849 = vmatpush1.bf16.xpose.msra.mxu0 0
      %850 = vmatprep.subr.bf16.mxu0 0
      %851 = vmatpush1.bf16.xpose.msra.mxu0 0
      %852 = vmatprep.subr.bf16.mxu0 0
      %853 = vmatpush1.bf16.xpose.msra.mxu0 %v838
      %854 = vmatprep.subr.bf16.mxu0 0
      %855 = vmatpush1.bf16.xpose.msra.mxu0 %v835
      %856 = vmatprep.subr.bf16.mxu0 0
      %857 = vmatpush2.bf16.xpose.msra.mxu0 0
      %858 = vmatprep.subr.bf16.mxu0 0
      %859 = vmatpush2.bf16.xpose.msra.mxu0 0
      %860 = vmatprep.subr.bf16.mxu0 0
      %861 = vmatpush2.bf16.xpose.msra.mxu0 0
      %862 = vmatprep.subr.bf16.mxu0 0
      %863 = vmatpush2.bf16.xpose.msra.mxu0 0
      %864 = vmatprep.subr.bf16.mxu0 0
      %865 = vmatpush2.bf16.xpose.msra.mxu0 0
      %866 = vmatprep.subr.bf16.mxu0 0
      %867 = vmatpush2.bf16.xpose.msra.mxu0 0
      %868 = vmatprep.subr.bf16.mxu0 0
      %869 = vmatpush2.bf16.xpose.msra.mxu0 0
      %870 = vmatprep.subr.bf16.mxu0 0
      %871 = vmatpush2.bf16.xpose.msra.mxu0 0
      %872 = vmatprep.mubr.bf16.mxu0 0
      %873 = vmatmul.mubr.bf16.gmra.mxu0 %v829
      %v874 = vpop.f32.mrf.mxu0
      %v875 = vadd.f32 0.0, %v874
      %v876 = vpop.f32.mrf.mxu0
      %v877 = vpop.f32.mrf.mxu0
      %v878 = vadd.f32 0.0, %v877
      %v879 = vpop.f32.mrf.mxu0
      %880 = vmatprep.mubr.bf16.mxu0 0
      %881 = vmatmul.mubr.bf16.gmra.mxu0 %v832
      %v882 = vpop.f32.mrf.mxu0
      %v883 = vadd.f32 0.0, %v882
      %v884 = vpop.f32.mrf.mxu0
      %v885 = vpop.f32.mrf.mxu0
      %v886 = vpop.f32.mrf.mxu0
      %887 = vdwg.mxu0
      %v888 = vmul.f32 %v875, 0.35355338
      %v889 = vmul.f32 %v878, 0.35355338
      %v890 = vmul.f32 %v883, 0.35355338
      %v891 = vsel %vm434, %v888, -1e+30
      %v892 = vsel %vm435, %v889, -1e+30
      %v893 = vsel %vm436, %v890, -1e+30
      %v894 = vsel %vm510, %v891, -inf
      %895 = vmax.xlane.f32.xlu0 %v894
      %v896 = vpop.xlane.xlu0 %895
      %v897 = vsel %vm510, %v892, -inf
      %898 = vmax.xlane.f32.xlu0 %v897
      %v899 = vpop.xlane.xlu0 %898
      %v900 = vsel %vm510, %v893, -inf
      %901 = vmax.xlane.f32.xlu0 %v900
      %v902 = vpop.xlane.xlu0 %901
      %v903 = vsub.f32 %v891, %v896
      %v904 = vsub.f32 %v892, %v899
      %v905 = vsub.f32 %v893, %v902
      %v906 = vmul.f32 %v903, 1.442695
      %v907 = vpow.pop %v906
      %v908 = vmul.f32 %v904, 1.442695
      %v909 = vpow.pop %v908
      %v910 = vmul.f32 %v905, 1.442695
      %v911 = vpow.pop %v910
      %v912 = vsel %vm510, %v907, 0.0
      %913 = vadd.xlane.f32.xlu0 %v912
      %v914 = vpop.xlane.xlu0 %913
      %v915 = vsel %vm510, %v909, 0.0
      %916 = vadd.xlane.f32.xlu0 %v915
      %v917 = vpop.xlane.xlu0 %916
      %v918 = vsel %vm510, %v911, 0.0
      %919 = vadd.xlane.f32.xlu0 %v918
      %v920 = vpop.xlane.xlu0 %919
      %v921 = vrcp.pop %v914
      %v922 = vrcp.pop %v917
      %v923 = vrcp.pop %v920
      %v924 = vpack.c.bf16 %v909, %v907
      %v925 = vpack.c.bf16 %v911, %v911
      %926 = vrot.lane.b32.xlu0 %v426, 48
      %v927 = vpop.permute.xlu0 %926
      %928 = vrot.lane.b32.xlu0 %v427, 48
      %v929 = vpop.permute.xlu0 %928
      %v932 = vsel %vm510, %v924, 0
      %v935 = vsel %vm510, %v925, 0
      %v938 = vsel %vm554, %v929, 0
      %940 = vmatprep.subr.bf16.mxu0 0
      %941 = vmatpush1.bf16.msra.mxu0 0
      %942 = vmatprep.subr.bf16.mxu0 0
      %943 = vmatpush1.bf16.msra.mxu0 0
      %944 = vmatprep.subr.bf16.mxu0 0
      %945 = vmatpush1.bf16.msra.mxu0 0
      %946 = vmatprep.subr.bf16.mxu0 0
      %947 = vmatpush1.bf16.msra.mxu0 0
      %948 = vmatprep.subr.bf16.mxu0 0
      %949 = vmatpush1.bf16.msra.mxu0 0
      %950 = vmatprep.subr.bf16.mxu0 0
      %951 = vmatpush1.bf16.msra.mxu0 0
      %952 = vmatprep.subr.bf16.mxu0 0
      %953 = vmatpush1.bf16.msra.mxu0 %v938
      %954 = vmatprep.subr.bf16.mxu0 0
      %955 = vmatpush1.bf16.msra.mxu0 %v927
      %956 = vmatprep.subr.bf16.mxu0 0
      %957 = vmatpush2.bf16.msra.mxu0 0
      %958 = vmatprep.subr.bf16.mxu0 0
      %959 = vmatpush2.bf16.msra.mxu0 0
      %960 = vmatprep.subr.bf16.mxu0 0
      %961 = vmatpush2.bf16.msra.mxu0 0
      %962 = vmatprep.subr.bf16.mxu0 0
      %963 = vmatpush2.bf16.msra.mxu0 0
      %964 = vmatprep.subr.bf16.mxu0 0
      %965 = vmatpush2.bf16.msra.mxu0 0
      %966 = vmatprep.subr.bf16.mxu0 0
      %967 = vmatpush2.bf16.msra.mxu0 0
      %968 = vmatprep.subr.bf16.mxu0 0
      %969 = vmatpush2.bf16.msra.mxu0 0
      %970 = vmatprep.subr.bf16.mxu0 0
      %971 = vmatpush2.bf16.msra.mxu0 0
      %972 = vmatprep.mubr.bf16.mxu0 0
      %973 = vmatmul.mubr.bf16.gmra.mxu0 %v932
      %v974 = vpop.f32.mrf.mxu0
      %v975 = vadd.f32 0.0, %v974
      %v976 = vpop.f32.mrf.mxu0
      %v977 = vpop.f32.mrf.mxu0
      %v978 = vadd.f32 0.0, %v977
      %v979 = vpop.f32.mrf.mxu0
      %980 = vmatprep.mubr.bf16.mxu0 0
      %981 = vmatmul.mubr.bf16.gmra.mxu0 %v935
      %v982 = vpop.f32.mrf.mxu0
      %v983 = vadd.f32 0.0, %v982
      %v984 = vpop.f32.mrf.mxu0
      %v985 = vpop.f32.mrf.mxu0
      %v986 = vpop.f32.mrf.mxu0
      %987 = vdwg.mxu0
      %v988 = vmul.f32 %v975, %v921
      %v989 = vmul.f32 %v978, %v922
      %v990 = vmul.f32 %v983, %v923
      %v991 = vpack.c.bf16 %v989, %v988
      %v992 = vpack.c.bf16 %v990, %v990
      %v995 = vunpack.c.l.b16 %v991
      %v996 = vunpack.c.h.b16 %v991
      %v997 = vunpack.c.l.b16 %v992
      %v998 = vpack.c.b16 %v995, %v995
      %v999 = vpack.c.b16 %v996, %v996
      %v1000 = vpack.c.b16 %v997, %v997
      %1001 = vrot.lane.b32.xlu0 %v998, 16
      %v1002 = vpop.permute.xlu0 %1001
      %1003 = vrot.lane.b32.xlu0 %v999, 16
      %v1004 = vpop.permute.xlu0 %1003
      %1005 = vrot.lane.b32.xlu0 %v1000, 16
      %v1006 = vpop.permute.xlu0 %1005
      %vm1010 = vcmask 191616
      %1011 = vst.msk [vmem:[#allocation2] sm:$0xf] %vm1010, %v1002
      %1012 = vst.msk [vmem:[#allocation2 + $0x4] sm:$0xf] %vm1010, %v1004
      %1013 = vst.msk [vmem:[#allocation2 + $0x8] sm:$0xf] %vm1010, %v1006
      %1014 = vrot.lane.b32.xlu0 %v426, 104
      %v1015 = vpop.permute.xlu0 %1014
      %1016 = vrot.lane.b32.xlu0 %v427, 104
      %v1017 = vpop.permute.xlu0 %1016
      %1018 = vrot.lane.b32.xlu0 %v426, 72
      %v1019 = vpop.permute.xlu0 %1018
      %1020 = vrot.lane.b32.xlu0 %v427, 72
      %v1021 = vpop.permute.xlu0 %1020
      %v1023 = vsel %vm443, %v1015, 0
      %v1026 = vsel %vm443, %v1017, 0
      %v1029 = vsel %vm443, %v1019, 0
      %v1032 = vsel %vm443, %v1021, 0
      %1034 = vmatprep.subr.bf16.mxu0 0
      %1035 = vmatpush1.bf16.xpose.msra.mxu0 0
      %1036 = vmatprep.subr.bf16.mxu0 0
      %1037 = vmatpush1.bf16.xpose.msra.mxu0 0
      %1038 = vmatprep.subr.bf16.mxu0 0
      %1039 = vmatpush1.bf16.xpose.msra.mxu0 0
      %1040 = vmatprep.subr.bf16.mxu0 0
      %1041 = vmatpush1.bf16.xpose.msra.mxu0 0
      %1042 = vmatprep.subr.bf16.mxu0 0
      %1043 = vmatpush1.bf16.xpose.msra.mxu0 0
      %1044 = vmatprep.subr.bf16.mxu0 0
      %1045 = vmatpush1.bf16.xpose.msra.mxu0 0
      %1046 = vmatprep.subr.bf16.mxu0 0
      %1047 = vmatpush1.bf16.xpose.msra.mxu0 %v1032
      %1048 = vmatprep.subr.bf16.mxu0 0
      %1049 = vmatpush1.bf16.xpose.msra.mxu0 %v1029
      %1050 = vmatprep.subr.bf16.mxu0 0
      %1051 = vmatpush2.bf16.xpose.msra.mxu0 0
      %1052 = vmatprep.subr.bf16.mxu0 0
      %1053 = vmatpush2.bf16.xpose.msra.mxu0 0
      %1054 = vmatprep.subr.bf16.mxu0 0
      %1055 = vmatpush2.bf16.xpose.msra.mxu0 0
      %1056 = vmatprep.subr.bf16.mxu0 0
      %1057 = vmatpush2.bf16.xpose.msra.mxu0 0
      %1058 = vmatprep.subr.bf16.mxu0 0
      %1059 = vmatpush2.bf16.xpose.msra.mxu0 0
      %1060 = vmatprep.subr.bf16.mxu0 0
      %1061 = vmatpush2.bf16.xpose.msra.mxu0 0
      %1062 = vmatprep.subr.bf16.mxu0 0
      %1063 = vmatpush2.bf16.xpose.msra.mxu0 0
      %1064 = vmatprep.subr.bf16.mxu0 0
      %1065 = vmatpush2.bf16.xpose.msra.mxu0 0
      %1066 = vmatprep.mubr.bf16.mxu0 0
      %1067 = vmatmul.mubr.bf16.gmra.mxu0 %v1023
      %v1068 = vpop.f32.mrf.mxu0
      %v1069 = vadd.f32 0.0, %v1068
      %v1070 = vpop.f32.mrf.mxu0
      %v1071 = vpop.f32.mrf.mxu0
      %v1072 = vadd.f32 0.0, %v1071
      %v1073 = vpop.f32.mrf.mxu0
      %1074 = vmatprep.mubr.bf16.mxu0 0
      %1075 = vmatmul.mubr.bf16.gmra.mxu0 %v1026
      %v1076 = vpop.f32.mrf.mxu0
      %v1077 = vadd.f32 0.0, %v1076
      %v1078 = vpop.f32.mrf.mxu0
      %v1079 = vpop.f32.mrf.mxu0
      %v1080 = vpop.f32.mrf.mxu0
      %1081 = vdwg.mxu0
      %v1082 = vmul.f32 %v1069, 0.35355338
      %v1083 = vmul.f32 %v1072, 0.35355338
      %v1084 = vmul.f32 %v1077, 0.35355338
      %v1085 = vsel %vm434, %v1082, -1e+30
      %v1086 = vsel %vm435, %v1083, -1e+30
      %v1087 = vsel %vm436, %v1084, -1e+30
      %v1088 = vsel %vm510, %v1085, -inf
      %1089 = vmax.xlane.f32.xlu0 %v1088
      %v1090 = vpop.xlane.xlu0 %1089
      %v1091 = vsel %vm510, %v1086, -inf
      %1092 = vmax.xlane.f32.xlu0 %v1091
      %v1093 = vpop.xlane.xlu0 %1092
      %v1094 = vsel %vm510, %v1087, -inf
      %1095 = vmax.xlane.f32.xlu0 %v1094
      %v1096 = vpop.xlane.xlu0 %1095
      %v1097 = vsub.f32 %v1085, %v1090
      %v1098 = vsub.f32 %v1086, %v1093
      %v1099 = vsub.f32 %v1087, %v1096
      %v1100 = vmul.f32 %v1097, 1.442695
      %v1101 = vpow.pop %v1100
      %v1102 = vmul.f32 %v1098, 1.442695
      %v1103 = vpow.pop %v1102
      %v1104 = vmul.f32 %v1099, 1.442695
      %v1105 = vpow.pop %v1104
      %v1106 = vsel %vm510, %v1101, 0.0
      %1107 = vadd.xlane.f32.xlu0 %v1106
      %v1108 = vpop.xlane.xlu0 %1107
      %v1109 = vsel %vm510, %v1103, 0.0
      %1110 = vadd.xlane.f32.xlu0 %v1109
      %v1111 = vpop.xlane.xlu0 %1110
      %v1112 = vsel %vm510, %v1105, 0.0
      %1113 = vadd.xlane.f32.xlu0 %v1112
      %v1114 = vpop.xlane.xlu0 %1113
      %v1115 = vrcp.pop %v1108
      %v1116 = vrcp.pop %v1111
      %v1117 = vrcp.pop %v1114
      %v1118 = vpack.c.bf16 %v1103, %v1101
      %v1119 = vpack.c.bf16 %v1105, %v1105
      %1120 = vrot.lane.b32.xlu0 %v426, 40
      %v1121 = vpop.permute.xlu0 %1120
      %1122 = vrot.lane.b32.xlu0 %v427, 40
      %v1123 = vpop.permute.xlu0 %1122
      %v1126 = vsel %vm510, %v1118, 0
      %v1129 = vsel %vm510, %v1119, 0
      %v1132 = vsel %vm554, %v1123, 0
      %1134 = vmatprep.subr.bf16.mxu0 0
      %1135 = vmatpush1.bf16.msra.mxu0 0
      %1136 = vmatprep.subr.bf16.mxu0 0
      %1137 = vmatpush1.bf16.msra.mxu0 0
      %1138 = vmatprep.subr.bf16.mxu0 0
      %1139 = vmatpush1.bf16.msra.mxu0 0
      %1140 = vmatprep.subr.bf16.mxu0 0
      %1141 = vmatpush1.bf16.msra.mxu0 0
      %1142 = vmatprep.subr.bf16.mxu0 0
      %1143 = vmatpush1.bf16.msra.mxu0 0
      %1144 = vmatprep.subr.bf16.mxu0 0
      %1145 = vmatpush1.bf16.msra.mxu0 0
      %1146 = vmatprep.subr.bf16.mxu0 0
      %1147 = vmatpush1.bf16.msra.mxu0 %v1132
      %1148 = vmatprep.subr.bf16.mxu0 0
      %1149 = vmatpush1.bf16.msra.mxu0 %v1121
      %1150 = vmatprep.subr.bf16.mxu0 0
      %1151 = vmatpush2.bf16.msra.mxu0 0
      %1152 = vmatprep.subr.bf16.mxu0 0
      %1153 = vmatpush2.bf16.msra.mxu0 0
      %1154 = vmatprep.subr.bf16.mxu0 0
      %1155 = vmatpush2.bf16.msra.mxu0 0
      %1156 = vmatprep.subr.bf16.mxu0 0
      %1157 = vmatpush2.bf16.msra.mxu0 0
      %1158 = vmatprep.subr.bf16.mxu0 0
      %1159 = vmatpush2.bf16.msra.mxu0 0
      %1160 = vmatprep.subr.bf16.mxu0 0
      %1161 = vmatpush2.bf16.msra.mxu0 0
      %1162 = vmatprep.subr.bf16.mxu0 0
      %1163 = vmatpush2.bf16.msra.mxu0 0
      %1164 = vmatprep.subr.bf16.mxu0 0
      %1165 = vmatpush2.bf16.msra.mxu0 0
      %1166 = vmatprep.mubr.bf16.mxu0 0
      %1167 = vmatmul.mubr.bf16.gmra.mxu0 %v1126
      %v1168 = vpop.f32.mrf.mxu0
      %v1169 = vadd.f32 0.0, %v1168
      %v1170 = vpop.f32.mrf.mxu0
      %v1171 = vpop.f32.mrf.mxu0
      %v1172 = vadd.f32 0.0, %v1171
      %v1173 = vpop.f32.mrf.mxu0
      %1174 = vmatprep.mubr.bf16.mxu0 0
      %1175 = vmatmul.mubr.bf16.gmra.mxu0 %v1129
      %v1176 = vpop.f32.mrf.mxu0
      %v1177 = vadd.f32 0.0, %v1176
      %v1178 = vpop.f32.mrf.mxu0
      %v1179 = vpop.f32.mrf.mxu0
      %v1180 = vpop.f32.mrf.mxu0
      %1181 = vdwg.mxu0
      %v1182 = vmul.f32 %v1169, %v1115
      %v1183 = vmul.f32 %v1172, %v1116
      %v1184 = vmul.f32 %v1177, %v1117
      %v1185 = vpack.c.bf16 %v1183, %v1182
      %v1186 = vpack.c.bf16 %v1184, %v1184
      %v1189 = vunpack.c.l.b16 %v1185
      %v1190 = vunpack.c.h.b16 %v1185
      %v1191 = vunpack.c.l.b16 %v1186
      %v1192 = vpack.c.b16 %v1189, %v1189
      %v1193 = vpack.c.b16 %v1190, %v1190
      %v1194 = vpack.c.b16 %v1191, %v1191
      %1195 = vrot.lane.b32.xlu0 %v1192, 24
      %v1196 = vpop.permute.xlu0 %1195
      %1197 = vrot.lane.b32.xlu0 %v1193, 24
      %v1198 = vpop.permute.xlu0 %1197
      %1199 = vrot.lane.b32.xlu0 %v1194, 24
      %v1200 = vpop.permute.xlu0 %1199
      %vm1204 = vcmask 257216
      %1205 = vst.msk [vmem:[#allocation2] sm:$0xf] %vm1204, %v1196
      %1206 = vst.msk [vmem:[#allocation2 + $0x4] sm:$0xf] %vm1204, %v1198
      %1207 = vst.msk [vmem:[#allocation2 + $0x8] sm:$0xf] %vm1204, %v1200
      %v1208 = vld [vmem:[#allocation2] sm:$0xf]
      %v1209 = vld [vmem:[#allocation2 + $0x4] sm:$0xf]
      %v1210 = vld [vmem:[#allocation2 + $0x8] sm:$0xf]
      %v1211 = vld [vmem:[%s5] sm:$0xf]
      %v1212 = vld [vmem:[%s5 + $0x4] sm:$0xf]
      %v1213 = vld [vmem:[%s5 + $0x8] sm:$0xf]
      %v1214 = vld [vmem:[%s5 + $0xc] sm:$0xf]
      %v1215 = vld [vmem:[%s6] sm:$0x1]
      %v1217 = vlaneseq
      %v1218 = vshrl.u32 %v1217, 7
      %v1219 = vsub.s32 0, %v1218
      %v1220 = vrot.slane %v1215, %v1219
      %v1225 = vunpack.c.l.b16 %v1208
      %v1226 = vunpack.c.l.b16 %v1209
      %v1227 = vunpack.c.l.b16 %v1210
      %v1228 = vpack.c.b16 %v1226, %v1225
      %v1229 = vpack.c.b16 %v1227, %v1227
      %v1234 = vunpack.c.l.b16 %v1211
      %v1235 = vunpack.c.l.b16 %v1212
      %v1236 = vunpack.c.l.b16 %v1213
      %v1237 = vunpack.c.l.b16 %v1214
      %v1238 = vpack.c.b16 %v1235, %v1234
      %v1239 = vpack.c.b16 %v1237, %v1236
      %v1243 = vsel %vm288, %v1228, 0
      %v1246 = vsel %vm288, %v1229, 0
      %1248 = vmatprep.subr.bf16.mxu0 0
      %1249 = vmatpush1.bf16.msra.mxu0 0
      %1250 = vmatprep.subr.bf16.mxu0 0
      %1251 = vmatpush1.bf16.msra.mxu0 0
      %1252 = vmatprep.subr.bf16.mxu0 0
      %1253 = vmatpush1.bf16.msra.mxu0 0
      %1254 = vmatprep.subr.bf16.mxu0 0
      %1255 = vmatpush1.bf16.msra.mxu0 0
      %1256 = vmatprep.subr.bf16.mxu0 0
      %1257 = vmatpush1.bf16.msra.mxu0 0
      %1258 = vmatprep.subr.bf16.mxu0 0
      %1259 = vmatpush1.bf16.msra.mxu0 0
      %1260 = vmatprep.subr.bf16.mxu0 0
      %1261 = vmatpush1.bf16.msra.mxu0 %v1239
      %1262 = vmatprep.subr.bf16.mxu0 0
      %1263 = vmatpush1.bf16.msra.mxu0 %v1238
      %1264 = vmatprep.subr.bf16.mxu0 0
      %1265 = vmatpush2.bf16.msra.mxu0 0
      %1266 = vmatprep.subr.bf16.mxu0 0
      %1267 = vmatpush2.bf16.msra.mxu0 0
      %1268 = vmatprep.subr.bf16.mxu0 0
      %1269 = vmatpush2.bf16.msra.mxu0 0
      %1270 = vmatprep.subr.bf16.mxu0 0
      %1271 = vmatpush2.bf16.msra.mxu0 0
      %1272 = vmatprep.subr.bf16.mxu0 0
      %1273 = vmatpush2.bf16.msra.mxu0 0
      %1274 = vmatprep.subr.bf16.mxu0 0
      %1275 = vmatpush2.bf16.msra.mxu0 0
      %1276 = vmatprep.subr.bf16.mxu0 0
      %1277 = vmatpush2.bf16.msra.mxu0 0
      %1278 = vmatprep.subr.bf16.mxu0 0
      %1279 = vmatpush2.bf16.msra.mxu0 0
      %1280 = vmatprep.mubr.bf16.mxu0 0
      %1281 = vmatmul.mubr.bf16.gmra.mxu0 %v1243
      %v1282 = vpop.f32.mrf.mxu0
      %v1283 = vadd.f32 %v1220, %v1282
      %v1284 = vpop.f32.mrf.mxu0
      %v1285 = vpop.f32.mrf.mxu0
      %v1286 = vadd.f32 %v1220, %v1285
      %v1287 = vpop.f32.mrf.mxu0
      %1288 = vmatprep.mubr.bf16.mxu0 0
      %1289 = vmatmul.mubr.bf16.gmra.mxu0 %v1246
      %v1290 = vpop.f32.mrf.mxu0
      %v1291 = vadd.f32 %v1220, %v1290
      %v1292 = vpop.f32.mrf.mxu0
      %v1293 = vpop.f32.mrf.mxu0
      %v1294 = vpop.f32.mrf.mxu0
      %1295 = vdwg.mxu0
      %v1296 = vadd.f32 %v1283, %v283
      %v1297 = vadd.f32 %v1286, %v284
      %v1298 = vadd.f32 %v1291, %v285
      %v1299 = vpack.c.bf16 %v1297, %v1296
      %v1300 = vpack.c.bf16 %v1298, %v1298
      %v1303 = vunpack.c.l.b16 %v1299
      %v1304 = vunpack.c.h.b16 %v1299
      %v1305 = vunpack.c.l.b16 %v1300
      %v1306 = vpack.c.b16 %v1303, %v1303
      %v1307 = vpack.c.b16 %v1304, %v1304
      %v1308 = vpack.c.b16 %v1305, %v1305
      %vm1312 = vcmask 257024
      %1313 = vst.msk [vmem:[%s278] sm:$0xf] %vm1312, %v1306
      %1314 = vst.msk [vmem:[%s278 + $0x4] sm:$0xf] %vm1312, %v1307
      %1315 = vst.msk [vmem:[%s278 + $0x8] sm:$0xf] %vm1312, %v1308
      %p1316 = scmp.lt.s32.totalorder %s18, 1
      %s1317 = scalar_select %p1316, %s18, 1
      %s1318 = smul.addr %s1317, 3
      %s1319 = smul.addr %s1318, 4
      %s1320 = scalar_lea.vmem %s7, %s1319
      // Predicated region
      $region49: #{low_level_transformer_forward.7} parent=47 // pred_check
        %p1321 = pneg %p188
      $region50: #{low_level_transformer_forward.7} parent=47 // pred_check_branch
        %1323 = sbr.rel (%p1321) target = $region52
      $region51: #{low_level_transformer_forward.7} parent=47 // pred_region
        _
      $region52: #{low_level_transformer_forward.7} parent=47 // pred_fallthru
        _
    $region48: #{low_level_transformer_forward.7} parent=5 // pred_fallthru
      _
    %p1324 = scmp.le.s32.totalorder 2, %s13
    // Predicated region
    $region53: #{low_level_transformer_forward.7} parent=5 // pred_check
      %p1325 = pneg %p1324
    $region54: #{low_level_transformer_forward.7} parent=5 // pred_check_branch
      %1327 = sbr.rel (%p1325) target = $region56
    $region55: #{low_level_transformer_forward.7} parent=5 // pred_region
      %s1328 = ssub.s32 %s13, 2
      // Predicated region
      $region57: #{low_level_transformer_forward.7} parent=55 // pred_check
        %p1329 = pneg %p194
      $region58: #{low_level_transformer_forward.7} parent=55 // pred_check_branch
        %1331 = sbr.rel (%p1329) target = $region60
      $region59: #{low_level_transformer_forward.7} parent=55 // pred_region
        %p1332 = scmp.lt.s32.totalorder %s19, 1
        %s1333 = scalar_select %p1332, %s19, 1
        %s1334 = smul.addr %s1333, 3
        %s1335 = smul.addr %s1334, 4
        %s1336 = scalar_lea.vmem %s7, %s1335
      $region60: #{low_level_transformer_forward.7} parent=55 // pred_fallthru
        _
    $region56: #{low_level_transformer_forward.7} parent=5 // pred_fallthru
      _
  $region6: #{low_level_transformer_forward.7} parent=0 // loop_footer
    %s17 = sadd.s32 1, %s13
  $region7: #{low_level_transformer_forward.7} parent=0 // loop_footer_branch
    %12 = sbr.rel target = $region3
  $region8: #{low_level_transformer_forward.7} parent=0 // loop_exit
    _

</llo_original>
